<compile_context>
chip_gen: v6e
topology: v6e:2x2x1
jax: 0.10.0
libtpu: 0.0.40
codegen_flags: <defaults>
</compile_context>

<pallas_src>
import functools
import math

import jax
import jax.numpy as jnp
from jax import lax
from jax.experimental import pallas as pl
from jax.experimental.pallas import tpu as pltpu

NUM_CLASSES = 10
C_MID = 16  # feature dim of last-layer input


# ---------------------------------------------------------------------------
# small helpers
# ---------------------------------------------------------------------------

def _row_tile(hw, target=512):
    """Largest multiple-of-16 divisor of hw that is <= target (bf16 sublane packing)."""
    best = None
    for cand in range(16, min(hw, target) + 1, 16):
        if hw % cand == 0:
            best = cand
    return best if best is not None else hw


def _whole(shape):
    """Full-array block, resident across the (single, 'arbitrary') grid axis."""
    zeros = (0,) * len(shape)

    def index_map(t):
        return zeros

    return pl.BlockSpec(shape, index_map)


def _compiler_params():
    return pltpu.CompilerParams(
        dimension_semantics=("arbitrary",),   # row axis is a pooled reduction
        vmem_limit_bytes=32 * 1024 * 1024,    # explicit: safe on v7x (64 MiB physical)
    )


# ---------------------------------------------------------------------------
# fused Pallas kernels
# ---------------------------------------------------------------------------

def _conv_pool_step(patches_ref, convw_ref, convb_ref, acc_ref):
    """One row tile of: conv-as-matmul (bf16 x bf16 -> f32 acc) -> ReLU -> partial pool."""
    @pl.when(pl.program_id(0) == 0)
    def _():
        acc_ref[...] = jnp.zeros_like(acc_ref)

    y = jnp.einsum("btk,kc->btc", patches_ref[...], convw_ref[...],
                   preferred_element_type=jnp.float32)        # (B, TR, C) f32
    y = jnp.maximum(y + convb_ref[...], 0.0)                  # bias + ReLU in f32
    acc_ref[...] += jnp.sum(y, axis=1)                        # partial pooled sum


def _head(acc_ref, fcw_ref, fcb_ref, inv_hw):
    """Mean pool + last fc layer (all in VMEM)."""
    feat = acc_ref[...] * inv_hw                              # (B, F) f32
    out = jnp.dot(feat, fcw_ref[...],
                  preferred_element_type=jnp.float32) + fcb_ref[...]
    return feat, out


def _train_fwd_kernel(patches_ref, convw_ref, convb_ref, fcw_ref, fcb_ref, y_ref,
                      out_ref, feat_ref, fcov_ref, gcov_ref, acc_ref,
                      *, inv_hw, inv_bs):
    _conv_pool_step(patches_ref, convw_ref, convb_ref, acc_ref)

    @pl.when(pl.program_id(0) == pl.num_programs(0) - 1)
    def _():
        feat, out = _head(acc_ref, fcw_ref, fcb_ref, inv_hw)
        feat_ref[...] = feat
        out_ref[...] = out
        # softmax (EUP reciprocal) and empirical-Fisher gradient  prob - onehot(y)
        m = jnp.max(out, axis=-1, keepdims=True)
        e = jnp.exp(out - m)
        prob = e * pl.reciprocal(jnp.sum(e, axis=-1, keepdims=True), approx=True)
        onehot = (lax.broadcasted_iota(jnp.int32, out.shape, 1)
                  == y_ref[...]).astype(jnp.float32)
        grad = prob - onehot
        # KFAC factors: feat^T feat / bs  and  grad^T grad / bs (contract batch dim)
        fcov_ref[...] = lax.dot_general(
            feat, feat, (((0,), (0,)), ((), ())),
            preferred_element_type=jnp.float32) * inv_bs
        gcov_ref[...] = lax.dot_general(
            grad, grad, (((0,), (0,)), ((), ())),
            preferred_element_type=jnp.float32) * inv_bs


def _selection_fwd_kernel(patches_ref, convw_ref, convb_ref, fcw_ref, fcb_ref,
                          vinv_ref, lutinv_ref, eps_ref,
                          out_ref, feat_ref, std_ref, fs_ref, acc_ref,
                          *, inv_hw):
    _conv_pool_step(patches_ref, convw_ref, convb_ref, acc_ref)

    @pl.when(pl.program_id(0) == pl.num_programs(0) - 1)
    def _():
        feat, out = _head(acc_ref, fcw_ref, fcb_ref, inv_hw)
        feat_ref[...] = feat
        out_ref[...] = out
        # stds_b = sqrt( feat_b V^{-1} feat_b^T )
        tmp = jnp.dot(feat, vinv_ref[...], preferred_element_type=jnp.float32)
        var = jnp.sum(tmp * feat, axis=-1, keepdims=True)       # (B, 1)
        stds = jnp.sqrt(jnp.maximum(var, 1e-6))
        std_ref[...] = stds
        # f_samples = out + stds * (eps @ L_U^{-T});  single contraction, no (B,O,O) L_f
        samp = jnp.einsum("bso,oc->bsc", eps_ref[...], lutinv_ref[...],
                          preferred_element_type=jnp.float32)   # (B, S, O)
        fs_ref[...] = out[:, None, :] + stds[:, :, None] * samp


def _plain_fwd_kernel(patches_ref, convw_ref, convb_ref, fcw_ref, fcb_ref,
                      out_ref, feat_ref, acc_ref, *, inv_hw):
    _conv_pool_step(patches_ref, convw_ref, convb_ref, acc_ref)

    @pl.when(pl.program_id(0) == pl.num_programs(0) - 1)
    def _():
        feat, out = _head(acc_ref, fcw_ref, fcb_ref, inv_hw)
        feat_ref[...] = feat
        out_ref[...] = out


# ---------------------------------------------------------------------------
# glue: im2col, parameter init, wrapper
# ---------------------------------------------------------------------------

def im2col_nchw(x, kh, kw, pad):
    """x: (B, C, H, W) NCHW -> (B, H*W, C*kh*kw); K order matches flattened Conv2d weight."""
    # TODO(synk): at realistic image sizes move this into the kernel as 9 shifted-slice
    # matmuls over one DMA'd padded tile to cut conv-input HBM traffic ~9x.
    B, C, H, W = x.shape
    xp = jnp.pad(x, ((0, 0), (0, 0), (pad, pad), (pad, pad)))
    cols = [xp[:, :, i:i + H, j:j + W] for i in range(kh) for j in range(kw)]
    p = jnp.stack(cols, axis=2)                # (B, C, kh*kw, H, W)
    p = p.transpose(0, 3, 4, 1, 2)             # (B, H, W, C, kh*kw)
    return p.reshape(B, H * W, C * kh * kw)


def init_params(key, c_in=3, c_mid=C_MID, n_classes=NUM_CLASSES):
    k1, k2, k3, k4 = jax.random.split(key, 4)
    conv_w = 0.1 * jax.random.normal(k1, (c_mid, c_in, 3, 3), jnp.float32)
    conv_b = 0.1 * jax.random.normal(k2, (c_mid,), jnp.float32)
    fc_w = 0.1 * jax.random.normal(k3, (n_classes, c_mid), jnp.float32)
    fc_b = 0.1 * jax.random.normal(k4, (n_classes,), jnp.float32)
    return {
        "conv_w2d": conv_w.reshape(c_mid, -1).T,   # (C_in*9, C_mid)
        "conv_b": conv_b.reshape(1, c_mid),
        "fc_w": fc_w.T,                            # (C_mid, n_classes)
        "fc_b": fc_b.reshape(1, n_classes),
    }


class KFCALLAWrapperPallas:
    """JAX/Pallas port of KFCALLAWrapper.forward (train-stats, selection, eval paths)."""

    def __init__(self, params, num_effective_data, prior_precision,
                 n_f_samples, momentum=0.99):
        self.num_effective_data = num_effective_data
        self.prior_precision = prior_precision
        self.n_f_samples = n_f_samples
        self.momentum = momentum
        # hoisted once: bf16 MXU operand for the conv, f32 for everything else
        self.conv_w_bf16 = params["conv_w2d"].astype(jnp.bfloat16)
        self.conv_b = params["conv_b"].astype(jnp.float32)
        self.fc_w = params["fc_w"].astype(jnp.float32)
        self.fc_b = params["fc_b"].astype(jnp.float32)
        feat_dim = self.fc_w.shape[0]
        out_dim = self.fc_w.shape[1]
        # registered buffers (host-side scalar counter + device factors)
        self.num_data = 0
        self.A = jnp.zeros((feat_dim, feat_dim), jnp.float32)
        self.G = jnp.zeros((out_dim, out_dim), jnp.float32)
        self.G2 = jnp.zeros((out_dim, out_dim), jnp.float32)  # parity; unused in forward
        self.training = True
        self.input_features_of_last_layer = None
        # jit-compiled fused forwards, cached per input shape (traced once)
        self._train_cache = {}
        self._sel_cache = {}
        self._plain_cache = {}

    # -- geometry / specs ---------------------------------------------------
    def _geom(self, x_shape):
        B, C_in, H, W = x_shape
        HW = H * W
        K = C_in * 9
        TR = _row_tile(HW)
        return B, HW, K, TR

    def _conv_in_specs(self, B, K, TR):
        F = self.fc_w.shape[0]
        O = self.fc_w.shape[1]
        return [
            pl.BlockSpec((B, TR, K), lambda t: (0, t, 0)),   # row-tiled im2col patches
            _whole((K, F)), _whole((1, F)),                  # conv weight / bias
            _whole((F, O)), _whole((1, O)),                  # fc weight / bias
        ]

    # -- builders (one pallas_call per forward path, wrapped in jax.jit) -----
    def _build_train_fn(self, x_shape):
        B, HW, K, TR = self._geom(x_shape)
        F, O = self.fc_w.shape
        n_tiles = HW // TR
        kernel = functools.partial(_train_fwd_kernel, inv_hw=1.0 / HW, inv_bs=1.0 / B)
        call = pl.pallas_call(
            kernel,
            out_shape=(jax.ShapeDtypeStruct((B, O), jnp.float32),   # logits
                       jax.ShapeDtypeStruct((B, F), jnp.float32),   # feat (hook value)
                       jax.ShapeDtypeStruct((F, F), jnp.float32),   # feature covariance
                       jax.ShapeDtypeStruct((O, O), jnp.float32)),  # grad covariance
            grid=(n_tiles,),
            in_specs=self._conv_in_specs(B, K, TR) + [_whole((B, 1))],
            out_specs=(_whole((B, O)), _whole((B, F)),
                       _whole((F, F)), _whole((O, O))),
            scratch_shapes=[pltpu.VMEM((B, F), jnp.float32)],       # pooled-sum accumulator
            compiler_params=_compiler_params(),
        )

        def fwd(x, y, A_old, G_old, alpha, conv_w, conv_b, fc_w, fc_b):
            patches = im2col_nchw(x, 3, 3, 1).astype(jnp.bfloat16)  # cast fuses into im2col
            y2 = y.reshape(B, 1).astype(jnp.int32)
            out, feat, fcov, gcov = call(patches, conv_w, conv_b, fc_w, fc_b, y2)
            A_new = alpha * A_old + (1.0 - alpha) * fcov            # EMA (alpha=0 on 1st step)
            G_new = alpha * G_old + (1.0 - alpha) * gcov
            return out, feat, A_new, G_new

        return jax.jit(fwd)

    def _build_sel_fn(self, x_shape):
        B, HW, K, TR = self._geom(x_shape)
        F, O = self.fc_w.shape
        S = self.n_f_samples
        n_tiles = HW // TR
        kernel = functools.partial(_selection_fwd_kernel, inv_hw=1.0 / HW)
        call = pl.pallas_call(
            kernel,
            out_shape=(jax.ShapeDtypeStruct((B, O), jnp.float32),
                       jax.ShapeDtypeStruct((B, F), jnp.float32),
                       jax.ShapeDtypeStruct((B, 1), jnp.float32),
                       jax.ShapeDtypeStruct((B, S, O), jnp.float32)),
            grid=(n_tiles,),
            in_specs=self._conv_in_specs(B, K, TR)
                     + [_whole((F, F)), _whole((O, O)), _whole((B, S, O))],
            out_specs=(_whole((B, O)), _whole((B, F)),
                       _whole((B, 1)), _whole((B, S, O))),
            scratch_shapes=[pltpu.VMEM((B, F), jnp.float32)],
            compiler_params=_compiler_params(),
        )
        sqrt_n = math.sqrt(self.num_effective_data)
        sqrt_p = math.sqrt(self.prior_precision)

        def fwd(x, A, G, key, conv_w, conv_b, fc_w, fc_b):
            patches = im2col_nchw(x, 3, 3, 1).astype(jnp.bfloat16)
            eyeF = jnp.eye(F, dtype=jnp.float32)
            eyeO = jnp.eye(O, dtype=jnp.float32)
            V = sqrt_n * A + sqrt_p * eyeF
            U = sqrt_n * G + sqrt_p * eyeO
            # TODO(synk): psd_safe_cholesky jitter-retry loop and the dense linalg
            # (cholesky / cholesky_inverse / triangular inverse / spectral norm) have no
            # clean Pallas equivalent; computed with jnp.linalg on these tiny matrices.
            L_V = jnp.linalg.cholesky(V)
            V_inv = jax.scipy.linalg.cho_solve((L_V, True), eyeF)   # cholesky_inverse(L_V)
            L_U = jnp.linalg.cholesky(U)
            LUT_inv = jnp.linalg.inv(L_U.T)
            eps = jax.random.normal(key, (B, S, O), dtype=jnp.float32)
            out, feat, stds, f_samples = call(patches, conv_w, conv_b, fc_w, fc_b,
                                              V_inv, LUT_inv, eps)
            spectral = jnp.linalg.norm(LUT_inv, ord=2)
            return f_samples, out, feat, stds[:, 0], spectral

        return jax.jit(fwd)

    def _build_plain_fn(self, x_shape):
        B, HW, K, TR = self._geom(x_shape)
        F, O = self.fc_w.shape
        n_tiles = HW // TR
        kernel = functools.partial(_plain_fwd_kernel, inv_hw=1.0 / HW)
        call = pl.pallas_call(
            kernel,
            out_shape=(jax.ShapeDtypeStruct((B, O), jnp.float32),
                       jax.ShapeDtypeStruct((B, F), jnp.float32)),
            grid=(n_tiles,),
            in_specs=self._conv_in_specs(B, K, TR),
            out_specs=(_whole((B, O)), _whole((B, F))),
            scratch_shapes=[pltpu.VMEM((B, F), jnp.float32)],
            compiler_params=_compiler_params(),
        )

        def fwd(x, conv_w, conv_b, fc_w, fc_b):
            patches = im2col_nchw(x, 3, 3, 1).astype(jnp.bfloat16)
            return call(patches, conv_w, conv_b, fc_w, fc_b)

        return jax.jit(fwd)

    def _get(self, cache, builder, x_shape):
        key = tuple(int(s) for s in x_shape)
        if key not in cache:
            cache[key] = builder(key)
        return cache[key]

    # -- forward --------------------------------------------------------------
    def forward(self, x, selection_pass=False, y=None, rng=None):
        bs = x.shape[0]
        pargs = (self.conv_w_bf16, self.conv_b, self.fc_w, self.fc_b)

        if selection_pass:
            # TODO(synk): BatchNorm freeze/unfreeze is a no-op (synthetic net has no BN).
            if self.num_data == 0:
                out, feat = self._get(self._plain_cache, self._build_plain_fn,
                                      x.shape)(x, *pargs)
                self.input_features_of_last_layer = feat
                return out[:, None, :], out, None, None
            f_samples, out, feat, stds, spectral = self._get(
                self._sel_cache, self._build_sel_fn, x.shape)(
                    x, self.A, self.G, rng, *pargs)
            self.input_features_of_last_layer = feat
            return f_samples, out, stds, spectral

        if self.training:
            assert y is not None
            alpha = self.momentum if self.num_data > 0 else 0.0
            out, feat, A_new, G_new = self._get(
                self._train_cache, self._build_train_fn, x.shape)(
                    x, y, self.A, self.G, jnp.float32(alpha), *pargs)
            self.input_features_of_last_layer = feat
            self.A = A_new
            self.G = G_new
            self.num_data += bs
            return out

        out, feat = self._get(self._plain_cache, self._build_plain_fn,
                              x.shape)(x, *pargs)
        self.input_features_of_last_layer = feat
        return out


# ---------------------------------------------------------------------------
# Demo
# ---------------------------------------------------------------------------

if __name__ == "__main__":
    key = jax.random.PRNGKey(0)
    kx, ky, keps = jax.random.split(key, 3)

    # CIFAR-like shapes (the original wrapper probes the net with 3x32x32), small batch.
    B, C_in, H, W = 2, 3, 32, 32
    x = jax.random.normal(kx, (B, C_in, H, W), dtype=jnp.float32)   # NCHW like PyTorch
    y = jax.random.randint(ky, (B,), 0, NUM_CLASSES)

    params = init_params(jax.random.PRNGKey(42), c_in=C_in)
    model = KFCALLAWrapperPallas(params, num_effective_data=1000,
                                 prior_precision=1.0, n_f_samples=5, momentum=0.99)

    # training forward: one fused pallas_call; updates KFAC factors A, G and num_data
    out_train = model.forward(x, y=y)
    jax.block_until_ready(out_train)
    assert out_train.shape == (B, NUM_CLASSES)
    assert model.num_data == B

    # second training step exercises the EMA branch (same cached compiled fn)
    out_train2 = model.forward(x, y=y)
    jax.block_until_ready(out_train2)

    # selection pass: Laplace predictive sampling of the last layer (one fused kernel)
    f_samples, out_sel, stds, u_norm = model.forward(x, selection_pass=True, rng=keps)
    jax.block_until_ready((f_samples, out_sel, stds, u_norm))
    assert f_samples.shape == (B, 5, NUM_CLASSES)
    assert out_sel.shape == (B, NUM_CLASSES)
    assert stds.shape == (B,)
    assert u_norm.shape == ()

    print("KERNEL_OK")
</pallas_src>

<mosaic_0001>
module attributes {stable_mosaic.version = 11 : i64} {
  func.func @_train_fwd_kernel(%arg0: i32, %arg1: memref<2x512x27xbf16, #tpu.memory_space<vmem>>, %arg2: memref<27x16xbf16, #tpu.memory_space<vmem>>, %arg3: memref<1x16xf32, #tpu.memory_space<vmem>>, %arg4: memref<16x10xf32, #tpu.memory_space<vmem>>, %arg5: memref<1x10xf32, #tpu.memory_space<vmem>>, %arg6: memref<2x1xi32, #tpu.memory_space<vmem>>, %arg7: memref<2x10xf32, #tpu.memory_space<vmem>>, %arg8: memref<2x16xf32, #tpu.memory_space<vmem>>, %arg9: memref<16x16xf32, #tpu.memory_space<vmem>>, %arg10: memref<10x10xf32, #tpu.memory_space<vmem>>, %arg11: memref<2x16xf32, #tpu.memory_space<vmem>>) attributes {dimension_semantics = [#tpu.dimension_semantics<arbitrary>], iteration_bounds = array<i64: 2>, scalar_prefetch = 0 : i64, scratch_operands = 1 : i64, tpu.core_type = #tpu.core_type<tc>, window_params = [{transform_indices = @transform_0, window_bounds = array<i64: 2, 512, 27>}, {pipeline_mode = #tpu.pipeline_mode<synchronous>, transform_indices = @transform_1, window_bounds = array<i64: 27, 16>}, {pipeline_mode = #tpu.pipeline_mode<synchronous>, transform_indices = @transform_2, window_bounds = array<i64: 1, 16>}, {pipeline_mode = #tpu.pipeline_mode<synchronous>, transform_indices = @transform_3, window_bounds = array<i64: 16, 10>}, {pipeline_mode = #tpu.pipeline_mode<synchronous>, transform_indices = @transform_4, window_bounds = array<i64: 1, 10>}, {pipeline_mode = #tpu.pipeline_mode<synchronous>, transform_indices = @transform_5, window_bounds = array<i64: 2, 1>}, {pipeline_mode = #tpu.pipeline_mode<synchronous>, transform_indices = @transform_6, window_bounds = array<i64: 2, 10>}, {pipeline_mode = #tpu.pipeline_mode<synchronous>, transform_indices = @transform_7, window_bounds = array<i64: 2, 16>}, {pipeline_mode = #tpu.pipeline_mode<synchronous>, transform_indices = @transform_8, window_bounds = array<i64: 16, 16>}, {pipeline_mode = #tpu.pipeline_mode<synchronous>, transform_indices = @transform_9, window_bounds = array<i64: 10, 10>}]} {
    %c0_i32 = arith.constant 0 : i32
    %0 = arith.cmpi eq, %arg0, %c0_i32 : i32
    %1 = arith.extui %0 : i1 to i32
    %c0_i32_0 = arith.constant 0 : i32
    %2 = arith.cmpi ne, %1, %c0_i32_0 : i32
    scf.if %2 {
      %cst_14 = arith.constant 0.000000e+00 : f32
      %19 = vector.broadcast %cst_14 : f32 to vector<2x16xf32>
      %c0_15 = arith.constant 0 : index
      %c0_16 = arith.constant 0 : index
      %20 = vector.load %arg11[%c0_15, %c0_16] : memref<2x16xf32, #tpu.memory_space<vmem>>, vector<2x16xf32>
      tpu.vector_store %arg11[%c0_15, %c0_16], %19 {strides = array<i32>} : memref<2x16xf32, #tpu.memory_space<vmem>>, vector<2x16xf32>,
    } else {
    }
    %c0 = arith.constant 0 : index
    %c0_1 = arith.constant 0 : index
    %c0_2 = arith.constant 0 : index
    %3 = vector.load %arg1[%c0, %c0_1, %c0_2] : memref<2x512x27xbf16, #tpu.memory_space<vmem>>, vector<2x512x27xbf16>
    %c0_3 = arith.constant 0 : index
    %c0_4 = arith.constant 0 : index
    %4 = vector.load %arg2[%c0_3, %c0_4] : memref<27x16xbf16, #tpu.memory_space<vmem>>, vector<27x16xbf16>
    "tpu.trace_start"() <{level = 10 : i32, message = "btk,kc->btc"}> : () -> ()
    %cst = arith.constant dense<0.000000e+00> : vector<2x512x16xf32>
    %5 = tpu.matmul %3, %4, %cst {dimension_numbers = #tpu.dot_dimension_numbers<[2], [0], [0, 1], [1], [0, 0, 0, 1, 1, 1], [], []>} : vector<2x512x27xbf16>, vector<27x16xbf16>, vector<2x512x16xf32> -> vector<2x512x16xf32>
    "tpu.trace_stop"() : () -> ()
    %c0_5 = arith.constant 0 : index
    %c0_6 = arith.constant 0 : index
    %6 = vector.load %arg3[%c0_5, %c0_6] : memref<1x16xf32, #tpu.memory_space<vmem>>, vector<1x16xf32>
    %7 = vector.shape_cast %6 : vector<1x16xf32> to vector<1x1x16xf32>
    %8 = vector.broadcast %7 : vector<1x1x16xf32> to vector<2x512x16xf32>
    %9 = arith.addf %5, %8 : vector<2x512x16xf32>
    %cst_7 = arith.constant 0.000000e+00 : f32
    %10 = vector.broadcast %cst_7 : f32 to vector<2x512x16xf32>
    %11 = arith.maximumf %9, %10 : vector<2x512x16xf32>
    %c0_8 = arith.constant 0 : index
    %c0_9 = arith.constant 0 : index
    %12 = vector.load %arg11[%c0_8, %c0_9] : memref<2x16xf32, #tpu.memory_space<vmem>>, vector<2x16xf32>
    %cst_10 = arith.constant dense<0.000000e+00> : vector<2x16xf32>
    %13 = vector.multi_reduction <add>, %11, %cst_10 [1] : vector<2x512x16xf32> to vector<2x16xf32>
    %14 = arith.addf %12, %13 : vector<2x16xf32>
    %c0_11 = arith.constant 0 : index
    %c0_12 = arith.constant 0 : index
    %15 = vector.load %arg11[%c0_11, %c0_12] : memref<2x16xf32, #tpu.memory_space<vmem>>, vector<2x16xf32>
    tpu.vector_store %arg11[%c0_11, %c0_12], %14 {strides = array<i32>} : memref<2x16xf32, #tpu.memory_space<vmem>>, vector<2x16xf32>,
    %c1_i32 = arith.constant 1 : i32
    %16 = arith.cmpi eq, %arg0, %c1_i32 : i32
    %17 = arith.extui %16 : i1 to i32
    %c0_i32_13 = arith.constant 0 : i32
    %18 = arith.cmpi ne, %17, %c0_i32_13 : i32
    scf.if %18 {
      %c0_14 = arith.constant 0 : index
      %c0_15 = arith.constant 0 : index
      %19 = vector.load %arg11[%c0_14, %c0_15] : memref<2x16xf32, #tpu.memory_space<vmem>>, vector<2x16xf32>
      %cst_16 = arith.constant 9.765625E-4 : f32
      %20 = vector.broadcast %cst_16 : f32 to vector<2x16xf32>
      %21 = arith.mulf %19, %20 : vector<2x16xf32>
      %c0_17 = arith.constant 0 : index
      %c0_18 = arith.constant 0 : index
      %22 = vector.load %arg4[%c0_17, %c0_18] : memref<16x10xf32, #tpu.memory_space<vmem>>, vector<16x10xf32>
      %cst_19 = arith.constant dense<0.000000e+00> : vector<2x10xf32>
      %23 = tpu.matmul %21, %22, %cst_19 {dimension_numbers = #tpu.dot_dimension_numbers<[1], [0], [0], [1], [0, 0, 1, 1], [], []>} : vector<2x16xf32>, vector<16x10xf32>, vector<2x10xf32> -> vector<2x10xf32>
      %c0_20 = arith.constant 0 : index
      %c0_21 = arith.constant 0 : index
      %24 = vector.load %arg5[%c0_20, %c0_21] : memref<1x10xf32, #tpu.memory_space<vmem>>, vector<1x10xf32>
      %25 = vector.broadcast %24 : vector<1x10xf32> to vector<2x10xf32>
      %26 = arith.addf %23, %25 : vector<2x10xf32>
      %c0_22 = arith.constant 0 : index
      %c0_23 = arith.constant 0 : index
      %27 = vector.load %arg8[%c0_22, %c0_23] : memref<2x16xf32, #tpu.memory_space<vmem>>, vector<2x16xf32>
      tpu.vector_store %arg8[%c0_22, %c0_23], %21 {strides = array<i32>} : memref<2x16xf32, #tpu.memory_space<vmem>>, vector<2x16xf32>,
      %c0_24 = arith.constant 0 : index
      %c0_25 = arith.constant 0 : index
      %28 = vector.load %arg7[%c0_24, %c0_25] : memref<2x10xf32, #tpu.memory_space<vmem>>, vector<2x10xf32>
      tpu.vector_store %arg7[%c0_24, %c0_25], %26 {strides = array<i32>} : memref<2x10xf32, #tpu.memory_space<vmem>>, vector<2x10xf32>,
      %cst_26 = arith.constant dense<0xFF800000> : vector<2xf32>
      %29 = vector.multi_reduction <maximumf>, %26, %cst_26 [1] : vector<2x10xf32> to vector<2xf32>
      %30 = vector.shape_cast %29 : vector<2xf32> to vector<2x1xf32>
      %31 = vector.broadcast %30 : vector<2x1xf32> to vector<2x10xf32>
      %32 = arith.subf %26, %31 : vector<2x10xf32>
      %33 = math.exp %32 : vector<2x10xf32>
      %cst_27 = arith.constant dense<0.000000e+00> : vector<2xf32>
      %34 = vector.multi_reduction <add>, %33, %cst_27 [1] : vector<2x10xf32> to vector<2xf32>
      %35 = vector.shape_cast %34 : vector<2xf32> to vector<2x1xf32>
      %36 = tpu.reciprocal %35 {approx = true} : vector<2x1xf32> -> vector<2x1xf32>
      %37 = vector.broadcast %36 : vector<2x1xf32> to vector<2x10xf32>
      %38 = arith.mulf %33, %37 : vector<2x10xf32>
      %39 = tpu.iota {dimensions = array<i32: 1>} : vector<2x10xi32>
      %c0_28 = arith.constant 0 : index
      %c0_29 = arith.constant 0 : index
      %40 = vector.load %arg6[%c0_28, %c0_29] : memref<2x1xi32, #tpu.memory_space<vmem>>, vector<2x1xi32>
      %41 = vector.broadcast %40 : vector<2x1xi32> to vector<2x10xi32>
      %42 = arith.cmpi eq, %39, %41 : vector<2x10xi32>
      %43 = arith.extui %42 : vector<2x10xi1> to vector<2x10xi32>
      %44 = arith.sitofp %43 : vector<2x10xi32> to vector<2x10xf32>
      %45 = arith.subf %38, %44 : vector<2x10xf32>
      %cst_30 = arith.constant dense<0.000000e+00> : vector<16x16xf32>
      %46 = tpu.matmul %21, %21, %cst_30 {dimension_numbers = #tpu.dot_dimension_numbers<[0], [0], [1], [1], [0, 1, 1, 1], [], []>} : vector<2x16xf32>, vector<2x16xf32>, vector<16x16xf32> -> vector<16x16xf32>
      %cst_31 = arith.constant 5.000000e-01 : f32
      %47 = vector.broadcast %cst_31 : f32 to vector<16x16xf32>
      %48 = arith.mulf %46, %47 : vector<16x16xf32>
      %c0_32 = arith.constant 0 : index
      %c0_33 = arith.constant 0 : index
      %49 = vector.load %arg9[%c0_32, %c0_33] : memref<16x16xf32, #tpu.memory_space<vmem>>, vector<16x16xf32>
      tpu.vector_store %arg9[%c0_32, %c0_33], %48 {strides = array<i32>} : memref<16x16xf32, #tpu.memory_space<vmem>>, vector<16x16xf32>,
      %cst_34 = arith.constant dense<0.000000e+00> : vector<10x10xf32>
      %50 = tpu.matmul %45, %45, %cst_34 {dimension_numbers = #tpu.dot_dimension_numbers<[0], [0], [1], [1], [0, 1, 1, 1], [], []>} : vector<2x10xf32>, vector<2x10xf32>, vector<10x10xf32> -> vector<10x10xf32>
      %cst_35 = arith.constant 5.000000e-01 : f32
      %51 = vector.broadcast %cst_35 : f32 to vector<10x10xf32>
      %52 = arith.mulf %50, %51 : vector<10x10xf32>
      %c0_36 = arith.constant 0 : index
      %c0_37 = arith.constant 0 : index
      %53 = vector.load %arg10[%c0_36, %c0_37] : memref<10x10xf32, #tpu.memory_space<vmem>>, vector<10x10xf32>
      tpu.vector_store %arg10[%c0_36, %c0_37], %52 {strides = array<i32>} : memref<10x10xf32, #tpu.memory_space<vmem>>, vector<10x10xf32>,
    } else {
    }
    return
  }
  func.func @transform_0(%arg0: i32) -> (i32, i32, i32) {
    %c0_i32 = arith.constant 0 : i32
    %c0_i32_0 = arith.constant 0 : i32
    %c0_i32_1 = arith.constant 0 : i32
    return %c0_i32, %arg0, %c0_i32_0 : i32, i32, i32
  }
  func.func @transform_1(%arg0: i32) -> (i32, i32) {
    %c0_i32 = arith.constant 0 : i32
    %c0_i32_0 = arith.constant 0 : i32
    %c0_i32_1 = arith.constant 0 : i32
    return %c0_i32, %c0_i32_0 : i32, i32
  }
  func.func @transform_2(%arg0: i32) -> (i32, i32) {
    %c0_i32 = arith.constant 0 : i32
    %c0_i32_0 = arith.constant 0 : i32
    %c0_i32_1 = arith.constant 0 : i32
    return %c0_i32, %c0_i32_0 : i32, i32
  }
  func.func @transform_3(%arg0: i32) -> (i32, i32) {
    %c0_i32 = arith.constant 0 : i32
    %c0_i32_0 = arith.constant 0 : i32
    %c0_i32_1 = arith.constant 0 : i32
    return %c0_i32, %c0_i32_0 : i32, i32
  }
  func.func @transform_4(%arg0: i32) -> (i32, i32) {
    %c0_i32 = arith.constant 0 : i32
    %c0_i32_0 = arith.constant 0 : i32
    %c0_i32_1 = arith.constant 0 : i32
    return %c0_i32, %c0_i32_0 : i32, i32
  }
  func.func @transform_5(%arg0: i32) -> (i32, i32) {
    %c0_i32 = arith.constant 0 : i32
    %c0_i32_0 = arith.constant 0 : i32
    %c0_i32_1 = arith.constant 0 : i32
    return %c0_i32, %c0_i32_0 : i32, i32
  }
  func.func @transform_6(%arg0: i32) -> (i32, i32) {
    %c0_i32 = arith.constant 0 : i32
    %c0_i32_0 = arith.constant 0 : i32
    %c0_i32_1 = arith.constant 0 : i32
    return %c0_i32, %c0_i32_0 : i32, i32
  }
  func.func @transform_7(%arg0: i32) -> (i32, i32) {
    %c0_i32 = arith.constant 0 : i32
    %c0_i32_0 = arith.constant 0 : i32
    %c0_i32_1 = arith.constant 0 : i32
    return %c0_i32, %c0_i32_0 : i32, i32
  }
  func.func @transform_8(%arg0: i32) -> (i32, i32) {
    %c0_i32 = arith.constant 0 : i32
    %c0_i32_0 = arith.constant 0 : i32
    %c0_i32_1 = arith.constant 0 : i32
    return %c0_i32, %c0_i32_0 : i32, i32
  }
  func.func @transform_9(%arg0: i32) -> (i32, i32) {
    %c0_i32 = arith.constant 0 : i32
    %c0_i32_0 = arith.constant 0 : i32
    %c0_i32_1 = arith.constant 0 : i32
    return %c0_i32, %c0_i32_0 : i32, i32
  }
}

</mosaic_0001>

<llo_original>
// kernel: fwd.1
$region0: #{fwd.1}
  #allocation0 [shape = 'u32[]', space=smem, size = 0x4, offset = 0x4, fixed_abs, tag = 'smem constant byte address 0x4 - core index']
  #allocation1 [shape = 'u32[144,128]{1,0:T(1,128)}', space=vmem, size = 0x12000, scoped, tag = 'internal scratch']
  #allocation2 [shape = 'f32[2,16]{1,0:T(2,128)}', space=vmem, size = 0x400, scoped, tag = 'scratch operand']
  %s0 = inlined_call_operand.vmem [shape: bf16[2,1024,27], index: 0, kind: input, shape index: {}]
  %s1 = inlined_call_operand.vmem [shape: bf16[27,16], index: 1, kind: input, shape index: {}]
  %s2 = inlined_call_operand.vmem [shape: f32[1,16], index: 2, kind: input, shape index: {}]
  %s3 = inlined_call_operand.vmem [shape: f32[16,10], index: 3, kind: input, shape index: {}]
  %s4 = inlined_call_operand.vmem [shape: f32[1,10], index: 4, kind: input, shape index: {}]
  %s5 = inlined_call_operand.vmem [shape: s32[2,1], index: 5, kind: input, shape index: {}]
  %s6 = inlined_call_operand.hbm [shape: f32[2,10], index: 6, kind: output, shape index: {0}]
  %s7 = inlined_call_operand.hbm [shape: f32[2,16], index: 7, kind: output, shape index: {1}]
  %s8 = inlined_call_operand.vmem [shape: f32[16,16], index: 8, kind: output, shape index: {2}]
  %s9 = inlined_call_operand.vmem [shape: f32[10,10], index: 9, kind: output, shape index: {3}]
  %10 = xla_tuple %s6, %s7, %s8, %s9
  %s11 = sld [smem:[#allocation0]]
  $region130: #{fwd.1} parent=0
    _
  %s13 = ssub.s32 1, %s11
  %s14 = scalar_select 0, %s13, %s11
  $region1: #{fwd.1} parent=0
    #allocation3 [shape = 'u8[524288]{0}', space=vmem, size = 0x80000, scoped, tag = 'input window, operand 0']
    #allocation4 [shape = 'u8[1024]{0}', space=vmem, size = 0x400, scoped, tag = 'output window, operand 0, single buffered']
    #allocation5 [shape = 's32[2]{0}', space=sflag, size = 0x8, scoped, tag = 'scoped memory for fwd.1']
    #allocation6 [shape = 'u8[1024]{0}', space=vmem, size = 0x400, scoped, tag = 'output window, operand 1, single buffered']
    #allocation7 [shape = 's32[1]{0}', space=sflag, size = 0x4, scoped, tag = 'scoped memory for fwd.1']
    %15 = vsyncpa [#allocation5], 0
    %16 = vsyncpa [#allocation7], 0
    loop: start=0, step=1, limit=4
    $region2: #{fwd.1} parent=1 // loop_pre_header
      _
    $region3: #{fwd.1} parent=1 // loop_header
      %s18 = sphi 0, %s22
      %p19 = scmp.ge.s32.totalorder %s18, 4
      %s28 = sphi 0, %s30
      %s31 = sphi 0, %s28
      %s32 = sphi 0, %s31
      %s48 = sphi 0, %s32
      %s52 = sphi 0, %s52
      %s54 = sphi 0, %s52
      %s55 = sphi 0, %s54
      %s69 = sphi 0, %s55
      %s73 = sphi 0, %s73
      %s75 = sphi 0, %s73
      %s76 = sphi 0, %s75
      %s90 = sphi 0, %s76
      %s94 = sphi 0, %s94
      %s96 = sphi 0, %s94
      %s97 = sphi 0, %s96
      %s111 = sphi 0, %s97
      %s115 = sphi 0, %s115
      %s117 = sphi 0, %s115
      %s118 = sphi 0, %s117
      %s132 = sphi 0, %s118
      %s136 = sphi 0, %s136
      %s138 = sphi 0, %s136
      %s139 = sphi 0, %s138
      %s153 = sphi 0, %s139
      %s157 = sphi 0, %s157
      %s159 = sphi 0, %s157
      %s160 = sphi 0, %s159
      %s174 = sphi 0, %s160
      %s178 = sphi 0, %s178
      %s180 = sphi 0, %s178
      %s181 = sphi 0, %s180
      %s195 = sphi 0, %s181
      %s199 = sphi 0, %s199
      %s201 = sphi 0, %s199
      %s202 = sphi 0, %s201
      %s216 = sphi 0, %s202
      %s220 = sphi 0, %s220
      %s222 = sphi 0, %s220
      %s223 = sphi 0, %s222
      %s237 = sphi 0, %s223
    $region4: #{fwd.1} parent=1 // loop_header_branch
      %21 = sbr.rel (%p19) target = $region8
    $region5: #{fwd.1} parent=1 // loop_body
      %s23 = ssub.s32 %s18, 1
      %s24 = ssub.s32 %s18, 2
      %s25 = sadd.s32 %s18, 1
      %s26 = ssub.s32 %s18, %s25
      %p27 = scmp.eq.s32.totalorder %s26, 0
      %s29 = sadd.s32 %s28, 1
      %s30 = scalar_select %p27, %s28, %s29
      %p33 = pneg %p27
      %p34 = scmp.eq.s32.totalorder %s18, 1
      %p35 = por %p33, %p34
      %p36 = scmp.ne.s32.totalorder %s28, %s31
      %p37 = scmp.eq.s32.totalorder %s18, 0
      %p38 = por %p36, %p37
      %p39 = scmp.ne.s32.totalorder %s28, %s31
      %p40 = scmp.eq.s32.totalorder %s23, 1
      %p41 = por %p39, %p40
      %p42 = scmp.ne.s32.totalorder %s31, %s32
      %p43 = scmp.eq.s32.totalorder %s23, 0
      %p44 = por %p42, %p43
      %p45 = scmp.ne.s32.totalorder %s31, %s32
      %p46 = scmp.eq.s32.totalorder %s24, 1
      %p47 = por %p45, %p46
      %p49 = scmp.ne.s32.totalorder %s32, %s48
      %p50 = scmp.eq.s32.totalorder %s24, 0
      %p51 = por %p49, %p50
      %s53 = sadd.s32 %s52, 1
      %p56 = scmp.eq.s32.totalorder %s18, 1
      %p57 = scmp.ne.s32.totalorder %s52, %s54
      %p58 = scmp.eq.s32.totalorder %s18, 0
      %p59 = por %p57, %p58
      %p60 = scmp.ne.s32.totalorder %s52, %s54
      %p61 = scmp.eq.s32.totalorder %s23, 1
      %p62 = por %p60, %p61
      %p63 = scmp.ne.s32.totalorder %s54, %s55
      %p64 = scmp.eq.s32.totalorder %s23, 0
      %p65 = por %p63, %p64
      %p66 = scmp.ne.s32.totalorder %s54, %s55
      %p67 = scmp.eq.s32.totalorder %s24, 1
      %p68 = por %p66, %p67
      %p70 = scmp.ne.s32.totalorder %s55, %s69
      %p71 = scmp.eq.s32.totalorder %s24, 0
      %p72 = por %p70, %p71
      %s74 = sadd.s32 %s73, 1
      %p77 = scmp.eq.s32.totalorder %s18, 1
      %p78 = scmp.ne.s32.totalorder %s73, %s75
      %p79 = scmp.eq.s32.totalorder %s18, 0
      %p80 = por %p78, %p79
      %p81 = scmp.ne.s32.totalorder %s73, %s75
      %p82 = scmp.eq.s32.totalorder %s23, 1
      %p83 = por %p81, %p82
      %p84 = scmp.ne.s32.totalorder %s75, %s76
      %p85 = scmp.eq.s32.totalorder %s23, 0
      %p86 = por %p84, %p85
      %p87 = scmp.ne.s32.totalorder %s75, %s76
      %p88 = scmp.eq.s32.totalorder %s24, 1
      %p89 = por %p87, %p88
      %p91 = scmp.ne.s32.totalorder %s76, %s90
      %p92 = scmp.eq.s32.totalorder %s24, 0
      %p93 = por %p91, %p92
      %s95 = sadd.s32 %s94, 1
      %p98 = scmp.eq.s32.totalorder %s18, 1
      %p99 = scmp.ne.s32.totalorder %s94, %s96
      %p100 = scmp.eq.s32.totalorder %s18, 0
      %p101 = por %p99, %p100
      %p102 = scmp.ne.s32.totalorder %s94, %s96
      %p103 = scmp.eq.s32.totalorder %s23, 1
      %p104 = por %p102, %p103
      %p105 = scmp.ne.s32.totalorder %s96, %s97
      %p106 = scmp.eq.s32.totalorder %s23, 0
      %p107 = por %p105, %p106
      %p108 = scmp.ne.s32.totalorder %s96, %s97
      %p109 = scmp.eq.s32.totalorder %s24, 1
      %p110 = por %p108, %p109
      %p112 = scmp.ne.s32.totalorder %s97, %s111
      %p113 = scmp.eq.s32.totalorder %s24, 0
      %p114 = por %p112, %p113
      %s116 = sadd.s32 %s115, 1
      %p119 = scmp.eq.s32.totalorder %s18, 1
      %p120 = scmp.ne.s32.totalorder %s115, %s117
      %p121 = scmp.eq.s32.totalorder %s18, 0
      %p122 = por %p120, %p121
      %p123 = scmp.ne.s32.totalorder %s115, %s117
      %p124 = scmp.eq.s32.totalorder %s23, 1
      %p125 = por %p123, %p124
      %p126 = scmp.ne.s32.totalorder %s117, %s118
      %p127 = scmp.eq.s32.totalorder %s23, 0
      %p128 = por %p126, %p127
      %p129 = scmp.ne.s32.totalorder %s117, %s118
      %p130 = scmp.eq.s32.totalorder %s24, 1
      %p131 = por %p129, %p130
      %p133 = scmp.ne.s32.totalorder %s118, %s132
      %p134 = scmp.eq.s32.totalorder %s24, 0
      %p135 = por %p133, %p134
      %s137 = sadd.s32 %s136, 1
      %p140 = scmp.eq.s32.totalorder %s18, 1
      %p141 = scmp.ne.s32.totalorder %s136, %s138
      %p142 = scmp.eq.s32.totalorder %s18, 0
      %p143 = por %p141, %p142
      %p144 = scmp.ne.s32.totalorder %s136, %s138
      %p145 = scmp.eq.s32.totalorder %s23, 1
      %p146 = por %p144, %p145
      %p147 = scmp.ne.s32.totalorder %s138, %s139
      %p148 = scmp.eq.s32.totalorder %s23, 0
      %p149 = por %p147, %p148
      %p150 = scmp.ne.s32.totalorder %s138, %s139
      %p151 = scmp.eq.s32.totalorder %s24, 1
      %p152 = por %p150, %p151
      %p154 = scmp.ne.s32.totalorder %s139, %s153
      %p155 = scmp.eq.s32.totalorder %s24, 0
      %p156 = por %p154, %p155
      %s158 = sadd.s32 %s157, 1
      %p161 = scmp.eq.s32.totalorder %s18, 1
      %p162 = scmp.ne.s32.totalorder %s157, %s159
      %p163 = scmp.eq.s32.totalorder %s18, 0
      %p164 = por %p162, %p163
      %p165 = scmp.ne.s32.totalorder %s157, %s159
      %p166 = scmp.eq.s32.totalorder %s23, 1
      %p167 = por %p165, %p166
      %p168 = scmp.ne.s32.totalorder %s159, %s160
      %p169 = scmp.eq.s32.totalorder %s23, 0
      %p170 = por %p168, %p169
      %p171 = scmp.ne.s32.totalorder %s159, %s160
      %p172 = scmp.eq.s32.totalorder %s24, 1
      %p173 = por %p171, %p172
      %p175 = scmp.ne.s32.totalorder %s160, %s174
      %p176 = scmp.eq.s32.totalorder %s24, 0
      %p177 = por %p175, %p176
      %s179 = sadd.s32 %s178, 1
      %p182 = scmp.eq.s32.totalorder %s18, 1
      %p183 = scmp.ne.s32.totalorder %s178, %s180
      %p184 = scmp.eq.s32.totalorder %s18, 0
      %p185 = por %p183, %p184
      %p186 = scmp.ne.s32.totalorder %s178, %s180
      %p187 = scmp.eq.s32.totalorder %s23, 1
      %p188 = por %p186, %p187
      %p189 = scmp.ne.s32.totalorder %s180, %s181
      %p190 = scmp.eq.s32.totalorder %s23, 0
      %p191 = por %p189, %p190
      %p192 = scmp.ne.s32.totalorder %s180, %s181
      %p193 = scmp.eq.s32.totalorder %s24, 1
      %p194 = por %p192, %p193
      %p196 = scmp.ne.s32.totalorder %s181, %s195
      %p197 = scmp.eq.s32.totalorder %s24, 0
      %p198 = por %p196, %p197
      %s200 = sadd.s32 %s199, 1
      %p203 = scmp.eq.s32.totalorder %s18, 1
      %p204 = scmp.ne.s32.totalorder %s199, %s201
      %p205 = scmp.eq.s32.totalorder %s18, 0
      %p206 = por %p204, %p205
      %p207 = scmp.ne.s32.totalorder %s199, %s201
      %p208 = scmp.eq.s32.totalorder %s23, 1
      %p209 = por %p207, %p208
      %p210 = scmp.ne.s32.totalorder %s201, %s202
      %p211 = scmp.eq.s32.totalorder %s23, 0
      %p212 = por %p210, %p211
      %p213 = scmp.ne.s32.totalorder %s201, %s202
      %p214 = scmp.eq.s32.totalorder %s24, 1
      %p215 = por %p213, %p214
      %p217 = scmp.ne.s32.totalorder %s202, %s216
      %p218 = scmp.eq.s32.totalorder %s24, 0
      %p219 = por %p217, %p218
      %s221 = sadd.s32 %s220, 1
      %p224 = scmp.eq.s32.totalorder %s18, 1
      %p225 = scmp.ne.s32.totalorder %s220, %s222
      %p226 = scmp.eq.s32.totalorder %s18, 0
      %p227 = por %p225, %p226
      %p228 = scmp.ne.s32.totalorder %s220, %s222
      %p229 = scmp.eq.s32.totalorder %s23, 1
      %p230 = por %p228, %p229
      %p231 = scmp.ne.s32.totalorder %s222, %s223
      %p232 = scmp.eq.s32.totalorder %s23, 0
      %p233 = por %p231, %p232
      %p234 = scmp.ne.s32.totalorder %s222, %s223
      %p235 = scmp.eq.s32.totalorder %s24, 1
      %p236 = por %p234, %p235
      %p238 = scmp.ne.s32.totalorder %s223, %s237
      %p239 = scmp.eq.s32.totalorder %s24, 0
      %p240 = por %p238, %p239
      %p241 = scmp.le.s32.totalorder 1, %s18
      %p242 = scmp.lt.s32.totalorder %s18, 3
      %p243 = pnand %p241, %p242
      %p244 = pneg %p243
      // Predicated region
      $region9: #{fwd.1} parent=5 // pred_check
        _
      $region10: #{fwd.1} parent=5 // pred_check_branch
        %246 = sbr.rel (%p243) target = $region12
      $region11: #{fwd.1} parent=5 // pred_region
        %s247 = ssub.s32 %s18, 1
        // Predicated region
        $region13: #{fwd.1} parent=11 // pred_check
          %p248 = pneg %p65
        $region14: #{fwd.1} parent=11 // pred_check_branch
          %250 = sbr.rel (%p248) target = $region16
        $region15: #{fwd.1} parent=11 // pred_region
          _
        $region16: #{fwd.1} parent=11 // pred_fallthru
          _
        // Predicated region
        $region17: #{fwd.1} parent=11 // pred_check
          %p251 = pneg %p86
        $region18: #{fwd.1} parent=11 // pred_check_branch
          %253 = sbr.rel (%p251) target = $region20
        $region19: #{fwd.1} parent=11 // pred_region
          _
        $region20: #{fwd.1} parent=11 // pred_fallthru
          _
        // Predicated region
        $region21: #{fwd.1} parent=11 // pred_check
          %p254 = pneg %p107
        $region22: #{fwd.1} parent=11 // pred_check_branch
          %256 = sbr.rel (%p254) target = $region24
        $region23: #{fwd.1} parent=11 // pred_region
          _
        $region24: #{fwd.1} parent=11 // pred_fallthru
          _
        // Predicated region
        $region25: #{fwd.1} parent=11 // pred_check
          %p257 = pneg %p128
        $region26: #{fwd.1} parent=11 // pred_check_branch
          %259 = sbr.rel (%p257) target = $region28
        $region27: #{fwd.1} parent=11 // pred_region
          _
        $region28: #{fwd.1} parent=11 // pred_fallthru
          _
        // Predicated region
        $region29: #{fwd.1} parent=11 // pred_check
          %p260 = pneg %p149
        $region30: #{fwd.1} parent=11 // pred_check_branch
          %262 = sbr.rel (%p260) target = $region32
        $region31: #{fwd.1} parent=11 // pred_region
          _
        $region32: #{fwd.1} parent=11 // pred_fallthru
          _
      $region12: #{fwd.1} parent=5 // pred_fallthru
        _
      %p263 = scmp.lt.s32.totalorder %s18, 2
      // Predicated region
      $region33: #{fwd.1} parent=5 // pred_check
        %p264 = pneg %p263
      $region34: #{fwd.1} parent=5 // pred_check_branch
        %266 = sbr.rel (%p264) target = $region36
      $region35: #{fwd.1} parent=5 // pred_region
        // Predicated region
        $region37: #{fwd.1} parent=35 // pred_check
          %p267 = pneg %p38
        $region38: #{fwd.1} parent=35 // pred_check_branch
          %269 = sbr.rel (%p267) target = $region40
        $region39: #{fwd.1} parent=35 // pred_region
          %s270 = sand.u32 %s28, 1
          %s271 = sand.u32 %s28, 1
          %s272 = smul.addr %s271, 512
          %s273 = scalar_lea.vmem [#allocation3], %s272
          %s274 = smul.u32 64, %s18
          %s275 = smul.addr %s274, 4
          %s276 = scalar_lea.vmem %s0, %s275
          // Predicated region
          $region41: #{fwd.1} parent=39 // pred_check
            _
          $region42: #{fwd.1} parent=39 // pred_check_branch
            %278 = sbr.rel (0) target = $region44
          $region43: #{fwd.1} parent=39 // pred_region
            // Predicated region
            $region45: #{fwd.1} parent=43 // pred_check
              _
            $region46: #{fwd.1} parent=43 // pred_check_branch
              %280 = sbr.rel target = $region48
            $region47: #{fwd.1} parent=43 // pred_region
              // Predicated region
              $region60: #{fwd.1} parent=47 // pred_check
                _
              $region61: #{fwd.1} parent=47 // pred_check_branch
                %550 = sbr.rel (0) target = $region63
              $region62: #{fwd.1} parent=47 // pred_region
                loop: start=0, step=1, limit=1
                $region64: #{fwd.1} parent=62 // loop_pre_header
                  _
                $region65: #{fwd.1} parent=62 // loop_header
                  %s552 = sphi 0, %s556
                  %p553 = scmp.ge.s32.totalorder %s552, 1
                  %s557 = sphi %s276, %s276
                  %s558 = sphi %s273, %s273
                $region66: #{fwd.1} parent=62 // loop_header_branch
                  %555 = sbr.rel (%p553) target = $region70
                $region67: #{fwd.1} parent=62 // loop_body
                  _
                $region68: #{fwd.1} parent=62 // loop_footer
                  %s556 = sadd.s32 1, %s552
                $region69: #{fwd.1} parent=62 // loop_footer_branch
                  %551 = sbr.rel target = $region65
                $region70: #{fwd.1} parent=62 // loop_exit
                  _
                %s560 = ssub.s32 16, 1
                loop: start=0, step=1, limit=1
                $region71: #{fwd.1} parent=62 // loop_pre_header
                  _
                $region72: #{fwd.1} parent=62 // loop_header
                  %s562 = sphi 0, %s566
                  %p563 = scmp.ge.s32.totalorder %s562, 1
                  %s567 = sphi %s276, %s276
                  %s568 = sphi %s273, %s273
                $region73: #{fwd.1} parent=62 // loop_header_branch
                  %565 = sbr.rel (%p563) target = $region77
                $region74: #{fwd.1} parent=62 // loop_body
                  %v569 = vld [vmem:[%s567] sm:%s560]
                  %570 = vst [vmem:[%s568] sm:%s560] %v569
                  %v571 = vld [vmem:[%s567 + $0x4] sm:%s560]
                  %572 = vst [vmem:[%s568 + $0x4] sm:%s560] %v571
                  %v573 = vld [vmem:[%s567 + $0x8] sm:%s560]
                  %574 = vst [vmem:[%s568 + $0x8] sm:%s560] %v573
                  %v575 = vld [vmem:[%s567 + $0xc] sm:%s560]
                  %576 = vst [vmem:[%s568 + $0xc] sm:%s560] %v575
                  %v577 = vld [vmem:[%s567 + $0x10] sm:%s560]
                  %578 = vst [vmem:[%s568 + $0x10] sm:%s560] %v577
                  %v579 = vld [vmem:[%s567 + $0x14] sm:%s560]
                  %580 = vst [vmem:[%s568 + $0x14] sm:%s560] %v579
                  %v581 = vld [vmem:[%s567 + $0x18] sm:%s560]
                  %582 = vst [vmem:[%s568 + $0x18] sm:%s560] %v581
                  %v583 = vld [vmem:[%s567 + $0x1c] sm:%s560]
                  %584 = vst [vmem:[%s568 + $0x1c] sm:%s560] %v583
                  %v585 = vld [vmem:[%s567 + $0x20] sm:%s560]
                  %586 = vst [vmem:[%s568 + $0x20] sm:%s560] %v585
                  %v587 = vld [vmem:[%s567 + $0x24] sm:%s560]
                  %588 = vst [vmem:[%s568 + $0x24] sm:%s560] %v587
                  %v589 = vld [vmem:[%s567 + $0x28] sm:%s560]
                  %590 = vst [vmem:[%s568 + $0x28] sm:%s560] %v589
                  %v591 = vld [vmem:[%s567 + $0x2c] sm:%s560]
                  %592 = vst [vmem:[%s568 + $0x2c] sm:%s560] %v591
                  %v593 = vld [vmem:[%s567 + $0x30] sm:%s560]
                  %594 = vst [vmem:[%s568 + $0x30] sm:%s560] %v593
                  %v595 = vld [vmem:[%s567 + $0x34] sm:%s560]
                  %596 = vst [vmem:[%s568 + $0x34] sm:%s560] %v595
                  %v597 = vld [vmem:[%s567 + $0x38] sm:%s560]
                  %598 = vst [vmem:[%s568 + $0x38] sm:%s560] %v597
                  %v599 = vld [vmem:[%s567 + $0x3c] sm:%s560]
                  %600 = vst [vmem:[%s568 + $0x3c] sm:%s560] %v599
                  %v601 = vld [vmem:[%s567 + $0x40] sm:%s560]
                  %602 = vst [vmem:[%s568 + $0x40] sm:%s560] %v601
                  %v603 = vld [vmem:[%s567 + $0x44] sm:%s560]
                  %604 = vst [vmem:[%s568 + $0x44] sm:%s560] %v603
                  %v605 = vld [vmem:[%s567 + $0x48] sm:%s560]
                  %606 = vst [vmem:[%s568 + $0x48] sm:%s560] %v605
                  %v607 = vld [vmem:[%s567 + $0x4c] sm:%s560]
                  %608 = vst [vmem:[%s568 + $0x4c] sm:%s560] %v607
                  %v609 = vld [vmem:[%s567 + $0x50] sm:%s560]
                  %610 = vst [vmem:[%s568 + $0x50] sm:%s560] %v609
                  %v611 = vld [vmem:[%s567 + $0x54] sm:%s560]
                  %612 = vst [vmem:[%s568 + $0x54] sm:%s560] %v611
                  %v613 = vld [vmem:[%s567 + $0x58] sm:%s560]
                  %614 = vst [vmem:[%s568 + $0x58] sm:%s560] %v613
                  %v615 = vld [vmem:[%s567 + $0x5c] sm:%s560]
                  %616 = vst [vmem:[%s568 + $0x5c] sm:%s560] %v615
                  %v617 = vld [vmem:[%s567 + $0x60] sm:%s560]
                  %618 = vst [vmem:[%s568 + $0x60] sm:%s560] %v617
                  %v619 = vld [vmem:[%s567 + $0x64] sm:%s560]
                  %620 = vst [vmem:[%s568 + $0x64] sm:%s560] %v619
                  %v621 = vld [vmem:[%s567 + $0x68] sm:%s560]
                  %622 = vst [vmem:[%s568 + $0x68] sm:%s560] %v621
                  %v623 = vld [vmem:[%s567 + $0x6c] sm:%s560]
                  %624 = vst [vmem:[%s568 + $0x6c] sm:%s560] %v623
                  %v625 = vld [vmem:[%s567 + $0x70] sm:%s560]
                  %626 = vst [vmem:[%s568 + $0x70] sm:%s560] %v625
                  %v627 = vld [vmem:[%s567 + $0x74] sm:%s560]
                  %628 = vst [vmem:[%s568 + $0x74] sm:%s560] %v627
                  %v629 = vld [vmem:[%s567 + $0x78] sm:%s560]
                  %630 = vst [vmem:[%s568 + $0x78] sm:%s560] %v629
                  %v631 = vld [vmem:[%s567 + $0x7c] sm:%s560]
                  %632 = vst [vmem:[%s568 + $0x7c] sm:%s560] %v631
                  %v633 = vld [vmem:[%s567 + $0x80] sm:%s560]
                  %634 = vst [vmem:[%s568 + $0x80] sm:%s560] %v633
                  %v635 = vld [vmem:[%s567 + $0x84] sm:%s560]
                  %636 = vst [vmem:[%s568 + $0x84] sm:%s560] %v635
                  %v637 = vld [vmem:[%s567 + $0x88] sm:%s560]
                  %638 = vst [vmem:[%s568 + $0x88] sm:%s560] %v637
                  %v639 = vld [vmem:[%s567 + $0x8c] sm:%s560]
                  %640 = vst [vmem:[%s568 + $0x8c] sm:%s560] %v639
                  %v641 = vld [vmem:[%s567 + $0x90] sm:%s560]
                  %642 = vst [vmem:[%s568 + $0x90] sm:%s560] %v641
                  %v643 = vld [vmem:[%s567 + $0x94] sm:%s560]
                  %644 = vst [vmem:[%s568 + $0x94] sm:%s560] %v643
                  %v645 = vld [vmem:[%s567 + $0x98] sm:%s560]
                  %646 = vst [vmem:[%s568 + $0x98] sm:%s560] %v645
                  %v647 = vld [vmem:[%s567 + $0x9c] sm:%s560]
                  %648 = vst [vmem:[%s568 + $0x9c] sm:%s560] %v647
                  %v649 = vld [vmem:[%s567 + $0xa0] sm:%s560]
                  %650 = vst [vmem:[%s568 + $0xa0] sm:%s560] %v649
                  %v651 = vld [vmem:[%s567 + $0xa4] sm:%s560]
                  %652 = vst [vmem:[%s568 + $0xa4] sm:%s560] %v651
                  %v653 = vld [vmem:[%s567 + $0xa8] sm:%s560]
                  %654 = vst [vmem:[%s568 + $0xa8] sm:%s560] %v653
                  %v655 = vld [vmem:[%s567 + $0xac] sm:%s560]
                  %656 = vst [vmem:[%s568 + $0xac] sm:%s560] %v655
                  %v657 = vld [vmem:[%s567 + $0xb0] sm:%s560]
                  %658 = vst [vmem:[%s568 + $0xb0] sm:%s560] %v657
                  %v659 = vld [vmem:[%s567 + $0xb4] sm:%s560]
                  %660 = vst [vmem:[%s568 + $0xb4] sm:%s560] %v659
                  %v661 = vld [vmem:[%s567 + $0xb8] sm:%s560]
                  %662 = vst [vmem:[%s568 + $0xb8] sm:%s560] %v661
                  %v663 = vld [vmem:[%s567 + $0xbc] sm:%s560]
                  %664 = vst [vmem:[%s568 + $0xbc] sm:%s560] %v663
                  %v665 = vld [vmem:[%s567 + $0xc0] sm:%s560]
                  %666 = vst [vmem:[%s568 + $0xc0] sm:%s560] %v665
                  %v667 = vld [vmem:[%s567 + $0xc4] sm:%s560]
                  %668 = vst [vmem:[%s568 + $0xc4] sm:%s560] %v667
                  %v669 = vld [vmem:[%s567 + $0xc8] sm:%s560]
                  %670 = vst [vmem:[%s568 + $0xc8] sm:%s560] %v669
                  %v671 = vld [vmem:[%s567 + $0xcc] sm:%s560]
                  %672 = vst [vmem:[%s568 + $0xcc] sm:%s560] %v671
                  %v673 = vld [vmem:[%s567 + $0xd0] sm:%s560]
                  %674 = vst [vmem:[%s568 + $0xd0] sm:%s560] %v673
                  %v675 = vld [vmem:[%s567 + $0xd4] sm:%s560]
                  %676 = vst [vmem:[%s568 + $0xd4] sm:%s560] %v675
                  %v677 = vld [vmem:[%s567 + $0xd8] sm:%s560]
                  %678 = vst [vmem:[%s568 + $0xd8] sm:%s560] %v677
                  %v679 = vld [vmem:[%s567 + $0xdc] sm:%s560]
                  %680 = vst [vmem:[%s568 + $0xdc] sm:%s560] %v679
                  %v681 = vld [vmem:[%s567 + $0xe0] sm:%s560]
                  %682 = vst [vmem:[%s568 + $0xe0] sm:%s560] %v681
                  %v683 = vld [vmem:[%s567 + $0xe4] sm:%s560]
                  %684 = vst [vmem:[%s568 + $0xe4] sm:%s560] %v683
                  %v685 = vld [vmem:[%s567 + $0xe8] sm:%s560]
                  %686 = vst [vmem:[%s568 + $0xe8] sm:%s560] %v685
                  %v687 = vld [vmem:[%s567 + $0xec] sm:%s560]
                  %688 = vst [vmem:[%s568 + $0xec] sm:%s560] %v687
                  %v689 = vld [vmem:[%s567 + $0xf0] sm:%s560]
                  %690 = vst [vmem:[%s568 + $0xf0] sm:%s560] %v689
                  %v691 = vld [vmem:[%s567 + $0xf4] sm:%s560]
                  %692 = vst [vmem:[%s568 + $0xf4] sm:%s560] %v691
                  %v693 = vld [vmem:[%s567 + $0xf8] sm:%s560]
                  %694 = vst [vmem:[%s568 + $0xf8] sm:%s560] %v693
                  %v695 = vld [vmem:[%s567 + $0xfc] sm:%s560]
                  %696 = vst [vmem:[%s568 + $0xfc] sm:%s560] %v695
                  %v697 = vld [vmem:[%s567 + $0x200] sm:%s560]
                  %698 = vst [vmem:[%s568 + $0x100] sm:%s560] %v697
                  %v699 = vld [vmem:[%s567 + $0x204] sm:%s560]
                  %700 = vst [vmem:[%s568 + $0x104] sm:%s560] %v699
                  %v701 = vld [vmem:[%s567 + $0x208] sm:%s560]
                  %702 = vst [vmem:[%s568 + $0x108] sm:%s560] %v701
                  %v703 = vld [vmem:[%s567 + $0x20c] sm:%s560]
                  %704 = vst [vmem:[%s568 + $0x10c] sm:%s560] %v703
                  %v705 = vld [vmem:[%s567 + $0x210] sm:%s560]
                  %706 = vst [vmem:[%s568 + $0x110] sm:%s560] %v705
                  %v707 = vld [vmem:[%s567 + $0x214] sm:%s560]
                  %708 = vst [vmem:[%s568 + $0x114] sm:%s560] %v707
                  %v709 = vld [vmem:[%s567 + $0x218] sm:%s560]
                  %710 = vst [vmem:[%s568 + $0x118] sm:%s560] %v709
                  %v711 = vld [vmem:[%s567 + $0x21c] sm:%s560]
                  %712 = vst [vmem:[%s568 + $0x11c] sm:%s560] %v711
                  %v713 = vld [vmem:[%s567 + $0x220] sm:%s560]
                  %714 = vst [vmem:[%s568 + $0x120] sm:%s560] %v713
                  %v715 = vld [vmem:[%s567 + $0x224] sm:%s560]
                  %716 = vst [vmem:[%s568 + $0x124] sm:%s560] %v715
                  %v717 = vld [vmem:[%s567 + $0x228] sm:%s560]
                  %718 = vst [vmem:[%s568 + $0x128] sm:%s560] %v717
                  %v719 = vld [vmem:[%s567 + $0x22c] sm:%s560]
                  %720 = vst [vmem:[%s568 + $0x12c] sm:%s560] %v719
                  %v721 = vld [vmem:[%s567 + $0x230] sm:%s560]
                  %722 = vst [vmem:[%s568 + $0x130] sm:%s560] %v721
                  %v723 = vld [vmem:[%s567 + $0x234] sm:%s560]
                  %724 = vst [vmem:[%s568 + $0x134] sm:%s560] %v723
                  %v725 = vld [vmem:[%s567 + $0x238] sm:%s560]
                  %726 = vst [vmem:[%s568 + $0x138] sm:%s560] %v725
                  %v727 = vld [vmem:[%s567 + $0x23c] sm:%s560]
                  %728 = vst [vmem:[%s568 + $0x13c] sm:%s560] %v727
                  %v729 = vld [vmem:[%s567 + $0x240] sm:%s560]
                  %730 = vst [vmem:[%s568 + $0x140] sm:%s560] %v729
                  %v731 = vld [vmem:[%s567 + $0x244] sm:%s560]
                  %732 = vst [vmem:[%s568 + $0x144] sm:%s560] %v731
                  %v733 = vld [vmem:[%s567 + $0x248] sm:%s560]
                  %734 = vst [vmem:[%s568 + $0x148] sm:%s560] %v733
                  %v735 = vld [vmem:[%s567 + $0x24c] sm:%s560]
                  %736 = vst [vmem:[%s568 + $0x14c] sm:%s560] %v735
                  %v737 = vld [vmem:[%s567 + $0x250] sm:%s560]
                  %738 = vst [vmem:[%s568 + $0x150] sm:%s560] %v737
                  %v739 = vld [vmem:[%s567 + $0x254] sm:%s560]
                  %740 = vst [vmem:[%s568 + $0x154] sm:%s560] %v739
                  %v741 = vld [vmem:[%s567 + $0x258] sm:%s560]
                  %742 = vst [vmem:[%s568 + $0x158] sm:%s560] %v741
                  %v743 = vld [vmem:[%s567 + $0x25c] sm:%s560]
                  %744 = vst [vmem:[%s568 + $0x15c] sm:%s560] %v743
                  %v745 = vld [vmem:[%s567 + $0x260] sm:%s560]
                  %746 = vst [vmem:[%s568 + $0x160] sm:%s560] %v745
                  %v747 = vld [vmem:[%s567 + $0x264] sm:%s560]
                  %748 = vst [vmem:[%s568 + $0x164] sm:%s560] %v747
                  %v749 = vld [vmem:[%s567 + $0x268] sm:%s560]
                  %750 = vst [vmem:[%s568 + $0x168] sm:%s560] %v749
                  %v751 = vld [vmem:[%s567 + $0x26c] sm:%s560]
                  %752 = vst [vmem:[%s568 + $0x16c] sm:%s560] %v751
                  %v753 = vld [vmem:[%s567 + $0x270] sm:%s560]
                  %754 = vst [vmem:[%s568 + $0x170] sm:%s560] %v753
                  %v755 = vld [vmem:[%s567 + $0x274] sm:%s560]
                  %756 = vst [vmem:[%s568 + $0x174] sm:%s560] %v755
                  %v757 = vld [vmem:[%s567 + $0x278] sm:%s560]
                  %758 = vst [vmem:[%s568 + $0x178] sm:%s560] %v757
                  %v759 = vld [vmem:[%s567 + $0x27c] sm:%s560]
                  %760 = vst [vmem:[%s568 + $0x17c] sm:%s560] %v759
                  %v761 = vld [vmem:[%s567 + $0x280] sm:%s560]
                  %762 = vst [vmem:[%s568 + $0x180] sm:%s560] %v761
                  %v763 = vld [vmem:[%s567 + $0x284] sm:%s560]
                  %764 = vst [vmem:[%s568 + $0x184] sm:%s560] %v763
                  %v765 = vld [vmem:[%s567 + $0x288] sm:%s560]
                  %766 = vst [vmem:[%s568 + $0x188] sm:%s560] %v765
                  %v767 = vld [vmem:[%s567 + $0x28c] sm:%s560]
                  %768 = vst [vmem:[%s568 + $0x18c] sm:%s560] %v767
                  %v769 = vld [vmem:[%s567 + $0x290] sm:%s560]
                  %770 = vst [vmem:[%s568 + $0x190] sm:%s560] %v769
                  %v771 = vld [vmem:[%s567 + $0x294] sm:%s560]
                  %772 = vst [vmem:[%s568 + $0x194] sm:%s560] %v771
                  %v773 = vld [vmem:[%s567 + $0x298] sm:%s560]
                  %774 = vst [vmem:[%s568 + $0x198] sm:%s560] %v773
                  %v775 = vld [vmem:[%s567 + $0x29c] sm:%s560]
                  %776 = vst [vmem:[%s568 + $0x19c] sm:%s560] %v775
                  %v777 = vld [vmem:[%s567 + $0x2a0] sm:%s560]
                  %778 = vst [vmem:[%s568 + $0x1a0] sm:%s560] %v777
                  %v779 = vld [vmem:[%s567 + $0x2a4] sm:%s560]
                  %780 = vst [vmem:[%s568 + $0x1a4] sm:%s560] %v779
                  %v781 = vld [vmem:[%s567 + $0x2a8] sm:%s560]
                  %782 = vst [vmem:[%s568 + $0x1a8] sm:%s560] %v781
                  %v783 = vld [vmem:[%s567 + $0x2ac] sm:%s560]
                  %784 = vst [vmem:[%s568 + $0x1ac] sm:%s560] %v783
                  %v785 = vld [vmem:[%s567 + $0x2b0] sm:%s560]
                  %786 = vst [vmem:[%s568 + $0x1b0] sm:%s560] %v785
                  %v787 = vld [vmem:[%s567 + $0x2b4] sm:%s560]
                  %788 = vst [vmem:[%s568 + $0x1b4] sm:%s560] %v787
                  %v789 = vld [vmem:[%s567 + $0x2b8] sm:%s560]
                  %790 = vst [vmem:[%s568 + $0x1b8] sm:%s560] %v789
                  %v791 = vld [vmem:[%s567 + $0x2bc] sm:%s560]
                  %792 = vst [vmem:[%s568 + $0x1bc] sm:%s560] %v791
                  %v793 = vld [vmem:[%s567 + $0x2c0] sm:%s560]
                  %794 = vst [vmem:[%s568 + $0x1c0] sm:%s560] %v793
                  %v795 = vld [vmem:[%s567 + $0x2c4] sm:%s560]
                  %796 = vst [vmem:[%s568 + $0x1c4] sm:%s560] %v795
                  %v797 = vld [vmem:[%s567 + $0x2c8] sm:%s560]
                  %798 = vst [vmem:[%s568 + $0x1c8] sm:%s560] %v797
                  %v799 = vld [vmem:[%s567 + $0x2cc] sm:%s560]
                  %800 = vst [vmem:[%s568 + $0x1cc] sm:%s560] %v799
                  %v801 = vld [vmem:[%s567 + $0x2d0] sm:%s560]
                  %802 = vst [vmem:[%s568 + $0x1d0] sm:%s560] %v801
                  %v803 = vld [vmem:[%s567 + $0x2d4] sm:%s560]
                  %804 = vst [vmem:[%s568 + $0x1d4] sm:%s560] %v803
                  %v805 = vld [vmem:[%s567 + $0x2d8] sm:%s560]
                  %806 = vst [vmem:[%s568 + $0x1d8] sm:%s560] %v805
                  %v807 = vld [vmem:[%s567 + $0x2dc] sm:%s560]
                  %808 = vst [vmem:[%s568 + $0x1dc] sm:%s560] %v807
                  %v809 = vld [vmem:[%s567 + $0x2e0] sm:%s560]
                  %810 = vst [vmem:[%s568 + $0x1e0] sm:%s560] %v809
                  %v811 = vld [vmem:[%s567 + $0x2e4] sm:%s560]
                  %812 = vst [vmem:[%s568 + $0x1e4] sm:%s560] %v811
                  %v813 = vld [vmem:[%s567 + $0x2e8] sm:%s560]
                  %814 = vst [vmem:[%s568 + $0x1e8] sm:%s560] %v813
                  %v815 = vld [vmem:[%s567 + $0x2ec] sm:%s560]
                  %816 = vst [vmem:[%s568 + $0x1ec] sm:%s560] %v815
                  %v817 = vld [vmem:[%s567 + $0x2f0] sm:%s560]
                  %818 = vst [vmem:[%s568 + $0x1f0] sm:%s560] %v817
                  %v819 = vld [vmem:[%s567 + $0x2f4] sm:%s560]
                  %820 = vst [vmem:[%s568 + $0x1f4] sm:%s560] %v819
                  %v821 = vld [vmem:[%s567 + $0x2f8] sm:%s560]
                  %822 = vst [vmem:[%s568 + $0x1f8] sm:%s560] %v821
                  %v823 = vld [vmem:[%s567 + $0x2fc] sm:%s560]
                  %824 = vst [vmem:[%s568 + $0x1fc] sm:%s560] %v823
                $region75: #{fwd.1} parent=62 // loop_footer
                  %s566 = sadd.s32 1, %s562
                $region76: #{fwd.1} parent=62 // loop_footer_branch
                  %561 = sbr.rel target = $region72
                $region77: #{fwd.1} parent=62 // loop_exit
                  _
              $region63: #{fwd.1} parent=47 // pred_fallthru
                _
            $region48: #{fwd.1} parent=43 // pred_fallthru
              _
            // Predicated region
            $region49: #{fwd.1} parent=43 // pred_check
              _
            $region50: #{fwd.1} parent=43 // pred_check_branch
              %282 = sbr.rel (0) target = $region52
            $region51: #{fwd.1} parent=43 // pred_region
              %s284 = ssub.s32 16, 1
              loop: start=0, step=1, limit=1
              $region53: #{fwd.1} parent=51 // loop_pre_header
                _
              $region54: #{fwd.1} parent=51 // loop_header
                %s286 = sphi 0, %s290
                %p287 = scmp.ge.s32.totalorder %s286, 1
                %s291 = sphi %s276, %s276
                %s292 = sphi %s273, %s273
              $region55: #{fwd.1} parent=51 // loop_header_branch
                %289 = sbr.rel (%p287) target = $region59
              $region56: #{fwd.1} parent=51 // loop_body
                %v293 = vld [vmem:[%s291] sm:%s284]
                %294 = vst [vmem:[%s292] sm:%s284] %v293
                %v295 = vld [vmem:[%s291 + $0x4] sm:%s284]
                %296 = vst [vmem:[%s292 + $0x4] sm:%s284] %v295
                %v297 = vld [vmem:[%s291 + $0x8] sm:%s284]
                %298 = vst [vmem:[%s292 + $0x8] sm:%s284] %v297
                %v299 = vld [vmem:[%s291 + $0xc] sm:%s284]
                %300 = vst [vmem:[%s292 + $0xc] sm:%s284] %v299
                %v301 = vld [vmem:[%s291 + $0x10] sm:%s284]
                %302 = vst [vmem:[%s292 + $0x10] sm:%s284] %v301
                %v303 = vld [vmem:[%s291 + $0x14] sm:%s284]
                %304 = vst [vmem:[%s292 + $0x14] sm:%s284] %v303
                %v305 = vld [vmem:[%s291 + $0x18] sm:%s284]
                %306 = vst [vmem:[%s292 + $0x18] sm:%s284] %v305
                %v307 = vld [vmem:[%s291 + $0x1c] sm:%s284]
                %308 = vst [vmem:[%s292 + $0x1c] sm:%s284] %v307
                %v309 = vld [vmem:[%s291 + $0x20] sm:%s284]
                %310 = vst [vmem:[%s292 + $0x20] sm:%s284] %v309
                %v311 = vld [vmem:[%s291 + $0x24] sm:%s284]
                %312 = vst [vmem:[%s292 + $0x24] sm:%s284] %v311
                %v313 = vld [vmem:[%s291 + $0x28] sm:%s284]
                %314 = vst [vmem:[%s292 + $0x28] sm:%s284] %v313
                %v315 = vld [vmem:[%s291 + $0x2c] sm:%s284]
                %316 = vst [vmem:[%s292 + $0x2c] sm:%s284] %v315
                %v317 = vld [vmem:[%s291 + $0x30] sm:%s284]
                %318 = vst [vmem:[%s292 + $0x30] sm:%s284] %v317
                %v319 = vld [vmem:[%s291 + $0x34] sm:%s284]
                %320 = vst [vmem:[%s292 + $0x34] sm:%s284] %v319
                %v321 = vld [vmem:[%s291 + $0x38] sm:%s284]
                %322 = vst [vmem:[%s292 + $0x38] sm:%s284] %v321
                %v323 = vld [vmem:[%s291 + $0x3c] sm:%s284]
                %324 = vst [vmem:[%s292 + $0x3c] sm:%s284] %v323
                %v325 = vld [vmem:[%s291 + $0x40] sm:%s284]
                %326 = vst [vmem:[%s292 + $0x40] sm:%s284] %v325
                %v327 = vld [vmem:[%s291 + $0x44] sm:%s284]
                %328 = vst [vmem:[%s292 + $0x44] sm:%s284] %v327
                %v329 = vld [vmem:[%s291 + $0x48] sm:%s284]
                %330 = vst [vmem:[%s292 + $0x48] sm:%s284] %v329
                %v331 = vld [vmem:[%s291 + $0x4c] sm:%s284]
                %332 = vst [vmem:[%s292 + $0x4c] sm:%s284] %v331
                %v333 = vld [vmem:[%s291 + $0x50] sm:%s284]
                %334 = vst [vmem:[%s292 + $0x50] sm:%s284] %v333
                %v335 = vld [vmem:[%s291 + $0x54] sm:%s284]
                %336 = vst [vmem:[%s292 + $0x54] sm:%s284] %v335
                %v337 = vld [vmem:[%s291 + $0x58] sm:%s284]
                %338 = vst [vmem:[%s292 + $0x58] sm:%s284] %v337
                %v339 = vld [vmem:[%s291 + $0x5c] sm:%s284]
                %340 = vst [vmem:[%s292 + $0x5c] sm:%s284] %v339
                %v341 = vld [vmem:[%s291 + $0x60] sm:%s284]
                %342 = vst [vmem:[%s292 + $0x60] sm:%s284] %v341
                %v343 = vld [vmem:[%s291 + $0x64] sm:%s284]
                %344 = vst [vmem:[%s292 + $0x64] sm:%s284] %v343
                %v345 = vld [vmem:[%s291 + $0x68] sm:%s284]
                %346 = vst [vmem:[%s292 + $0x68] sm:%s284] %v345
                %v347 = vld [vmem:[%s291 + $0x6c] sm:%s284]
                %348 = vst [vmem:[%s292 + $0x6c] sm:%s284] %v347
                %v349 = vld [vmem:[%s291 + $0x70] sm:%s284]
                %350 = vst [vmem:[%s292 + $0x70] sm:%s284] %v349
                %v351 = vld [vmem:[%s291 + $0x74] sm:%s284]
                %352 = vst [vmem:[%s292 + $0x74] sm:%s284] %v351
                %v353 = vld [vmem:[%s291 + $0x78] sm:%s284]
                %354 = vst [vmem:[%s292 + $0x78] sm:%s284] %v353
                %v355 = vld [vmem:[%s291 + $0x7c] sm:%s284]
                %356 = vst [vmem:[%s292 + $0x7c] sm:%s284] %v355
                %v357 = vld [vmem:[%s291 + $0x80] sm:%s284]
                %358 = vst [vmem:[%s292 + $0x80] sm:%s284] %v357
                %v359 = vld [vmem:[%s291 + $0x84] sm:%s284]
                %360 = vst [vmem:[%s292 + $0x84] sm:%s284] %v359
                %v361 = vld [vmem:[%s291 + $0x88] sm:%s284]
                %362 = vst [vmem:[%s292 + $0x88] sm:%s284] %v361
                %v363 = vld [vmem:[%s291 + $0x8c] sm:%s284]
                %364 = vst [vmem:[%s292 + $0x8c] sm:%s284] %v363
                %v365 = vld [vmem:[%s291 + $0x90] sm:%s284]
                %366 = vst [vmem:[%s292 + $0x90] sm:%s284] %v365
                %v367 = vld [vmem:[%s291 + $0x94] sm:%s284]
                %368 = vst [vmem:[%s292 + $0x94] sm:%s284] %v367
                %v369 = vld [vmem:[%s291 + $0x98] sm:%s284]
                %370 = vst [vmem:[%s292 + $0x98] sm:%s284] %v369
                %v371 = vld [vmem:[%s291 + $0x9c] sm:%s284]
                %372 = vst [vmem:[%s292 + $0x9c] sm:%s284] %v371
                %v373 = vld [vmem:[%s291 + $0xa0] sm:%s284]
                %374 = vst [vmem:[%s292 + $0xa0] sm:%s284] %v373
                %v375 = vld [vmem:[%s291 + $0xa4] sm:%s284]
                %376 = vst [vmem:[%s292 + $0xa4] sm:%s284] %v375
                %v377 = vld [vmem:[%s291 + $0xa8] sm:%s284]
                %378 = vst [vmem:[%s292 + $0xa8] sm:%s284] %v377
                %v379 = vld [vmem:[%s291 + $0xac] sm:%s284]
                %380 = vst [vmem:[%s292 + $0xac] sm:%s284] %v379
                %v381 = vld [vmem:[%s291 + $0xb0] sm:%s284]
                %382 = vst [vmem:[%s292 + $0xb0] sm:%s284] %v381
                %v383 = vld [vmem:[%s291 + $0xb4] sm:%s284]
                %384 = vst [vmem:[%s292 + $0xb4] sm:%s284] %v383
                %v385 = vld [vmem:[%s291 + $0xb8] sm:%s284]
                %386 = vst [vmem:[%s292 + $0xb8] sm:%s284] %v385
                %v387 = vld [vmem:[%s291 + $0xbc] sm:%s284]
                %388 = vst [vmem:[%s292 + $0xbc] sm:%s284] %v387
                %v389 = vld [vmem:[%s291 + $0xc0] sm:%s284]
                %390 = vst [vmem:[%s292 + $0xc0] sm:%s284] %v389
                %v391 = vld [vmem:[%s291 + $0xc4] sm:%s284]
                %392 = vst [vmem:[%s292 + $0xc4] sm:%s284] %v391
                %v393 = vld [vmem:[%s291 + $0xc8] sm:%s284]
                %394 = vst [vmem:[%s292 + $0xc8] sm:%s284] %v393
                %v395 = vld [vmem:[%s291 + $0xcc] sm:%s284]
                %396 = vst [vmem:[%s292 + $0xcc] sm:%s284] %v395
                %v397 = vld [vmem:[%s291 + $0xd0] sm:%s284]
                %398 = vst [vmem:[%s292 + $0xd0] sm:%s284] %v397
                %v399 = vld [vmem:[%s291 + $0xd4] sm:%s284]
                %400 = vst [vmem:[%s292 + $0xd4] sm:%s284] %v399
                %v401 = vld [vmem:[%s291 + $0xd8] sm:%s284]
                %402 = vst [vmem:[%s292 + $0xd8] sm:%s284] %v401
                %v403 = vld [vmem:[%s291 + $0xdc] sm:%s284]
                %404 = vst [vmem:[%s292 + $0xdc] sm:%s284] %v403
                %v405 = vld [vmem:[%s291 + $0xe0] sm:%s284]
                %406 = vst [vmem:[%s292 + $0xe0] sm:%s284] %v405
                %v407 = vld [vmem:[%s291 + $0xe4] sm:%s284]
                %408 = vst [vmem:[%s292 + $0xe4] sm:%s284] %v407
                %v409 = vld [vmem:[%s291 + $0xe8] sm:%s284]
                %410 = vst [vmem:[%s292 + $0xe8] sm:%s284] %v409
                %v411 = vld [vmem:[%s291 + $0xec] sm:%s284]
                %412 = vst [vmem:[%s292 + $0xec] sm:%s284] %v411
                %v413 = vld [vmem:[%s291 + $0xf0] sm:%s284]
                %414 = vst [vmem:[%s292 + $0xf0] sm:%s284] %v413
                %v415 = vld [vmem:[%s291 + $0xf4] sm:%s284]
                %416 = vst [vmem:[%s292 + $0xf4] sm:%s284] %v415
                %v417 = vld [vmem:[%s291 + $0xf8] sm:%s284]
                %418 = vst [vmem:[%s292 + $0xf8] sm:%s284] %v417
                %v419 = vld [vmem:[%s291 + $0xfc] sm:%s284]
                %420 = vst [vmem:[%s292 + $0xfc] sm:%s284] %v419
                %v421 = vld [vmem:[%s291 + $0x200] sm:%s284]
                %422 = vst [vmem:[%s292 + $0x100] sm:%s284] %v421
                %v423 = vld [vmem:[%s291 + $0x204] sm:%s284]
                %424 = vst [vmem:[%s292 + $0x104] sm:%s284] %v423
                %v425 = vld [vmem:[%s291 + $0x208] sm:%s284]
                %426 = vst [vmem:[%s292 + $0x108] sm:%s284] %v425
                %v427 = vld [vmem:[%s291 + $0x20c] sm:%s284]
                %428 = vst [vmem:[%s292 + $0x10c] sm:%s284] %v427
                %v429 = vld [vmem:[%s291 + $0x210] sm:%s284]
                %430 = vst [vmem:[%s292 + $0x110] sm:%s284] %v429
                %v431 = vld [vmem:[%s291 + $0x214] sm:%s284]
                %432 = vst [vmem:[%s292 + $0x114] sm:%s284] %v431
                %v433 = vld [vmem:[%s291 + $0x218] sm:%s284]
                %434 = vst [vmem:[%s292 + $0x118] sm:%s284] %v433
                %v435 = vld [vmem:[%s291 + $0x21c] sm:%s284]
                %436 = vst [vmem:[%s292 + $0x11c] sm:%s284] %v435
                %v437 = vld [vmem:[%s291 + $0x220] sm:%s284]
                %438 = vst [vmem:[%s292 + $0x120] sm:%s284] %v437
                %v439 = vld [vmem:[%s291 + $0x224] sm:%s284]
                %440 = vst [vmem:[%s292 + $0x124] sm:%s284] %v439
                %v441 = vld [vmem:[%s291 + $0x228] sm:%s284]
                %442 = vst [vmem:[%s292 + $0x128] sm:%s284] %v441
                %v443 = vld [vmem:[%s291 + $0x22c] sm:%s284]
                %444 = vst [vmem:[%s292 + $0x12c] sm:%s284] %v443
                %v445 = vld [vmem:[%s291 + $0x230] sm:%s284]
                %446 = vst [vmem:[%s292 + $0x130] sm:%s284] %v445
                %v447 = vld [vmem:[%s291 + $0x234] sm:%s284]
                %448 = vst [vmem:[%s292 + $0x134] sm:%s284] %v447
                %v449 = vld [vmem:[%s291 + $0x238] sm:%s284]
                %450 = vst [vmem:[%s292 + $0x138] sm:%s284] %v449
                %v451 = vld [vmem:[%s291 + $0x23c] sm:%s284]
                %452 = vst [vmem:[%s292 + $0x13c] sm:%s284] %v451
                %v453 = vld [vmem:[%s291 + $0x240] sm:%s284]
                %454 = vst [vmem:[%s292 + $0x140] sm:%s284] %v453
                %v455 = vld [vmem:[%s291 + $0x244] sm:%s284]
                %456 = vst [vmem:[%s292 + $0x144] sm:%s284] %v455
                %v457 = vld [vmem:[%s291 + $0x248] sm:%s284]
                %458 = vst [vmem:[%s292 + $0x148] sm:%s284] %v457
                %v459 = vld [vmem:[%s291 + $0x24c] sm:%s284]
                %460 = vst [vmem:[%s292 + $0x14c] sm:%s284] %v459
                %v461 = vld [vmem:[%s291 + $0x250] sm:%s284]
                %462 = vst [vmem:[%s292 + $0x150] sm:%s284] %v461
                %v463 = vld [vmem:[%s291 + $0x254] sm:%s284]
                %464 = vst [vmem:[%s292 + $0x154] sm:%s284] %v463
                %v465 = vld [vmem:[%s291 + $0x258] sm:%s284]
                %466 = vst [vmem:[%s292 + $0x158] sm:%s284] %v465
                %v467 = vld [vmem:[%s291 + $0x25c] sm:%s284]
                %468 = vst [vmem:[%s292 + $0x15c] sm:%s284] %v467
                %v469 = vld [vmem:[%s291 + $0x260] sm:%s284]
                %470 = vst [vmem:[%s292 + $0x160] sm:%s284] %v469
                %v471 = vld [vmem:[%s291 + $0x264] sm:%s284]
                %472 = vst [vmem:[%s292 + $0x164] sm:%s284] %v471
                %v473 = vld [vmem:[%s291 + $0x268] sm:%s284]
                %474 = vst [vmem:[%s292 + $0x168] sm:%s284] %v473
                %v475 = vld [vmem:[%s291 + $0x26c] sm:%s284]
                %476 = vst [vmem:[%s292 + $0x16c] sm:%s284] %v475
                %v477 = vld [vmem:[%s291 + $0x270] sm:%s284]
                %478 = vst [vmem:[%s292 + $0x170] sm:%s284] %v477
                %v479 = vld [vmem:[%s291 + $0x274] sm:%s284]
                %480 = vst [vmem:[%s292 + $0x174] sm:%s284] %v479
                %v481 = vld [vmem:[%s291 + $0x278] sm:%s284]
                %482 = vst [vmem:[%s292 + $0x178] sm:%s284] %v481
                %v483 = vld [vmem:[%s291 + $0x27c] sm:%s284]
                %484 = vst [vmem:[%s292 + $0x17c] sm:%s284] %v483
                %v485 = vld [vmem:[%s291 + $0x280] sm:%s284]
                %486 = vst [vmem:[%s292 + $0x180] sm:%s284] %v485
                %v487 = vld [vmem:[%s291 + $0x284] sm:%s284]
                %488 = vst [vmem:[%s292 + $0x184] sm:%s284] %v487
                %v489 = vld [vmem:[%s291 + $0x288] sm:%s284]
                %490 = vst [vmem:[%s292 + $0x188] sm:%s284] %v489
                %v491 = vld [vmem:[%s291 + $0x28c] sm:%s284]
                %492 = vst [vmem:[%s292 + $0x18c] sm:%s284] %v491
                %v493 = vld [vmem:[%s291 + $0x290] sm:%s284]
                %494 = vst [vmem:[%s292 + $0x190] sm:%s284] %v493
                %v495 = vld [vmem:[%s291 + $0x294] sm:%s284]
                %496 = vst [vmem:[%s292 + $0x194] sm:%s284] %v495
                %v497 = vld [vmem:[%s291 + $0x298] sm:%s284]
                %498 = vst [vmem:[%s292 + $0x198] sm:%s284] %v497
                %v499 = vld [vmem:[%s291 + $0x29c] sm:%s284]
                %500 = vst [vmem:[%s292 + $0x19c] sm:%s284] %v499
                %v501 = vld [vmem:[%s291 + $0x2a0] sm:%s284]
                %502 = vst [vmem:[%s292 + $0x1a0] sm:%s284] %v501
                %v503 = vld [vmem:[%s291 + $0x2a4] sm:%s284]
                %504 = vst [vmem:[%s292 + $0x1a4] sm:%s284] %v503
                %v505 = vld [vmem:[%s291 + $0x2a8] sm:%s284]
                %506 = vst [vmem:[%s292 + $0x1a8] sm:%s284] %v505
                %v507 = vld [vmem:[%s291 + $0x2ac] sm:%s284]
                %508 = vst [vmem:[%s292 + $0x1ac] sm:%s284] %v507
                %v509 = vld [vmem:[%s291 + $0x2b0] sm:%s284]
                %510 = vst [vmem:[%s292 + $0x1b0] sm:%s284] %v509
                %v511 = vld [vmem:[%s291 + $0x2b4] sm:%s284]
                %512 = vst [vmem:[%s292 + $0x1b4] sm:%s284] %v511
                %v513 = vld [vmem:[%s291 + $0x2b8] sm:%s284]
                %514 = vst [vmem:[%s292 + $0x1b8] sm:%s284] %v513
                %v515 = vld [vmem:[%s291 + $0x2bc] sm:%s284]
                %516 = vst [vmem:[%s292 + $0x1bc] sm:%s284] %v515
                %v517 = vld [vmem:[%s291 + $0x2c0] sm:%s284]
                %518 = vst [vmem:[%s292 + $0x1c0] sm:%s284] %v517
                %v519 = vld [vmem:[%s291 + $0x2c4] sm:%s284]
                %520 = vst [vmem:[%s292 + $0x1c4] sm:%s284] %v519
                %v521 = vld [vmem:[%s291 + $0x2c8] sm:%s284]
                %522 = vst [vmem:[%s292 + $0x1c8] sm:%s284] %v521
                %v523 = vld [vmem:[%s291 + $0x2cc] sm:%s284]
                %524 = vst [vmem:[%s292 + $0x1cc] sm:%s284] %v523
                %v525 = vld [vmem:[%s291 + $0x2d0] sm:%s284]
                %526 = vst [vmem:[%s292 + $0x1d0] sm:%s284] %v525
                %v527 = vld [vmem:[%s291 + $0x2d4] sm:%s284]
                %528 = vst [vmem:[%s292 + $0x1d4] sm:%s284] %v527
                %v529 = vld [vmem:[%s291 + $0x2d8] sm:%s284]
                %530 = vst [vmem:[%s292 + $0x1d8] sm:%s284] %v529
                %v531 = vld [vmem:[%s291 + $0x2dc] sm:%s284]
                %532 = vst [vmem:[%s292 + $0x1dc] sm:%s284] %v531
                %v533 = vld [vmem:[%s291 + $0x2e0] sm:%s284]
                %534 = vst [vmem:[%s292 + $0x1e0] sm:%s284] %v533
                %v535 = vld [vmem:[%s291 + $0x2e4] sm:%s284]
                %536 = vst [vmem:[%s292 + $0x1e4] sm:%s284] %v535
                %v537 = vld [vmem:[%s291 + $0x2e8] sm:%s284]
                %538 = vst [vmem:[%s292 + $0x1e8] sm:%s284] %v537
                %v539 = vld [vmem:[%s291 + $0x2ec] sm:%s284]
                %540 = vst [vmem:[%s292 + $0x1ec] sm:%s284] %v539
                %v541 = vld [vmem:[%s291 + $0x2f0] sm:%s284]
                %542 = vst [vmem:[%s292 + $0x1f0] sm:%s284] %v541
                %v543 = vld [vmem:[%s291 + $0x2f4] sm:%s284]
                %544 = vst [vmem:[%s292 + $0x1f4] sm:%s284] %v543
                %v545 = vld [vmem:[%s291 + $0x2f8] sm:%s284]
                %546 = vst [vmem:[%s292 + $0x1f8] sm:%s284] %v545
                %v547 = vld [vmem:[%s291 + $0x2fc] sm:%s284]
                %548 = vst [vmem:[%s292 + $0x1fc] sm:%s284] %v547
              $region57: #{fwd.1} parent=51 // loop_footer
                %s290 = sadd.s32 1, %s286
              $region58: #{fwd.1} parent=51 // loop_footer_branch
                %285 = sbr.rel target = $region54
              $region59: #{fwd.1} parent=51 // loop_exit
                _
            $region52: #{fwd.1} parent=43 // pred_fallthru
              _
          $region44: #{fwd.1} parent=39 // pred_fallthru
            _
          %825 = vnop
        $region40: #{fwd.1} parent=35 // pred_fallthru
          _
      $region36: #{fwd.1} parent=5 // pred_fallthru
        _
      %p826 = scmp.le.s32.totalorder 1, %s18
      %p827 = scmp.lt.s32.totalorder %s18, 3
      %p828 = pnand %p826, %p827
      %p829 = pneg %p828
      // Predicated region
      $region78: #{fwd.1} parent=5 // pred_check
        _
      $region79: #{fwd.1} parent=5 // pred_check_branch
        %831 = sbr.rel (%p828) target = $region81
      $region80: #{fwd.1} parent=5 // pred_region
        %s832 = ssub.s32 %s18, 1
        %s833 = sand.u32 %s31, 1
        %s834 = sand.u32 %s31, 1
        %s835 = smul.addr %s834, 512
        %s836 = scalar_lea.vmem [#allocation3], %s835
        // Predicated region
        $region82: #{fwd.1} parent=80 // pred_check
          %p837 = pneg %p44
        $region83: #{fwd.1} parent=80 // pred_check_branch
          %839 = sbr.rel (%p837) target = $region85
        $region84: #{fwd.1} parent=80 // pred_region
          _
        $region85: #{fwd.1} parent=80 // pred_fallthru
          _
        %s840 = sand.u32 %s31, 1
        %s841 = sand.u32 %s31, 1
        %s842 = smul.addr %s841, 512
        %s843 = scalar_lea.vmem [#allocation3], %s842
        %p844 = pneg %p44
        %p845 = pneg %p41
        %p846 = pneg %p65
        %p847 = pneg %p62
        %p848 = pneg %p86
        %p849 = pneg %p83
        %p850 = pneg %p107
        %p851 = pneg %p104
        %p852 = pneg %p128
        %p853 = pneg %p125
        %p854 = pneg %p149
        %p855 = pneg %p146
        %p856 = pneg %p170
        %p857 = pneg %p167
        %p858 = pneg %p191
        %p859 = pneg %p188
        %p860 = pneg %p212
        %p861 = pneg %p209
        %p862 = pneg %p233
        %p863 = pneg %p230
        %s864 = smul.u32 64, %s23
        %p866 = scmp.eq.s32.totalorder %s23, 0
        // Predicated region
        $region86: #{fwd.1} parent=80 // pred_check
          %p867 = pneg %p866
        $region87: #{fwd.1} parent=80 // pred_check_branch
          %869 = sbr.rel (%p867) target = $region89
        $region88: #{fwd.1} parent=80 // pred_region
          %vm870 = vcmask 123904
          %871 = vst.msk [vmem:[#allocation2] sm:$0x3] %vm870, 0.0
        $region89: #{fwd.1} parent=80 // pred_fallthru
          _
        %v872 = vld [vmem:[%s836] sm:$0xf]
        %v873 = vld [vmem:[%s836 + $0x4] sm:$0xf]
        %v874 = vld [vmem:[%s836 + $0x8] sm:$0xf]
        %v875 = vld [vmem:[%s836 + $0xc] sm:$0xf]
        %v876 = vld [vmem:[%s836 + $0x10] sm:$0xf]
        %v877 = vld [vmem:[%s836 + $0x14] sm:$0xf]
        %v878 = vld [vmem:[%s836 + $0x18] sm:$0xf]
        %v879 = vld [vmem:[%s836 + $0x1c] sm:$0xf]
        %v880 = vld [vmem:[%s836 + $0x20] sm:$0xf]
        %v881 = vld [vmem:[%s836 + $0x24] sm:$0xf]
        %v882 = vld [vmem:[%s836 + $0x28] sm:$0xf]
        %v883 = vld [vmem:[%s836 + $0x2c] sm:$0xf]
        %v884 = vld [vmem:[%s836 + $0x30] sm:$0xf]
        %v885 = vld [vmem:[%s836 + $0x34] sm:$0xf]
        %v886 = vld [vmem:[%s836 + $0x38] sm:$0xf]
        %v887 = vld [vmem:[%s836 + $0x3c] sm:$0xf]
        %v888 = vld [vmem:[%s836 + $0x40] sm:$0xf]
        %v889 = vld [vmem:[%s836 + $0x44] sm:$0xf]
        %v890 = vld [vmem:[%s836 + $0x48] sm:$0xf]
        %v891 = vld [vmem:[%s836 + $0x4c] sm:$0xf]
        %v892 = vld [vmem:[%s836 + $0x50] sm:$0xf]
        %v893 = vld [vmem:[%s836 + $0x54] sm:$0xf]
        %v894 = vld [vmem:[%s836 + $0x58] sm:$0xf]
        %v895 = vld [vmem:[%s836 + $0x5c] sm:$0xf]
        %v896 = vld [vmem:[%s836 + $0x60] sm:$0xf]
        %v897 = vld [vmem:[%s836 + $0x64] sm:$0xf]
        %v898 = vld [vmem:[%s836 + $0x68] sm:$0xf]
        %v899 = vld [vmem:[%s836 + $0x6c] sm:$0xf]
        %v900 = vld [vmem:[%s836 + $0x70] sm:$0xf]
        %v901 = vld [vmem:[%s836 + $0x74] sm:$0xf]
        %v902 = vld [vmem:[%s836 + $0x78] sm:$0xf]
        %v903 = vld [vmem:[%s836 + $0x7c] sm:$0xf]
        %v904 = vld [vmem:[%s836 + $0x80] sm:$0xf]
        %v905 = vld [vmem:[%s836 + $0x84] sm:$0xf]
        %v906 = vld [vmem:[%s836 + $0x88] sm:$0xf]
        %v907 = vld [vmem:[%s836 + $0x8c] sm:$0xf]
        %v908 = vld [vmem:[%s836 + $0x90] sm:$0xf]
        %v909 = vld [vmem:[%s836 + $0x94] sm:$0xf]
        %v910 = vld [vmem:[%s836 + $0x98] sm:$0xf]
        %v911 = vld [vmem:[%s836 + $0x9c] sm:$0xf]
        %v912 = vld [vmem:[%s836 + $0xa0] sm:$0xf]
        %v913 = vld [vmem:[%s836 + $0xa4] sm:$0xf]
        %v914 = vld [vmem:[%s836 + $0xa8] sm:$0xf]
        %v915 = vld [vmem:[%s836 + $0xac] sm:$0xf]
        %v916 = vld [vmem:[%s836 + $0xb0] sm:$0xf]
        %v917 = vld [vmem:[%s836 + $0xb4] sm:$0xf]
        %v918 = vld [vmem:[%s836 + $0xb8] sm:$0xf]
        %v919 = vld [vmem:[%s836 + $0xbc] sm:$0xf]
        %v920 = vld [vmem:[%s836 + $0xc0] sm:$0xf]
        %v921 = vld [vmem:[%s836 + $0xc4] sm:$0xf]
        %v922 = vld [vmem:[%s836 + $0xc8] sm:$0xf]
        %v923 = vld [vmem:[%s836 + $0xcc] sm:$0xf]
        %v924 = vld [vmem:[%s836 + $0xd0] sm:$0xf]
        %v925 = vld [vmem:[%s836 + $0xd4] sm:$0xf]
        %v926 = vld [vmem:[%s836 + $0xd8] sm:$0xf]
        %v927 = vld [vmem:[%s836 + $0xdc] sm:$0xf]
        %v928 = vld [vmem:[%s836 + $0xe0] sm:$0xf]
        %v929 = vld [vmem:[%s836 + $0xe4] sm:$0xf]
        %v930 = vld [vmem:[%s836 + $0xe8] sm:$0xf]
        %v931 = vld [vmem:[%s836 + $0xec] sm:$0xf]
        %v932 = vld [vmem:[%s836 + $0xf0] sm:$0xf]
        %v933 = vld [vmem:[%s836 + $0xf4] sm:$0xf]
        %v934 = vld [vmem:[%s836 + $0xf8] sm:$0xf]
        %v935 = vld [vmem:[%s836 + $0xfc] sm:$0xf]
        %v936 = vld [vmem:[%s836 + $0x100] sm:$0xf]
        %v937 = vld [vmem:[%s836 + $0x104] sm:$0xf]
        %v938 = vld [vmem:[%s836 + $0x108] sm:$0xf]
        %v939 = vld [vmem:[%s836 + $0x10c] sm:$0xf]
        %v940 = vld [vmem:[%s836 + $0x110] sm:$0xf]
        %v941 = vld [vmem:[%s836 + $0x114] sm:$0xf]
        %v942 = vld [vmem:[%s836 + $0x118] sm:$0xf]
        %v943 = vld [vmem:[%s836 + $0x11c] sm:$0xf]
        %v944 = vld [vmem:[%s836 + $0x120] sm:$0xf]
        %v945 = vld [vmem:[%s836 + $0x124] sm:$0xf]
        %v946 = vld [vmem:[%s836 + $0x128] sm:$0xf]
        %v947 = vld [vmem:[%s836 + $0x12c] sm:$0xf]
        %v948 = vld [vmem:[%s836 + $0x130] sm:$0xf]
        %v949 = vld [vmem:[%s836 + $0x134] sm:$0xf]
        %v950 = vld [vmem:[%s836 + $0x138] sm:$0xf]
        %v951 = vld [vmem:[%s836 + $0x13c] sm:$0xf]
        %v952 = vld [vmem:[%s836 + $0x140] sm:$0xf]
        %v953 = vld [vmem:[%s836 + $0x144] sm:$0xf]
        %v954 = vld [vmem:[%s836 + $0x148] sm:$0xf]
        %v955 = vld [vmem:[%s836 + $0x14c] sm:$0xf]
        %v956 = vld [vmem:[%s836 + $0x150] sm:$0xf]
        %v957 = vld [vmem:[%s836 + $0x154] sm:$0xf]
        %v958 = vld [vmem:[%s836 + $0x158] sm:$0xf]
        %v959 = vld [vmem:[%s836 + $0x15c] sm:$0xf]
        %v960 = vld [vmem:[%s836 + $0x160] sm:$0xf]
        %v961 = vld [vmem:[%s836 + $0x164] sm:$0xf]
        %v962 = vld [vmem:[%s836 + $0x168] sm:$0xf]
        %v963 = vld [vmem:[%s836 + $0x16c] sm:$0xf]
        %v964 = vld [vmem:[%s836 + $0x170] sm:$0xf]
        %v965 = vld [vmem:[%s836 + $0x174] sm:$0xf]
        %v966 = vld [vmem:[%s836 + $0x178] sm:$0xf]
        %v967 = vld [vmem:[%s836 + $0x17c] sm:$0xf]
        %v968 = vld [vmem:[%s836 + $0x180] sm:$0xf]
        %v969 = vld [vmem:[%s836 + $0x184] sm:$0xf]
        %v970 = vld [vmem:[%s836 + $0x188] sm:$0xf]
        %v971 = vld [vmem:[%s836 + $0x18c] sm:$0xf]
        %v972 = vld [vmem:[%s836 + $0x190] sm:$0xf]
        %v973 = vld [vmem:[%s836 + $0x194] sm:$0xf]
        %v974 = vld [vmem:[%s836 + $0x198] sm:$0xf]
        %v975 = vld [vmem:[%s836 + $0x19c] sm:$0xf]
        %v976 = vld [vmem:[%s836 + $0x1a0] sm:$0xf]
        %v977 = vld [vmem:[%s836 + $0x1a4] sm:$0xf]
        %v978 = vld [vmem:[%s836 + $0x1a8] sm:$0xf]
        %v979 = vld [vmem:[%s836 + $0x1ac] sm:$0xf]
        %v980 = vld [vmem:[%s836 + $0x1b0] sm:$0xf]
        %v981 = vld [vmem:[%s836 + $0x1b4] sm:$0xf]
        %v982 = vld [vmem:[%s836 + $0x1b8] sm:$0xf]
        %v983 = vld [vmem:[%s836 + $0x1bc] sm:$0xf]
        %v984 = vld [vmem:[%s836 + $0x1c0] sm:$0xf]
        %v985 = vld [vmem:[%s836 + $0x1c4] sm:$0xf]
        %v986 = vld [vmem:[%s836 + $0x1c8] sm:$0xf]
        %v987 = vld [vmem:[%s836 + $0x1cc] sm:$0xf]
        %v988 = vld [vmem:[%s836 + $0x1d0] sm:$0xf]
        %v989 = vld [vmem:[%s836 + $0x1d4] sm:$0xf]
        %v990 = vld [vmem:[%s836 + $0x1d8] sm:$0xf]
        %v991 = vld [vmem:[%s836 + $0x1dc] sm:$0xf]
        %v992 = vld [vmem:[%s836 + $0x1e0] sm:$0xf]
        %v993 = vld [vmem:[%s836 + $0x1e4] sm:$0xf]
        %v994 = vld [vmem:[%s836 + $0x1e8] sm:$0xf]
        %v995 = vld [vmem:[%s836 + $0x1ec] sm:$0xf]
        %v996 = vld [vmem:[%s836 + $0x1f0] sm:$0xf]
        %v997 = vld [vmem:[%s836 + $0x1f4] sm:$0xf]
        %v998 = vld [vmem:[%s836 + $0x1f8] sm:$0xf]
        %v999 = vld [vmem:[%s836 + $0x1fc] sm:$0xf]
        %v1000 = vld [vmem:[%s1] sm:$0xf]
        %v1001 = vld [vmem:[%s1 + $0x4] sm:$0xf]
        %v1002 = vld [vmem:[%s1 + $0x8] sm:$0xf]
        %v1003 = vld [vmem:[%s1 + $0xc] sm:$0x3]
        %v1004 = vld [vmem:[%s2] sm:$0x1]
        %v1006 = vlaneseq
        %v1007 = vshrl.u32 %v1006, 7
        %v1008 = vsub.s32 0, %v1007
        %v1009 = vrot.slane %v1004, %v1008
        %v1139 = vunpack.c.l.b16 %v872
        %v1140 = vunpack.c.l.b16 %v873
        %v1141 = vunpack.c.l.b16 %v874
        %v1142 = vunpack.c.l.b16 %v875
        %v1143 = vunpack.c.l.b16 %v876
        %v1144 = vunpack.c.l.b16 %v877
        %v1145 = vunpack.c.l.b16 %v878
        %v1146 = vunpack.c.l.b16 %v879
        %v1147 = vunpack.c.l.b16 %v880
        %v1148 = vunpack.c.l.b16 %v881
        %v1149 = vunpack.c.l.b16 %v882
        %v1150 = vunpack.c.l.b16 %v883
        %v1151 = vunpack.c.l.b16 %v884
        %v1152 = vunpack.c.l.b16 %v885
        %v1153 = vunpack.c.l.b16 %v886
        %v1154 = vunpack.c.l.b16 %v887
        %v1155 = vunpack.c.l.b16 %v888
        %v1156 = vunpack.c.l.b16 %v889
        %v1157 = vunpack.c.l.b16 %v890
        %v1158 = vunpack.c.l.b16 %v891
        %v1159 = vunpack.c.l.b16 %v892
        %v1160 = vunpack.c.l.b16 %v893
        %v1161 = vunpack.c.l.b16 %v894
        %v1162 = vunpack.c.l.b16 %v895
        %v1163 = vunpack.c.l.b16 %v896
        %v1164 = vunpack.c.l.b16 %v897
        %v1165 = vunpack.c.l.b16 %v898
        %v1166 = vunpack.c.l.b16 %v899
        %v1167 = vunpack.c.l.b16 %v900
        %v1168 = vunpack.c.l.b16 %v901
        %v1169 = vunpack.c.l.b16 %v902
        %v1170 = vunpack.c.l.b16 %v903
        %v1171 = vunpack.c.l.b16 %v904
        %v1172 = vunpack.c.l.b16 %v905
        %v1173 = vunpack.c.l.b16 %v906
        %v1174 = vunpack.c.l.b16 %v907
        %v1175 = vunpack.c.l.b16 %v908
        %v1176 = vunpack.c.l.b16 %v909
        %v1177 = vunpack.c.l.b16 %v910
        %v1178 = vunpack.c.l.b16 %v911
        %v1179 = vunpack.c.l.b16 %v912
        %v1180 = vunpack.c.l.b16 %v913
        %v1181 = vunpack.c.l.b16 %v914
        %v1182 = vunpack.c.l.b16 %v915
        %v1183 = vunpack.c.l.b16 %v916
        %v1184 = vunpack.c.l.b16 %v917
        %v1185 = vunpack.c.l.b16 %v918
        %v1186 = vunpack.c.l.b16 %v919
        %v1187 = vunpack.c.l.b16 %v920
        %v1188 = vunpack.c.l.b16 %v921
        %v1189 = vunpack.c.l.b16 %v922
        %v1190 = vunpack.c.l.b16 %v923
        %v1191 = vunpack.c.l.b16 %v924
        %v1192 = vunpack.c.l.b16 %v925
        %v1193 = vunpack.c.l.b16 %v926
        %v1194 = vunpack.c.l.b16 %v927
        %v1195 = vunpack.c.l.b16 %v928
        %v1196 = vunpack.c.l.b16 %v929
        %v1197 = vunpack.c.l.b16 %v930
        %v1198 = vunpack.c.l.b16 %v931
        %v1199 = vunpack.c.l.b16 %v932
        %v1200 = vunpack.c.l.b16 %v933
        %v1201 = vunpack.c.l.b16 %v934
        %v1202 = vunpack.c.l.b16 %v935
        %v1203 = vunpack.c.l.b16 %v936
        %v1204 = vunpack.c.l.b16 %v937
        %v1205 = vunpack.c.l.b16 %v938
        %v1206 = vunpack.c.l.b16 %v939
        %v1207 = vunpack.c.l.b16 %v940
        %v1208 = vunpack.c.l.b16 %v941
        %v1209 = vunpack.c.l.b16 %v942
        %v1210 = vunpack.c.l.b16 %v943
        %v1211 = vunpack.c.l.b16 %v944
        %v1212 = vunpack.c.l.b16 %v945
        %v1213 = vunpack.c.l.b16 %v946
        %v1214 = vunpack.c.l.b16 %v947
        %v1215 = vunpack.c.l.b16 %v948
        %v1216 = vunpack.c.l.b16 %v949
        %v1217 = vunpack.c.l.b16 %v950
        %v1218 = vunpack.c.l.b16 %v951
        %v1219 = vunpack.c.l.b16 %v952
        %v1220 = vunpack.c.l.b16 %v953
        %v1221 = vunpack.c.l.b16 %v954
        %v1222 = vunpack.c.l.b16 %v955
        %v1223 = vunpack.c.l.b16 %v956
        %v1224 = vunpack.c.l.b16 %v957
        %v1225 = vunpack.c.l.b16 %v958
        %v1226 = vunpack.c.l.b16 %v959
        %v1227 = vunpack.c.l.b16 %v960
        %v1228 = vunpack.c.l.b16 %v961
        %v1229 = vunpack.c.l.b16 %v962
        %v1230 = vunpack.c.l.b16 %v963
        %v1231 = vunpack.c.l.b16 %v964
        %v1232 = vunpack.c.l.b16 %v965
        %v1233 = vunpack.c.l.b16 %v966
        %v1234 = vunpack.c.l.b16 %v967
        %v1235 = vunpack.c.l.b16 %v968
        %v1236 = vunpack.c.l.b16 %v969
        %v1237 = vunpack.c.l.b16 %v970
        %v1238 = vunpack.c.l.b16 %v971
        %v1239 = vunpack.c.l.b16 %v972
        %v1240 = vunpack.c.l.b16 %v973
        %v1241 = vunpack.c.l.b16 %v974
        %v1242 = vunpack.c.l.b16 %v975
        %v1243 = vunpack.c.l.b16 %v976
        %v1244 = vunpack.c.l.b16 %v977
        %v1245 = vunpack.c.l.b16 %v978
        %v1246 = vunpack.c.l.b16 %v979
        %v1247 = vunpack.c.l.b16 %v980
        %v1248 = vunpack.c.l.b16 %v981
        %v1249 = vunpack.c.l.b16 %v982
        %v1250 = vunpack.c.l.b16 %v983
        %v1251 = vunpack.c.l.b16 %v984
        %v1252 = vunpack.c.l.b16 %v985
        %v1253 = vunpack.c.l.b16 %v986
        %v1254 = vunpack.c.l.b16 %v987
        %v1255 = vunpack.c.l.b16 %v988
        %v1256 = vunpack.c.l.b16 %v989
        %v1257 = vunpack.c.l.b16 %v990
        %v1258 = vunpack.c.l.b16 %v991
        %v1259 = vunpack.c.l.b16 %v992
        %v1260 = vunpack.c.l.b16 %v993
        %v1261 = vunpack.c.l.b16 %v994
        %v1262 = vunpack.c.l.b16 %v995
        %v1263 = vunpack.c.l.b16 %v996
        %v1264 = vunpack.c.l.b16 %v997
        %v1265 = vunpack.c.l.b16 %v998
        %v1266 = vunpack.c.l.b16 %v999
        %v1267 = vpack.c.b16 %v1140, %v1139
        %v1268 = vpack.c.b16 %v1142, %v1141
        %v1269 = vpack.c.b16 %v1144, %v1143
        %v1270 = vpack.c.b16 %v1146, %v1145
        %v1271 = vpack.c.b16 %v1148, %v1147
        %v1272 = vpack.c.b16 %v1150, %v1149
        %v1273 = vpack.c.b16 %v1152, %v1151
        %v1274 = vpack.c.b16 %v1154, %v1153
        %v1275 = vpack.c.b16 %v1156, %v1155
        %v1276 = vpack.c.b16 %v1158, %v1157
        %v1277 = vpack.c.b16 %v1160, %v1159
        %v1278 = vpack.c.b16 %v1162, %v1161
        %v1279 = vpack.c.b16 %v1164, %v1163
        %v1280 = vpack.c.b16 %v1166, %v1165
        %v1281 = vpack.c.b16 %v1168, %v1167
        %v1282 = vpack.c.b16 %v1170, %v1169
        %v1283 = vpack.c.b16 %v1172, %v1171
        %v1284 = vpack.c.b16 %v1174, %v1173
        %v1285 = vpack.c.b16 %v1176, %v1175
        %v1286 = vpack.c.b16 %v1178, %v1177
        %v1287 = vpack.c.b16 %v1180, %v1179
        %v1288 = vpack.c.b16 %v1182, %v1181
        %v1289 = vpack.c.b16 %v1184, %v1183
        %v1290 = vpack.c.b16 %v1186, %v1185
        %v1291 = vpack.c.b16 %v1188, %v1187
        %v1292 = vpack.c.b16 %v1190, %v1189
        %v1293 = vpack.c.b16 %v1192, %v1191
        %v1294 = vpack.c.b16 %v1194, %v1193
        %v1295 = vpack.c.b16 %v1196, %v1195
        %v1296 = vpack.c.b16 %v1198, %v1197
        %v1297 = vpack.c.b16 %v1200, %v1199
        %v1298 = vpack.c.b16 %v1202, %v1201
        %v1299 = vpack.c.b16 %v1204, %v1203
        %v1300 = vpack.c.b16 %v1206, %v1205
        %v1301 = vpack.c.b16 %v1208, %v1207
        %v1302 = vpack.c.b16 %v1210, %v1209
        %v1303 = vpack.c.b16 %v1212, %v1211
        %v1304 = vpack.c.b16 %v1214, %v1213
        %v1305 = vpack.c.b16 %v1216, %v1215
        %v1306 = vpack.c.b16 %v1218, %v1217
        %v1307 = vpack.c.b16 %v1220, %v1219
        %v1308 = vpack.c.b16 %v1222, %v1221
        %v1309 = vpack.c.b16 %v1224, %v1223
        %v1310 = vpack.c.b16 %v1226, %v1225
        %v1311 = vpack.c.b16 %v1228, %v1227
        %v1312 = vpack.c.b16 %v1230, %v1229
        %v1313 = vpack.c.b16 %v1232, %v1231
        %v1314 = vpack.c.b16 %v1234, %v1233
        %v1315 = vpack.c.b16 %v1236, %v1235
        %v1316 = vpack.c.b16 %v1238, %v1237
        %v1317 = vpack.c.b16 %v1240, %v1239
        %v1318 = vpack.c.b16 %v1242, %v1241
        %v1319 = vpack.c.b16 %v1244, %v1243
        %v1320 = vpack.c.b16 %v1246, %v1245
        %v1321 = vpack.c.b16 %v1248, %v1247
        %v1322 = vpack.c.b16 %v1250, %v1249
        %v1323 = vpack.c.b16 %v1252, %v1251
        %v1324 = vpack.c.b16 %v1254, %v1253
        %v1325 = vpack.c.b16 %v1256, %v1255
        %v1326 = vpack.c.b16 %v1258, %v1257
        %v1327 = vpack.c.b16 %v1260, %v1259
        %v1328 = vpack.c.b16 %v1262, %v1261
        %v1329 = vpack.c.b16 %v1264, %v1263
        %v1330 = vpack.c.b16 %v1266, %v1265
        %v1335 = vunpack.c.l.b16 %v1000
        %v1336 = vunpack.c.l.b16 %v1001
        %v1337 = vunpack.c.l.b16 %v1002
        %v1338 = vunpack.c.l.b16 %v1003
        %v1339 = vpack.c.b16 %v1336, %v1335
        %v1340 = vpack.c.b16 %v1338, %v1337
        %vm1342 = vcmask 220160
        %v1344 = vsel %vm1342, %v1267, 0
        %v1347 = vsel %vm1342, %v1268, 0
        %v1350 = vsel %vm1342, %v1269, 0
        %v1353 = vsel %vm1342, %v1270, 0
        %v1356 = vsel %vm1342, %v1271, 0
        %v1359 = vsel %vm1342, %v1272, 0
        %v1362 = vsel %vm1342, %v1273, 0
        %v1365 = vsel %vm1342, %v1274, 0
        %v1368 = vsel %vm1342, %v1275, 0
        %v1371 = vsel %vm1342, %v1276, 0
        %v1374 = vsel %vm1342, %v1277, 0
        %v1377 = vsel %vm1342, %v1278, 0
        %v1380 = vsel %vm1342, %v1279, 0
        %v1383 = vsel %vm1342, %v1280, 0
        %v1386 = vsel %vm1342, %v1281, 0
        %v1389 = vsel %vm1342, %v1282, 0
        %v1392 = vsel %vm1342, %v1283, 0
        %v1395 = vsel %vm1342, %v1284, 0
        %v1398 = vsel %vm1342, %v1285, 0
        %v1401 = vsel %vm1342, %v1286, 0
        %v1404 = vsel %vm1342, %v1287, 0
        %v1407 = vsel %vm1342, %v1288, 0
        %v1410 = vsel %vm1342, %v1289, 0
        %v1413 = vsel %vm1342, %v1290, 0
        %v1416 = vsel %vm1342, %v1291, 0
        %v1419 = vsel %vm1342, %v1292, 0
        %v1422 = vsel %vm1342, %v1293, 0
        %v1425 = vsel %vm1342, %v1294, 0
        %v1428 = vsel %vm1342, %v1295, 0
        %v1431 = vsel %vm1342, %v1296, 0
        %v1434 = vsel %vm1342, %v1297, 0
        %v1437 = vsel %vm1342, %v1298, 0
        %v1440 = vsel %vm1342, %v1299, 0
        %v1443 = vsel %vm1342, %v1300, 0
        %v1446 = vsel %vm1342, %v1301, 0
        %v1449 = vsel %vm1342, %v1302, 0
        %v1452 = vsel %vm1342, %v1303, 0
        %v1455 = vsel %vm1342, %v1304, 0
        %v1458 = vsel %vm1342, %v1305, 0
        %v1461 = vsel %vm1342, %v1306, 0
        %v1464 = vsel %vm1342, %v1307, 0
        %v1467 = vsel %vm1342, %v1308, 0
        %v1470 = vsel %vm1342, %v1309, 0
        %v1473 = vsel %vm1342, %v1310, 0
        %v1476 = vsel %vm1342, %v1311, 0
        %v1479 = vsel %vm1342, %v1312, 0
        %v1482 = vsel %vm1342, %v1313, 0
        %v1485 = vsel %vm1342, %v1314, 0
        %v1488 = vsel %vm1342, %v1315, 0
        %v1491 = vsel %vm1342, %v1316, 0
        %v1494 = vsel %vm1342, %v1317, 0
        %v1497 = vsel %vm1342, %v1318, 0
        %v1500 = vsel %vm1342, %v1319, 0
        %v1503 = vsel %vm1342, %v1320, 0
        %v1506 = vsel %vm1342, %v1321, 0
        %v1509 = vsel %vm1342, %v1322, 0
        %v1512 = vsel %vm1342, %v1323, 0
        %v1515 = vsel %vm1342, %v1324, 0
        %v1518 = vsel %vm1342, %v1325, 0
        %v1521 = vsel %vm1342, %v1326, 0
        %v1524 = vsel %vm1342, %v1327, 0
        %v1527 = vsel %vm1342, %v1328, 0
        %v1530 = vsel %vm1342, %v1329, 0
        %v1533 = vsel %vm1342, %v1330, 0
        %vm1535 = vcmask 1044480
        %vm1536 = vcmask 1045504
        %v1537 = vsel %vm1535, 4294967295, 65535
        %v1538 = vsel %vm1536, %v1537, 0
        %v1540 = vand.u32 %v1340, %v1538
        %1542 = vmatprep.subr.bf16.mxu0 0
        %1543 = vmatpush1.bf16.msra.mxu0 0
        %1544 = vmatprep.subr.bf16.mxu0 0
        %1545 = vmatpush1.bf16.msra.mxu0 0
        %1546 = vmatprep.subr.bf16.mxu0 0
        %1547 = vmatpush1.bf16.msra.mxu0 0
        %1548 = vmatprep.subr.bf16.mxu0 0
        %1549 = vmatpush1.bf16.msra.mxu0 0
        %1550 = vmatprep.subr.bf16.mxu0 0
        %1551 = vmatpush1.bf16.msra.mxu0 0
        %1552 = vmatprep.subr.bf16.mxu0 0
        %1553 = vmatpush1.bf16.msra.mxu0 0
        %1554 = vmatprep.subr.bf16.mxu0 0
        %1555 = vmatpush1.bf16.msra.mxu0 %v1540
        %1556 = vmatprep.subr.bf16.mxu0 0
        %1557 = vmatpush1.bf16.msra.mxu0 %v1339
        %1558 = vmatprep.subr.bf16.mxu0 0
        %1559 = vmatpush2.bf16.msra.mxu0 0
        %1560 = vmatprep.subr.bf16.mxu0 0
        %1561 = vmatpush2.bf16.msra.mxu0 0
        %1562 = vmatprep.subr.bf16.mxu0 0
        %1563 = vmatpush2.bf16.msra.mxu0 0
        %1564 = vmatprep.subr.bf16.mxu0 0
        %1565 = vmatpush2.bf16.msra.mxu0 0
        %1566 = vmatprep.subr.bf16.mxu0 0
        %1567 = vmatpush2.bf16.msra.mxu0 0
        %1568 = vmatprep.subr.bf16.mxu0 0
        %1569 = vmatpush2.bf16.msra.mxu0 0
        %1570 = vmatprep.subr.bf16.mxu0 0
        %1571 = vmatpush2.bf16.msra.mxu0 0
        %1572 = vmatprep.subr.bf16.mxu0 0
        %1573 = vmatpush2.bf16.msra.mxu0 0
        %1574 = vmatprep.mubr.bf16.mxu0 0
        %1575 = vmatmul.mubr.bf16.gmra.mxu0 %v1344
        %v1576 = vpop.f32.mrf.mxu0
        %v1577 = vadd.f32 %v1009, %v1576
        %v1578 = vpop.f32.mrf.mxu0
        %v1579 = vpop.f32.mrf.mxu0
        %v1580 = vadd.f32 %v1009, %v1579
        %v1581 = vpop.f32.mrf.mxu0
        %1582 = vmatprep.mubr.bf16.mxu0 0
        %1583 = vmatmul.mubr.bf16.gmra.mxu0 %v1347
        %v1584 = vpop.f32.mrf.mxu0
        %v1585 = vadd.f32 %v1009, %v1584
        %v1586 = vpop.f32.mrf.mxu0
        %v1587 = vpop.f32.mrf.mxu0
        %v1588 = vadd.f32 %v1009, %v1587
        %v1589 = vpop.f32.mrf.mxu0
        %1590 = vmatprep.mubr.bf16.mxu0 0
        %1591 = vmatmul.mubr.bf16.gmra.mxu0 %v1350
        %v1592 = vpop.f32.mrf.mxu0
        %v1593 = vadd.f32 %v1009, %v1592
        %v1594 = vpop.f32.mrf.mxu0
        %v1595 = vpop.f32.mrf.mxu0
        %v1596 = vadd.f32 %v1009, %v1595
        %v1597 = vpop.f32.mrf.mxu0
        %1598 = vmatprep.mubr.bf16.mxu0 0
        %1599 = vmatmul.mubr.bf16.gmra.mxu0 %v1353
        %v1600 = vpop.f32.mrf.mxu0
        %v1601 = vadd.f32 %v1009, %v1600
        %v1602 = vpop.f32.mrf.mxu0
        %v1603 = vpop.f32.mrf.mxu0
        %v1604 = vadd.f32 %v1009, %v1603
        %v1605 = vpop.f32.mrf.mxu0
        %1606 = vmatprep.mubr.bf16.mxu0 0
        %1607 = vmatmul.mubr.bf16.gmra.mxu0 %v1356
        %v1608 = vpop.f32.mrf.mxu0
        %v1609 = vadd.f32 %v1009, %v1608
        %v1610 = vpop.f32.mrf.mxu0
        %v1611 = vpop.f32.mrf.mxu0
        %v1612 = vadd.f32 %v1009, %v1611
        %v1613 = vpop.f32.mrf.mxu0
        %1614 = vmatprep.mubr.bf16.mxu0 0
        %1615 = vmatmul.mubr.bf16.gmra.mxu0 %v1359
        %v1616 = vpop.f32.mrf.mxu0
        %v1617 = vadd.f32 %v1009, %v1616
        %v1618 = vpop.f32.mrf.mxu0
        %v1619 = vpop.f32.mrf.mxu0
        %v1620 = vadd.f32 %v1009, %v1619
        %v1621 = vpop.f32.mrf.mxu0
        %1622 = vmatprep.mubr.bf16.mxu0 0
        %1623 = vmatmul.mubr.bf16.gmra.mxu0 %v1362
        %v1624 = vpop.f32.mrf.mxu0
        %v1625 = vadd.f32 %v1009, %v1624
        %v1626 = vpop.f32.mrf.mxu0
        %v1627 = vpop.f32.mrf.mxu0
        %v1628 = vadd.f32 %v1009, %v1627
        %v1629 = vpop.f32.mrf.mxu0
        %1630 = vmatprep.mubr.bf16.mxu0 0
        %1631 = vmatmul.mubr.bf16.gmra.mxu0 %v1365
        %v1632 = vpop.f32.mrf.mxu0
        %v1633 = vadd.f32 %v1009, %v1632
        %v1634 = vpop.f32.mrf.mxu0
        %v1635 = vpop.f32.mrf.mxu0
        %v1636 = vadd.f32 %v1009, %v1635
        %v1637 = vpop.f32.mrf.mxu0
        %1638 = vmatprep.mubr.bf16.mxu0 0
        %1639 = vmatmul.mubr.bf16.gmra.mxu0 %v1368
        %v1640 = vpop.f32.mrf.mxu0
        %v1641 = vadd.f32 %v1009, %v1640
        %v1642 = vpop.f32.mrf.mxu0
        %v1643 = vpop.f32.mrf.mxu0
        %v1644 = vadd.f32 %v1009, %v1643
        %v1645 = vpop.f32.mrf.mxu0
        %1646 = vmatprep.mubr.bf16.mxu0 0
        %1647 = vmatmul.mubr.bf16.gmra.mxu0 %v1371
        %v1648 = vpop.f32.mrf.mxu0
        %v1649 = vadd.f32 %v1009, %v1648
        %v1650 = vpop.f32.mrf.mxu0
        %v1651 = vpop.f32.mrf.mxu0
        %v1652 = vadd.f32 %v1009, %v1651
        %v1653 = vpop.f32.mrf.mxu0
        %1654 = vmatprep.mubr.bf16.mxu0 0
        %1655 = vmatmul.mubr.bf16.gmra.mxu0 %v1374
        %v1656 = vpop.f32.mrf.mxu0
        %v1657 = vadd.f32 %v1009, %v1656
        %v1658 = vpop.f32.mrf.mxu0
        %v1659 = vpop.f32.mrf.mxu0
        %v1660 = vadd.f32 %v1009, %v1659
        %v1661 = vpop.f32.mrf.mxu0
        %1662 = vmatprep.mubr.bf16.mxu0 0
        %1663 = vmatmul.mubr.bf16.gmra.mxu0 %v1377
        %v1664 = vpop.f32.mrf.mxu0
        %v1665 = vadd.f32 %v1009, %v1664
        %v1666 = vpop.f32.mrf.mxu0
        %v1667 = vpop.f32.mrf.mxu0
        %v1668 = vadd.f32 %v1009, %v1667
        %v1669 = vpop.f32.mrf.mxu0
        %1670 = vmatprep.mubr.bf16.mxu0 0
        %1671 = vmatmul.mubr.bf16.gmra.mxu0 %v1380
        %v1672 = vpop.f32.mrf.mxu0
        %v1673 = vadd.f32 %v1009, %v1672
        %v1674 = vpop.f32.mrf.mxu0
        %v1675 = vpop.f32.mrf.mxu0
        %v1676 = vadd.f32 %v1009, %v1675
        %v1677 = vpop.f32.mrf.mxu0
        %1678 = vmatprep.mubr.bf16.mxu0 0
        %1679 = vmatmul.mubr.bf16.gmra.mxu0 %v1383
        %v1680 = vpop.f32.mrf.mxu0
        %v1681 = vadd.f32 %v1009, %v1680
        %v1682 = vpop.f32.mrf.mxu0
        %v1683 = vpop.f32.mrf.mxu0
        %v1684 = vadd.f32 %v1009, %v1683
        %v1685 = vpop.f32.mrf.mxu0
        %1686 = vmatprep.mubr.bf16.mxu0 0
        %1687 = vmatmul.mubr.bf16.gmra.mxu0 %v1386
        %v1688 = vpop.f32.mrf.mxu0
        %v1689 = vadd.f32 %v1009, %v1688
        %v1690 = vpop.f32.mrf.mxu0
        %v1691 = vpop.f32.mrf.mxu0
        %v1692 = vadd.f32 %v1009, %v1691
        %v1693 = vpop.f32.mrf.mxu0
        %1694 = vmatprep.mubr.bf16.mxu0 0
        %1695 = vmatmul.mubr.bf16.gmra.mxu0 %v1389
        %v1696 = vpop.f32.mrf.mxu0
        %v1697 = vadd.f32 %v1009, %v1696
        %v1698 = vpop.f32.mrf.mxu0
        %v1699 = vpop.f32.mrf.mxu0
        %v1700 = vadd.f32 %v1009, %v1699
        %v1701 = vpop.f32.mrf.mxu0
        %1702 = vmatprep.mubr.bf16.mxu0 0
        %1703 = vmatmul.mubr.bf16.gmra.mxu0 %v1392
        %v1704 = vpop.f32.mrf.mxu0
        %v1705 = vadd.f32 %v1009, %v1704
        %v1706 = vpop.f32.mrf.mxu0
        %v1707 = vpop.f32.mrf.mxu0
        %v1708 = vadd.f32 %v1009, %v1707
        %v1709 = vpop.f32.mrf.mxu0
        %1710 = vmatprep.mubr.bf16.mxu0 0
        %1711 = vmatmul.mubr.bf16.gmra.mxu0 %v1395
        %v1712 = vpop.f32.mrf.mxu0
        %v1713 = vadd.f32 %v1009, %v1712
        %v1714 = vpop.f32.mrf.mxu0
        %v1715 = vpop.f32.mrf.mxu0
        %v1716 = vadd.f32 %v1009, %v1715
        %v1717 = vpop.f32.mrf.mxu0
        %1718 = vmatprep.mubr.bf16.mxu0 0
        %1719 = vmatmul.mubr.bf16.gmra.mxu0 %v1398
        %v1720 = vpop.f32.mrf.mxu0
        %v1721 = vadd.f32 %v1009, %v1720
        %v1722 = vpop.f32.mrf.mxu0
        %v1723 = vpop.f32.mrf.mxu0
        %v1724 = vadd.f32 %v1009, %v1723
        %v1725 = vpop.f32.mrf.mxu0
        %1726 = vmatprep.mubr.bf16.mxu0 0
        %1727 = vmatmul.mubr.bf16.gmra.mxu0 %v1401
        %v1728 = vpop.f32.mrf.mxu0
        %v1729 = vadd.f32 %v1009, %v1728
        %v1730 = vpop.f32.mrf.mxu0
        %v1731 = vpop.f32.mrf.mxu0
        %v1732 = vadd.f32 %v1009, %v1731
        %v1733 = vpop.f32.mrf.mxu0
        %1734 = vmatprep.mubr.bf16.mxu0 0
        %1735 = vmatmul.mubr.bf16.gmra.mxu0 %v1404
        %v1736 = vpop.f32.mrf.mxu0
        %v1737 = vadd.f32 %v1009, %v1736
        %v1738 = vpop.f32.mrf.mxu0
        %v1739 = vpop.f32.mrf.mxu0
        %v1740 = vadd.f32 %v1009, %v1739
        %v1741 = vpop.f32.mrf.mxu0
        %1742 = vmatprep.mubr.bf16.mxu0 0
        %1743 = vmatmul.mubr.bf16.gmra.mxu0 %v1407
        %v1744 = vpop.f32.mrf.mxu0
        %v1745 = vadd.f32 %v1009, %v1744
        %v1746 = vpop.f32.mrf.mxu0
        %v1747 = vpop.f32.mrf.mxu0
        %v1748 = vadd.f32 %v1009, %v1747
        %v1749 = vpop.f32.mrf.mxu0
        %1750 = vmatprep.mubr.bf16.mxu0 0
        %1751 = vmatmul.mubr.bf16.gmra.mxu0 %v1410
        %v1752 = vpop.f32.mrf.mxu0
        %v1753 = vadd.f32 %v1009, %v1752
        %v1754 = vpop.f32.mrf.mxu0
        %v1755 = vpop.f32.mrf.mxu0
        %v1756 = vadd.f32 %v1009, %v1755
        %v1757 = vpop.f32.mrf.mxu0
        %1758 = vmatprep.mubr.bf16.mxu0 0
        %1759 = vmatmul.mubr.bf16.gmra.mxu0 %v1413
        %v1760 = vpop.f32.mrf.mxu0
        %v1761 = vadd.f32 %v1009, %v1760
        %v1762 = vpop.f32.mrf.mxu0
        %v1763 = vpop.f32.mrf.mxu0
        %v1764 = vadd.f32 %v1009, %v1763
        %v1765 = vpop.f32.mrf.mxu0
        %1766 = vmatprep.mubr.bf16.mxu0 0
        %1767 = vmatmul.mubr.bf16.gmra.mxu0 %v1416
        %v1768 = vpop.f32.mrf.mxu0
        %v1769 = vadd.f32 %v1009, %v1768
        %v1770 = vpop.f32.mrf.mxu0
        %v1771 = vpop.f32.mrf.mxu0
        %v1772 = vadd.f32 %v1009, %v1771
        %v1773 = vpop.f32.mrf.mxu0
        %1774 = vmatprep.mubr.bf16.mxu0 0
        %1775 = vmatmul.mubr.bf16.gmra.mxu0 %v1419
        %v1776 = vpop.f32.mrf.mxu0
        %v1777 = vadd.f32 %v1009, %v1776
        %v1778 = vpop.f32.mrf.mxu0
        %v1779 = vpop.f32.mrf.mxu0
        %v1780 = vadd.f32 %v1009, %v1779
        %v1781 = vpop.f32.mrf.mxu0
        %1782 = vmatprep.mubr.bf16.mxu0 0
        %1783 = vmatmul.mubr.bf16.gmra.mxu0 %v1422
        %v1784 = vpop.f32.mrf.mxu0
        %v1785 = vadd.f32 %v1009, %v1784
        %v1786 = vpop.f32.mrf.mxu0
        %v1787 = vpop.f32.mrf.mxu0
        %v1788 = vadd.f32 %v1009, %v1787
        %v1789 = vpop.f32.mrf.mxu0
        %1790 = vmatprep.mubr.bf16.mxu0 0
        %1791 = vmatmul.mubr.bf16.gmra.mxu0 %v1425
        %v1792 = vpop.f32.mrf.mxu0
        %v1793 = vadd.f32 %v1009, %v1792
        %v1794 = vpop.f32.mrf.mxu0
        %v1795 = vpop.f32.mrf.mxu0
        %v1796 = vadd.f32 %v1009, %v1795
        %v1797 = vpop.f32.mrf.mxu0
        %1798 = vmatprep.mubr.bf16.mxu0 0
        %1799 = vmatmul.mubr.bf16.gmra.mxu0 %v1428
        %v1800 = vpop.f32.mrf.mxu0
        %v1801 = vadd.f32 %v1009, %v1800
        %v1802 = vpop.f32.mrf.mxu0
        %v1803 = vpop.f32.mrf.mxu0
        %v1804 = vadd.f32 %v1009, %v1803
        %v1805 = vpop.f32.mrf.mxu0
        %1806 = vmatprep.mubr.bf16.mxu0 0
        %1807 = vmatmul.mubr.bf16.gmra.mxu0 %v1431
        %v1808 = vpop.f32.mrf.mxu0
        %v1809 = vadd.f32 %v1009, %v1808
        %v1810 = vpop.f32.mrf.mxu0
        %v1811 = vpop.f32.mrf.mxu0
        %v1812 = vadd.f32 %v1009, %v1811
        %v1813 = vpop.f32.mrf.mxu0
        %1814 = vmatprep.mubr.bf16.mxu0 0
        %1815 = vmatmul.mubr.bf16.gmra.mxu0 %v1434
        %v1816 = vpop.f32.mrf.mxu0
        %v1817 = vadd.f32 %v1009, %v1816
        %v1818 = vpop.f32.mrf.mxu0
        %v1819 = vpop.f32.mrf.mxu0
        %v1820 = vadd.f32 %v1009, %v1819
        %v1821 = vpop.f32.mrf.mxu0
        %1822 = vmatprep.mubr.bf16.mxu0 0
        %1823 = vmatmul.mubr.bf16.gmra.mxu0 %v1437
        %v1824 = vpop.f32.mrf.mxu0
        %v1825 = vadd.f32 %v1009, %v1824
        %v1826 = vpop.f32.mrf.mxu0
        %v1827 = vpop.f32.mrf.mxu0
        %v1828 = vadd.f32 %v1009, %v1827
        %v1829 = vpop.f32.mrf.mxu0
        %1830 = vmatprep.mubr.bf16.mxu0 0
        %1831 = vmatmul.mubr.bf16.gmra.mxu0 %v1440
        %v1832 = vpop.f32.mrf.mxu0
        %v1833 = vadd.f32 %v1009, %v1832
        %v1834 = vpop.f32.mrf.mxu0
        %v1835 = vpop.f32.mrf.mxu0
        %v1836 = vadd.f32 %v1009, %v1835
        %v1837 = vpop.f32.mrf.mxu0
        %1838 = vmatprep.mubr.bf16.mxu0 0
        %1839 = vmatmul.mubr.bf16.gmra.mxu0 %v1443
        %v1840 = vpop.f32.mrf.mxu0
        %v1841 = vadd.f32 %v1009, %v1840
        %v1842 = vpop.f32.mrf.mxu0
        %v1843 = vpop.f32.mrf.mxu0
        %v1844 = vadd.f32 %v1009, %v1843
        %v1845 = vpop.f32.mrf.mxu0
        %1846 = vmatprep.mubr.bf16.mxu0 0
        %1847 = vmatmul.mubr.bf16.gmra.mxu0 %v1446
        %v1848 = vpop.f32.mrf.mxu0
        %v1849 = vadd.f32 %v1009, %v1848
        %v1850 = vpop.f32.mrf.mxu0
        %v1851 = vpop.f32.mrf.mxu0
        %v1852 = vadd.f32 %v1009, %v1851
        %v1853 = vpop.f32.mrf.mxu0
        %1854 = vmatprep.mubr.bf16.mxu0 0
        %1855 = vmatmul.mubr.bf16.gmra.mxu0 %v1449
        %v1856 = vpop.f32.mrf.mxu0
        %v1857 = vadd.f32 %v1009, %v1856
        %v1858 = vpop.f32.mrf.mxu0
        %v1859 = vpop.f32.mrf.mxu0
        %v1860 = vadd.f32 %v1009, %v1859
        %v1861 = vpop.f32.mrf.mxu0
        %1862 = vmatprep.mubr.bf16.mxu0 0
        %1863 = vmatmul.mubr.bf16.gmra.mxu0 %v1452
        %v1864 = vpop.f32.mrf.mxu0
        %v1865 = vadd.f32 %v1009, %v1864
        %v1866 = vpop.f32.mrf.mxu0
        %v1867 = vpop.f32.mrf.mxu0
        %v1868 = vadd.f32 %v1009, %v1867
        %v1869 = vpop.f32.mrf.mxu0
        %1870 = vmatprep.mubr.bf16.mxu0 0
        %1871 = vmatmul.mubr.bf16.gmra.mxu0 %v1455
        %v1872 = vpop.f32.mrf.mxu0
        %v1873 = vadd.f32 %v1009, %v1872
        %v1874 = vpop.f32.mrf.mxu0
        %v1875 = vpop.f32.mrf.mxu0
        %v1876 = vadd.f32 %v1009, %v1875
        %v1877 = vpop.f32.mrf.mxu0
        %1878 = vmatprep.mubr.bf16.mxu0 0
        %1879 = vmatmul.mubr.bf16.gmra.mxu0 %v1458
        %v1880 = vpop.f32.mrf.mxu0
        %v1881 = vadd.f32 %v1009, %v1880
        %v1882 = vpop.f32.mrf.mxu0
        %v1883 = vpop.f32.mrf.mxu0
        %v1884 = vadd.f32 %v1009, %v1883
        %v1885 = vpop.f32.mrf.mxu0
        %1886 = vmatprep.mubr.bf16.mxu0 0
        %1887 = vmatmul.mubr.bf16.gmra.mxu0 %v1461
        %v1888 = vpop.f32.mrf.mxu0
        %v1889 = vadd.f32 %v1009, %v1888
        %v1890 = vpop.f32.mrf.mxu0
        %v1891 = vpop.f32.mrf.mxu0
        %v1892 = vadd.f32 %v1009, %v1891
        %v1893 = vpop.f32.mrf.mxu0
        %1894 = vmatprep.mubr.bf16.mxu0 0
        %1895 = vmatmul.mubr.bf16.gmra.mxu0 %v1464
        %v1896 = vpop.f32.mrf.mxu0
        %v1897 = vadd.f32 %v1009, %v1896
        %v1898 = vpop.f32.mrf.mxu0
        %v1899 = vpop.f32.mrf.mxu0
        %v1900 = vadd.f32 %v1009, %v1899
        %v1901 = vpop.f32.mrf.mxu0
        %1902 = vmatprep.mubr.bf16.mxu0 0
        %1903 = vmatmul.mubr.bf16.gmra.mxu0 %v1467
        %v1904 = vpop.f32.mrf.mxu0
        %v1905 = vadd.f32 %v1009, %v1904
        %v1906 = vpop.f32.mrf.mxu0
        %v1907 = vpop.f32.mrf.mxu0
        %v1908 = vadd.f32 %v1009, %v1907
        %v1909 = vpop.f32.mrf.mxu0
        %1910 = vmatprep.mubr.bf16.mxu0 0
        %1911 = vmatmul.mubr.bf16.gmra.mxu0 %v1470
        %v1912 = vpop.f32.mrf.mxu0
        %v1913 = vadd.f32 %v1009, %v1912
        %v1914 = vpop.f32.mrf.mxu0
        %v1915 = vpop.f32.mrf.mxu0
        %v1916 = vadd.f32 %v1009, %v1915
        %v1917 = vpop.f32.mrf.mxu0
        %1918 = vmatprep.mubr.bf16.mxu0 0
        %1919 = vmatmul.mubr.bf16.gmra.mxu0 %v1473
        %v1920 = vpop.f32.mrf.mxu0
        %v1921 = vadd.f32 %v1009, %v1920
        %v1922 = vpop.f32.mrf.mxu0
        %v1923 = vpop.f32.mrf.mxu0
        %v1924 = vadd.f32 %v1009, %v1923
        %v1925 = vpop.f32.mrf.mxu0
        %1926 = vmatprep.mubr.bf16.mxu0 0
        %1927 = vmatmul.mubr.bf16.gmra.mxu0 %v1476
        %v1928 = vpop.f32.mrf.mxu0
        %v1929 = vadd.f32 %v1009, %v1928
        %v1930 = vpop.f32.mrf.mxu0
        %v1931 = vpop.f32.mrf.mxu0
        %v1932 = vadd.f32 %v1009, %v1931
        %v1933 = vpop.f32.mrf.mxu0
        %1934 = vmatprep.mubr.bf16.mxu0 0
        %1935 = vmatmul.mubr.bf16.gmra.mxu0 %v1479
        %v1936 = vpop.f32.mrf.mxu0
        %v1937 = vadd.f32 %v1009, %v1936
        %v1938 = vpop.f32.mrf.mxu0
        %v1939 = vpop.f32.mrf.mxu0
        %v1940 = vadd.f32 %v1009, %v1939
        %v1941 = vpop.f32.mrf.mxu0
        %1942 = vmatprep.mubr.bf16.mxu0 0
        %1943 = vmatmul.mubr.bf16.gmra.mxu0 %v1482
        %v1944 = vpop.f32.mrf.mxu0
        %v1945 = vadd.f32 %v1009, %v1944
        %v1946 = vpop.f32.mrf.mxu0
        %v1947 = vpop.f32.mrf.mxu0
        %v1948 = vadd.f32 %v1009, %v1947
        %v1949 = vpop.f32.mrf.mxu0
        %1950 = vmatprep.mubr.bf16.mxu0 0
        %1951 = vmatmul.mubr.bf16.gmra.mxu0 %v1485
        %v1952 = vpop.f32.mrf.mxu0
        %v1953 = vadd.f32 %v1009, %v1952
        %v1954 = vpop.f32.mrf.mxu0
        %v1955 = vpop.f32.mrf.mxu0
        %v1956 = vadd.f32 %v1009, %v1955
        %v1957 = vpop.f32.mrf.mxu0
        %1958 = vmatprep.mubr.bf16.mxu0 0
        %1959 = vmatmul.mubr.bf16.gmra.mxu0 %v1488
        %v1960 = vpop.f32.mrf.mxu0
        %v1961 = vadd.f32 %v1009, %v1960
        %v1962 = vpop.f32.mrf.mxu0
        %v1963 = vpop.f32.mrf.mxu0
        %v1964 = vadd.f32 %v1009, %v1963
        %v1965 = vpop.f32.mrf.mxu0
        %1966 = vmatprep.mubr.bf16.mxu0 0
        %1967 = vmatmul.mubr.bf16.gmra.mxu0 %v1491
        %v1968 = vpop.f32.mrf.mxu0
        %v1969 = vadd.f32 %v1009, %v1968
        %v1970 = vpop.f32.mrf.mxu0
        %v1971 = vpop.f32.mrf.mxu0
        %v1972 = vadd.f32 %v1009, %v1971
        %v1973 = vpop.f32.mrf.mxu0
        %1974 = vmatprep.mubr.bf16.mxu0 0
        %1975 = vmatmul.mubr.bf16.gmra.mxu0 %v1494
        %v1976 = vpop.f32.mrf.mxu0
        %v1977 = vadd.f32 %v1009, %v1976
        %v1978 = vpop.f32.mrf.mxu0
        %v1979 = vpop.f32.mrf.mxu0
        %v1980 = vadd.f32 %v1009, %v1979
        %v1981 = vpop.f32.mrf.mxu0
        %1982 = vmatprep.mubr.bf16.mxu0 0
        %1983 = vmatmul.mubr.bf16.gmra.mxu0 %v1497
        %v1984 = vpop.f32.mrf.mxu0
        %v1985 = vadd.f32 %v1009, %v1984
        %v1986 = vpop.f32.mrf.mxu0
        %v1987 = vpop.f32.mrf.mxu0
        %v1988 = vadd.f32 %v1009, %v1987
        %v1989 = vpop.f32.mrf.mxu0
        %1990 = vmatprep.mubr.bf16.mxu0 0
        %1991 = vmatmul.mubr.bf16.gmra.mxu0 %v1500
        %v1992 = vpop.f32.mrf.mxu0
        %v1993 = vadd.f32 %v1009, %v1992
        %v1994 = vpop.f32.mrf.mxu0
        %v1995 = vpop.f32.mrf.mxu0
        %v1996 = vadd.f32 %v1009, %v1995
        %v1997 = vpop.f32.mrf.mxu0
        %1998 = vmatprep.mubr.bf16.mxu0 0
        %1999 = vmatmul.mubr.bf16.gmra.mxu0 %v1503
        %v2000 = vpop.f32.mrf.mxu0
        %v2001 = vadd.f32 %v1009, %v2000
        %v2002 = vpop.f32.mrf.mxu0
        %v2003 = vpop.f32.mrf.mxu0
        %v2004 = vadd.f32 %v1009, %v2003
        %v2005 = vpop.f32.mrf.mxu0
        %2006 = vmatprep.mubr.bf16.mxu0 0
        %2007 = vmatmul.mubr.bf16.gmra.mxu0 %v1506
        %v2008 = vpop.f32.mrf.mxu0
        %v2009 = vadd.f32 %v1009, %v2008
        %v2010 = vpop.f32.mrf.mxu0
        %v2011 = vpop.f32.mrf.mxu0
        %v2012 = vadd.f32 %v1009, %v2011
        %v2013 = vpop.f32.mrf.mxu0
        %2014 = vmatprep.mubr.bf16.mxu0 0
        %2015 = vmatmul.mubr.bf16.gmra.mxu0 %v1509
        %v2016 = vpop.f32.mrf.mxu0
        %v2017 = vadd.f32 %v1009, %v2016
        %v2018 = vpop.f32.mrf.mxu0
        %v2019 = vpop.f32.mrf.mxu0
        %v2020 = vadd.f32 %v1009, %v2019
        %v2021 = vpop.f32.mrf.mxu0
        %2022 = vmatprep.mubr.bf16.mxu0 0
        %2023 = vmatmul.mubr.bf16.gmra.mxu0 %v1512
        %v2024 = vpop.f32.mrf.mxu0
        %v2025 = vadd.f32 %v1009, %v2024
        %v2026 = vpop.f32.mrf.mxu0
        %v2027 = vpop.f32.mrf.mxu0
        %v2028 = vadd.f32 %v1009, %v2027
        %v2029 = vpop.f32.mrf.mxu0
        %2030 = vmatprep.mubr.bf16.mxu0 0
        %2031 = vmatmul.mubr.bf16.gmra.mxu0 %v1515
        %v2032 = vpop.f32.mrf.mxu0
        %v2033 = vadd.f32 %v1009, %v2032
        %v2034 = vpop.f32.mrf.mxu0
        %v2035 = vpop.f32.mrf.mxu0
        %v2036 = vadd.f32 %v1009, %v2035
        %v2037 = vpop.f32.mrf.mxu0
        %2038 = vmatprep.mubr.bf16.mxu0 0
        %2039 = vmatmul.mubr.bf16.gmra.mxu0 %v1518
        %v2040 = vpop.f32.mrf.mxu0
        %v2041 = vadd.f32 %v1009, %v2040
        %v2042 = vpop.f32.mrf.mxu0
        %v2043 = vpop.f32.mrf.mxu0
        %v2044 = vadd.f32 %v1009, %v2043
        %v2045 = vpop.f32.mrf.mxu0
        %2046 = vmatprep.mubr.bf16.mxu0 0
        %2047 = vmatmul.mubr.bf16.gmra.mxu0 %v1521
        %v2048 = vpop.f32.mrf.mxu0
        %v2049 = vadd.f32 %v1009, %v2048
        %v2050 = vpop.f32.mrf.mxu0
        %v2051 = vpop.f32.mrf.mxu0
        %v2052 = vadd.f32 %v1009, %v2051
        %v2053 = vpop.f32.mrf.mxu0
        %2054 = vmatprep.mubr.bf16.mxu0 0
        %2055 = vmatmul.mubr.bf16.gmra.mxu0 %v1524
        %v2056 = vpop.f32.mrf.mxu0
        %v2057 = vadd.f32 %v1009, %v2056
        %v2058 = vpop.f32.mrf.mxu0
        %v2059 = vpop.f32.mrf.mxu0
        %v2060 = vadd.f32 %v1009, %v2059
        %v2061 = vpop.f32.mrf.mxu0
        %2062 = vmatprep.mubr.bf16.mxu0 0
        %2063 = vmatmul.mubr.bf16.gmra.mxu0 %v1527
        %v2064 = vpop.f32.mrf.mxu0
        %v2065 = vadd.f32 %v1009, %v2064
        %v2066 = vpop.f32.mrf.mxu0
        %v2067 = vpop.f32.mrf.mxu0
        %v2068 = vadd.f32 %v1009, %v2067
        %v2069 = vpop.f32.mrf.mxu0
        %2070 = vmatprep.mubr.bf16.mxu0 0
        %2071 = vmatmul.mubr.bf16.gmra.mxu0 %v1530
        %v2072 = vpop.f32.mrf.mxu0
        %v2073 = vadd.f32 %v1009, %v2072
        %v2074 = vpop.f32.mrf.mxu0
        %v2075 = vpop.f32.mrf.mxu0
        %v2076 = vadd.f32 %v1009, %v2075
        %v2077 = vpop.f32.mrf.mxu0
        %2078 = vmatprep.mubr.bf16.mxu0 0
        %2079 = vmatmul.mubr.bf16.gmra.mxu0 %v1533
        %v2080 = vpop.f32.mrf.mxu0
        %v2081 = vadd.f32 %v1009, %v2080
        %v2082 = vpop.f32.mrf.mxu0
        %v2083 = vpop.f32.mrf.mxu0
        %v2084 = vadd.f32 %v1009, %v2083
        %v2085 = vpop.f32.mrf.mxu0
        %2086 = vdwg.mxu0
        %v2087 = vmax.f32 %v1577, 0.0
        %v2088 = vmax.f32 %v1580, 0.0
        %v2089 = vmax.f32 %v1585, 0.0
        %v2090 = vmax.f32 %v1588, 0.0
        %v2091 = vmax.f32 %v1593, 0.0
        %v2092 = vmax.f32 %v1596, 0.0
        %v2093 = vmax.f32 %v1601, 0.0
        %v2094 = vmax.f32 %v1604, 0.0
        %v2095 = vmax.f32 %v1609, 0.0
        %v2096 = vmax.f32 %v1612, 0.0
        %v2097 = vmax.f32 %v1617, 0.0
        %v2098 = vmax.f32 %v1620, 0.0
        %v2099 = vmax.f32 %v1625, 0.0
        %v2100 = vmax.f32 %v1628, 0.0
        %v2101 = vmax.f32 %v1633, 0.0
        %v2102 = vmax.f32 %v1636, 0.0
        %v2103 = vmax.f32 %v1641, 0.0
        %v2104 = vmax.f32 %v1644, 0.0
        %v2105 = vmax.f32 %v1649, 0.0
        %v2106 = vmax.f32 %v1652, 0.0
        %v2107 = vmax.f32 %v1657, 0.0
        %v2108 = vmax.f32 %v1660, 0.0
        %v2109 = vmax.f32 %v1665, 0.0
        %v2110 = vmax.f32 %v1668, 0.0
        %v2111 = vmax.f32 %v1673, 0.0
        %v2112 = vmax.f32 %v1676, 0.0
        %v2113 = vmax.f32 %v1681, 0.0
        %v2114 = vmax.f32 %v1684, 0.0
        %v2115 = vmax.f32 %v1689, 0.0
        %v2116 = vmax.f32 %v1692, 0.0
        %v2117 = vmax.f32 %v1697, 0.0
        %v2118 = vmax.f32 %v1700, 0.0
        %v2119 = vmax.f32 %v1705, 0.0
        %v2120 = vmax.f32 %v1708, 0.0
        %v2121 = vmax.f32 %v1713, 0.0
        %v2122 = vmax.f32 %v1716, 0.0
        %v2123 = vmax.f32 %v1721, 0.0
        %v2124 = vmax.f32 %v1724, 0.0
        %v2125 = vmax.f32 %v1729, 0.0
        %v2126 = vmax.f32 %v1732, 0.0
        %v2127 = vmax.f32 %v1737, 0.0
        %v2128 = vmax.f32 %v1740, 0.0
        %v2129 = vmax.f32 %v1745, 0.0
        %v2130 = vmax.f32 %v1748, 0.0
        %v2131 = vmax.f32 %v1753, 0.0
        %v2132 = vmax.f32 %v1756, 0.0
        %v2133 = vmax.f32 %v1761, 0.0
        %v2134 = vmax.f32 %v1764, 0.0
        %v2135 = vmax.f32 %v1769, 0.0
        %v2136 = vmax.f32 %v1772, 0.0
        %v2137 = vmax.f32 %v1777, 0.0
        %v2138 = vmax.f32 %v1780, 0.0
        %v2139 = vmax.f32 %v1785, 0.0
        %v2140 = vmax.f32 %v1788, 0.0
        %v2141 = vmax.f32 %v1793, 0.0
        %v2142 = vmax.f32 %v1796, 0.0
        %v2143 = vmax.f32 %v1801, 0.0
        %v2144 = vmax.f32 %v1804, 0.0
        %v2145 = vmax.f32 %v1809, 0.0
        %v2146 = vmax.f32 %v1812, 0.0
        %v2147 = vmax.f32 %v1817, 0.0
        %v2148 = vmax.f32 %v1820, 0.0
        %v2149 = vmax.f32 %v1825, 0.0
        %v2150 = vmax.f32 %v1828, 0.0
        %v2151 = vmax.f32 %v1833, 0.0
        %v2152 = vmax.f32 %v1836, 0.0
        %v2153 = vmax.f32 %v1841, 0.0
        %v2154 = vmax.f32 %v1844, 0.0
        %v2155 = vmax.f32 %v1849, 0.0
        %v2156 = vmax.f32 %v1852, 0.0
        %v2157 = vmax.f32 %v1857, 0.0
        %v2158 = vmax.f32 %v1860, 0.0
        %v2159 = vmax.f32 %v1865, 0.0
        %v2160 = vmax.f32 %v1868, 0.0
        %v2161 = vmax.f32 %v1873, 0.0
        %v2162 = vmax.f32 %v1876, 0.0
        %v2163 = vmax.f32 %v1881, 0.0
        %v2164 = vmax.f32 %v1884, 0.0
        %v2165 = vmax.f32 %v1889, 0.0
        %v2166 = vmax.f32 %v1892, 0.0
        %v2167 = vmax.f32 %v1897, 0.0
        %v2168 = vmax.f32 %v1900, 0.0
        %v2169 = vmax.f32 %v1905, 0.0
        %v2170 = vmax.f32 %v1908, 0.0
        %v2171 = vmax.f32 %v1913, 0.0
        %v2172 = vmax.f32 %v1916, 0.0
        %v2173 = vmax.f32 %v1921, 0.0
        %v2174 = vmax.f32 %v1924, 0.0
        %v2175 = vmax.f32 %v1929, 0.0
        %v2176 = vmax.f32 %v1932, 0.0
        %v2177 = vmax.f32 %v1937, 0.0
        %v2178 = vmax.f32 %v1940, 0.0
        %v2179 = vmax.f32 %v1945, 0.0
        %v2180 = vmax.f32 %v1948, 0.0
        %v2181 = vmax.f32 %v1953, 0.0
        %v2182 = vmax.f32 %v1956, 0.0
        %v2183 = vmax.f32 %v1961, 0.0
        %v2184 = vmax.f32 %v1964, 0.0
        %v2185 = vmax.f32 %v1969, 0.0
        %v2186 = vmax.f32 %v1972, 0.0
        %v2187 = vmax.f32 %v1977, 0.0
        %v2188 = vmax.f32 %v1980, 0.0
        %v2189 = vmax.f32 %v1985, 0.0
        %v2190 = vmax.f32 %v1988, 0.0
        %v2191 = vmax.f32 %v1993, 0.0
        %v2192 = vmax.f32 %v1996, 0.0
        %v2193 = vmax.f32 %v2001, 0.0
        %v2194 = vmax.f32 %v2004, 0.0
        %v2195 = vmax.f32 %v2009, 0.0
        %v2196 = vmax.f32 %v2012, 0.0
        %v2197 = vmax.f32 %v2017, 0.0
        %v2198 = vmax.f32 %v2020, 0.0
        %v2199 = vmax.f32 %v2025, 0.0
        %v2200 = vmax.f32 %v2028, 0.0
        %v2201 = vmax.f32 %v2033, 0.0
        %v2202 = vmax.f32 %v2036, 0.0
        %v2203 = vmax.f32 %v2041, 0.0
        %v2204 = vmax.f32 %v2044, 0.0
        %v2205 = vmax.f32 %v2049, 0.0
        %v2206 = vmax.f32 %v2052, 0.0
        %v2207 = vmax.f32 %v2057, 0.0
        %v2208 = vmax.f32 %v2060, 0.0
        %v2209 = vmax.f32 %v2065, 0.0
        %v2210 = vmax.f32 %v2068, 0.0
        %v2211 = vmax.f32 %v2073, 0.0
        %v2212 = vmax.f32 %v2076, 0.0
        %v2213 = vmax.f32 %v2081, 0.0
        %v2214 = vmax.f32 %v2084, 0.0
        %v2215 = vld [vmem:[#allocation2] sm:$0x3]
        %vm2216 = vcmask 130048
        %v2217 = vsel %vm2216, %v2087, 0.0
        %v2218 = vsel %vm2216, %v2088, 0.0
        %v2219 = vadd.f32 %v2217, %v2218
        %v2220 = vsel %vm2216, %v2089, 0.0
        %v2221 = vadd.f32 %v2219, %v2220
        %v2222 = vsel %vm2216, %v2090, 0.0
        %v2223 = vadd.f32 %v2221, %v2222
        %v2224 = vsel %vm2216, %v2091, 0.0
        %v2225 = vadd.f32 %v2223, %v2224
        %v2226 = vsel %vm2216, %v2092, 0.0
        %v2227 = vadd.f32 %v2225, %v2226
        %v2228 = vsel %vm2216, %v2093, 0.0
        %v2229 = vadd.f32 %v2227, %v2228
        %v2230 = vsel %vm2216, %v2094, 0.0
        %v2231 = vadd.f32 %v2229, %v2230
        %v2232 = vsel %vm2216, %v2095, 0.0
        %v2233 = vadd.f32 %v2231, %v2232
        %v2234 = vsel %vm2216, %v2096, 0.0
        %v2235 = vadd.f32 %v2233, %v2234
        %v2236 = vsel %vm2216, %v2097, 0.0
        %v2237 = vadd.f32 %v2235, %v2236
        %v2238 = vsel %vm2216, %v2098, 0.0
        %v2239 = vadd.f32 %v2237, %v2238
        %v2240 = vsel %vm2216, %v2099, 0.0
        %v2241 = vadd.f32 %v2239, %v2240
        %v2242 = vsel %vm2216, %v2100, 0.0
        %v2243 = vadd.f32 %v2241, %v2242
        %v2244 = vsel %vm2216, %v2101, 0.0
        %v2245 = vadd.f32 %v2243, %v2244
        %v2246 = vsel %vm2216, %v2102, 0.0
        %v2247 = vadd.f32 %v2245, %v2246
        %v2248 = vsel %vm2216, %v2103, 0.0
        %v2249 = vadd.f32 %v2247, %v2248
        %v2250 = vsel %vm2216, %v2104, 0.0
        %v2251 = vadd.f32 %v2249, %v2250
        %v2252 = vsel %vm2216, %v2105, 0.0
        %v2253 = vadd.f32 %v2251, %v2252
        %v2254 = vsel %vm2216, %v2106, 0.0
        %v2255 = vadd.f32 %v2253, %v2254
        %v2256 = vsel %vm2216, %v2107, 0.0
        %v2257 = vadd.f32 %v2255, %v2256
        %v2258 = vsel %vm2216, %v2108, 0.0
        %v2259 = vadd.f32 %v2257, %v2258
        %v2260 = vsel %vm2216, %v2109, 0.0
        %v2261 = vadd.f32 %v2259, %v2260
        %v2262 = vsel %vm2216, %v2110, 0.0
        %v2263 = vadd.f32 %v2261, %v2262
        %v2264 = vsel %vm2216, %v2111, 0.0
        %v2265 = vadd.f32 %v2263, %v2264
        %v2266 = vsel %vm2216, %v2112, 0.0
        %v2267 = vadd.f32 %v2265, %v2266
        %v2268 = vsel %vm2216, %v2113, 0.0
        %v2269 = vadd.f32 %v2267, %v2268
        %v2270 = vsel %vm2216, %v2114, 0.0
        %v2271 = vadd.f32 %v2269, %v2270
        %v2272 = vsel %vm2216, %v2115, 0.0
        %v2273 = vadd.f32 %v2271, %v2272
        %v2274 = vsel %vm2216, %v2116, 0.0
        %v2275 = vadd.f32 %v2273, %v2274
        %v2276 = vsel %vm2216, %v2117, 0.0
        %v2277 = vadd.f32 %v2275, %v2276
        %v2278 = vsel %vm2216, %v2118, 0.0
        %v2279 = vadd.f32 %v2277, %v2278
        %v2280 = vsel %vm2216, %v2119, 0.0
        %v2281 = vadd.f32 %v2279, %v2280
        %v2282 = vsel %vm2216, %v2120, 0.0
        %v2283 = vadd.f32 %v2281, %v2282
        %v2284 = vsel %vm2216, %v2121, 0.0
        %v2285 = vadd.f32 %v2283, %v2284
        %v2286 = vsel %vm2216, %v2122, 0.0
        %v2287 = vadd.f32 %v2285, %v2286
        %v2288 = vsel %vm2216, %v2123, 0.0
        %v2289 = vadd.f32 %v2287, %v2288
        %v2290 = vsel %vm2216, %v2124, 0.0
        %v2291 = vadd.f32 %v2289, %v2290
        %v2292 = vsel %vm2216, %v2125, 0.0
        %v2293 = vadd.f32 %v2291, %v2292
        %v2294 = vsel %vm2216, %v2126, 0.0
        %v2295 = vadd.f32 %v2293, %v2294
        %v2296 = vsel %vm2216, %v2127, 0.0
        %v2297 = vadd.f32 %v2295, %v2296
        %v2298 = vsel %vm2216, %v2128, 0.0
        %v2299 = vadd.f32 %v2297, %v2298
        %v2300 = vsel %vm2216, %v2129, 0.0
        %v2301 = vadd.f32 %v2299, %v2300
        %v2302 = vsel %vm2216, %v2130, 0.0
        %v2303 = vadd.f32 %v2301, %v2302
        %v2304 = vsel %vm2216, %v2131, 0.0
        %v2305 = vadd.f32 %v2303, %v2304
        %v2306 = vsel %vm2216, %v2132, 0.0
        %v2307 = vadd.f32 %v2305, %v2306
        %v2308 = vsel %vm2216, %v2133, 0.0
        %v2309 = vadd.f32 %v2307, %v2308
        %v2310 = vsel %vm2216, %v2134, 0.0
        %v2311 = vadd.f32 %v2309, %v2310
        %v2312 = vsel %vm2216, %v2135, 0.0
        %v2313 = vadd.f32 %v2311, %v2312
        %v2314 = vsel %vm2216, %v2136, 0.0
        %v2315 = vadd.f32 %v2313, %v2314
        %v2316 = vsel %vm2216, %v2137, 0.0
        %v2317 = vadd.f32 %v2315, %v2316
        %v2318 = vsel %vm2216, %v2138, 0.0
        %v2319 = vadd.f32 %v2317, %v2318
        %v2320 = vsel %vm2216, %v2139, 0.0
        %v2321 = vadd.f32 %v2319, %v2320
        %v2322 = vsel %vm2216, %v2140, 0.0
        %v2323 = vadd.f32 %v2321, %v2322
        %v2324 = vsel %vm2216, %v2141, 0.0
        %v2325 = vadd.f32 %v2323, %v2324
        %v2326 = vsel %vm2216, %v2142, 0.0
        %v2327 = vadd.f32 %v2325, %v2326
        %v2328 = vsel %vm2216, %v2143, 0.0
        %v2329 = vadd.f32 %v2327, %v2328
        %v2330 = vsel %vm2216, %v2144, 0.0
        %v2331 = vadd.f32 %v2329, %v2330
        %v2332 = vsel %vm2216, %v2145, 0.0
        %v2333 = vadd.f32 %v2331, %v2332
        %v2334 = vsel %vm2216, %v2146, 0.0
        %v2335 = vadd.f32 %v2333, %v2334
        %v2336 = vsel %vm2216, %v2147, 0.0
        %v2337 = vadd.f32 %v2335, %v2336
        %v2338 = vsel %vm2216, %v2148, 0.0
        %v2339 = vadd.f32 %v2337, %v2338
        %v2340 = vsel %vm2216, %v2149, 0.0
        %v2341 = vadd.f32 %v2339, %v2340
        %v2342 = vsel %vm2216, %v2150, 0.0
        %v2343 = vadd.f32 %v2341, %v2342
        %v2344 = vrot.slane %v2343, 4
        %v2345 = vadd.f32 %v2343, %v2344
        %v2346 = vrot.slane %v2345, 2
        %v2347 = vadd.f32 %v2345, %v2346
        %v2348 = vrot.slane %v2347, 1
        %v2349 = vadd.f32 %v2347, %v2348
        %v2350 = vsel %vm2216, %v2151, 0.0
        %v2351 = vsel %vm2216, %v2152, 0.0
        %v2352 = vadd.f32 %v2350, %v2351
        %v2353 = vsel %vm2216, %v2153, 0.0
        %v2354 = vadd.f32 %v2352, %v2353
        %v2355 = vsel %vm2216, %v2154, 0.0
        %v2356 = vadd.f32 %v2354, %v2355
        %v2357 = vsel %vm2216, %v2155, 0.0
        %v2358 = vadd.f32 %v2356, %v2357
        %v2359 = vsel %vm2216, %v2156, 0.0
        %v2360 = vadd.f32 %v2358, %v2359
        %v2361 = vsel %vm2216, %v2157, 0.0
        %v2362 = vadd.f32 %v2360, %v2361
        %v2363 = vsel %vm2216, %v2158, 0.0
        %v2364 = vadd.f32 %v2362, %v2363
        %v2365 = vsel %vm2216, %v2159, 0.0
        %v2366 = vadd.f32 %v2364, %v2365
        %v2367 = vsel %vm2216, %v2160, 0.0
        %v2368 = vadd.f32 %v2366, %v2367
        %v2369 = vsel %vm2216, %v2161, 0.0
        %v2370 = vadd.f32 %v2368, %v2369
        %v2371 = vsel %vm2216, %v2162, 0.0
        %v2372 = vadd.f32 %v2370, %v2371
        %v2373 = vsel %vm2216, %v2163, 0.0
        %v2374 = vadd.f32 %v2372, %v2373
        %v2375 = vsel %vm2216, %v2164, 0.0
        %v2376 = vadd.f32 %v2374, %v2375
        %v2377 = vsel %vm2216, %v2165, 0.0
        %v2378 = vadd.f32 %v2376, %v2377
        %v2379 = vsel %vm2216, %v2166, 0.0
        %v2380 = vadd.f32 %v2378, %v2379
        %v2381 = vsel %vm2216, %v2167, 0.0
        %v2382 = vadd.f32 %v2380, %v2381
        %v2383 = vsel %vm2216, %v2168, 0.0
        %v2384 = vadd.f32 %v2382, %v2383
        %v2385 = vsel %vm2216, %v2169, 0.0
        %v2386 = vadd.f32 %v2384, %v2385
        %v2387 = vsel %vm2216, %v2170, 0.0
        %v2388 = vadd.f32 %v2386, %v2387
        %v2389 = vsel %vm2216, %v2171, 0.0
        %v2390 = vadd.f32 %v2388, %v2389
        %v2391 = vsel %vm2216, %v2172, 0.0
        %v2392 = vadd.f32 %v2390, %v2391
        %v2393 = vsel %vm2216, %v2173, 0.0
        %v2394 = vadd.f32 %v2392, %v2393
        %v2395 = vsel %vm2216, %v2174, 0.0
        %v2396 = vadd.f32 %v2394, %v2395
        %v2397 = vsel %vm2216, %v2175, 0.0
        %v2398 = vadd.f32 %v2396, %v2397
        %v2399 = vsel %vm2216, %v2176, 0.0
        %v2400 = vadd.f32 %v2398, %v2399
        %v2401 = vsel %vm2216, %v2177, 0.0
        %v2402 = vadd.f32 %v2400, %v2401
        %v2403 = vsel %vm2216, %v2178, 0.0
        %v2404 = vadd.f32 %v2402, %v2403
        %v2405 = vsel %vm2216, %v2179, 0.0
        %v2406 = vadd.f32 %v2404, %v2405
        %v2407 = vsel %vm2216, %v2180, 0.0
        %v2408 = vadd.f32 %v2406, %v2407
        %v2409 = vsel %vm2216, %v2181, 0.0
        %v2410 = vadd.f32 %v2408, %v2409
        %v2411 = vsel %vm2216, %v2182, 0.0
        %v2412 = vadd.f32 %v2410, %v2411
        %v2413 = vsel %vm2216, %v2183, 0.0
        %v2414 = vadd.f32 %v2412, %v2413
        %v2415 = vsel %vm2216, %v2184, 0.0
        %v2416 = vadd.f32 %v2414, %v2415
        %v2417 = vsel %vm2216, %v2185, 0.0
        %v2418 = vadd.f32 %v2416, %v2417
        %v2419 = vsel %vm2216, %v2186, 0.0
        %v2420 = vadd.f32 %v2418, %v2419
        %v2421 = vsel %vm2216, %v2187, 0.0
        %v2422 = vadd.f32 %v2420, %v2421
        %v2423 = vsel %vm2216, %v2188, 0.0
        %v2424 = vadd.f32 %v2422, %v2423
        %v2425 = vsel %vm2216, %v2189, 0.0
        %v2426 = vadd.f32 %v2424, %v2425
        %v2427 = vsel %vm2216, %v2190, 0.0
        %v2428 = vadd.f32 %v2426, %v2427
        %v2429 = vsel %vm2216, %v2191, 0.0
        %v2430 = vadd.f32 %v2428, %v2429
        %v2431 = vsel %vm2216, %v2192, 0.0
        %v2432 = vadd.f32 %v2430, %v2431
        %v2433 = vsel %vm2216, %v2193, 0.0
        %v2434 = vadd.f32 %v2432, %v2433
        %v2435 = vsel %vm2216, %v2194, 0.0
        %v2436 = vadd.f32 %v2434, %v2435
        %v2437 = vsel %vm2216, %v2195, 0.0
        %v2438 = vadd.f32 %v2436, %v2437
        %v2439 = vsel %vm2216, %v2196, 0.0
        %v2440 = vadd.f32 %v2438, %v2439
        %v2441 = vsel %vm2216, %v2197, 0.0
        %v2442 = vadd.f32 %v2440, %v2441
        %v2443 = vsel %vm2216, %v2198, 0.0
        %v2444 = vadd.f32 %v2442, %v2443
        %v2445 = vsel %vm2216, %v2199, 0.0
        %v2446 = vadd.f32 %v2444, %v2445
        %v2447 = vsel %vm2216, %v2200, 0.0
        %v2448 = vadd.f32 %v2446, %v2447
        %v2449 = vsel %vm2216, %v2201, 0.0
        %v2450 = vadd.f32 %v2448, %v2449
        %v2451 = vsel %vm2216, %v2202, 0.0
        %v2452 = vadd.f32 %v2450, %v2451
        %v2453 = vsel %vm2216, %v2203, 0.0
        %v2454 = vadd.f32 %v2452, %v2453
        %v2455 = vsel %vm2216, %v2204, 0.0
        %v2456 = vadd.f32 %v2454, %v2455
        %v2457 = vsel %vm2216, %v2205, 0.0
        %v2458 = vadd.f32 %v2456, %v2457
        %v2459 = vsel %vm2216, %v2206, 0.0
        %v2460 = vadd.f32 %v2458, %v2459
        %v2461 = vsel %vm2216, %v2207, 0.0
        %v2462 = vadd.f32 %v2460, %v2461
        %v2463 = vsel %vm2216, %v2208, 0.0
        %v2464 = vadd.f32 %v2462, %v2463
        %v2465 = vsel %vm2216, %v2209, 0.0
        %v2466 = vadd.f32 %v2464, %v2465
        %v2467 = vsel %vm2216, %v2210, 0.0
        %v2468 = vadd.f32 %v2466, %v2467
        %v2469 = vsel %vm2216, %v2211, 0.0
        %v2470 = vadd.f32 %v2468, %v2469
        %v2471 = vsel %vm2216, %v2212, 0.0
        %v2472 = vadd.f32 %v2470, %v2471
        %v2473 = vsel %vm2216, %v2213, 0.0
        %v2474 = vadd.f32 %v2472, %v2473
        %v2475 = vsel %vm2216, %v2214, 0.0
        %v2476 = vadd.f32 %v2474, %v2475
        %v2477 = vrot.slane %v2476, 4
        %v2478 = vadd.f32 %v2476, %v2477
        %v2479 = vrot.slane %v2478, 2
        %v2480 = vadd.f32 %v2478, %v2479
        %v2481 = vrot.slane %v2480, 1
        %v2482 = vadd.f32 %v2480, %v2481
        %vm2485 = vcmask 1041409
        %v2486 = vsel %vm2485, %v2482, %v2349
        %v2488 = vadd.f32 %v2215, %v2486
        %vm2489 = vcmask 123904
        %2490 = vst.msk [vmem:[#allocation2] sm:$0x3] %vm2489, %v2488
        %p2491 = scmp.eq.s32.totalorder %s23, 1
        // Predicated region
        $region90: #{fwd.1} parent=80 // pred_check
          %p2492 = pneg %p2491
        $region91: #{fwd.1} parent=80 // pred_check_branch
          %2494 = sbr.rel (%p2492) target = $region93
        $region92: #{fwd.1} parent=80 // pred_region
          %v2495 = vld [vmem:[#allocation2] sm:$0x3]
          %v2496 = vmul.f32 %v2495, 0.0009765625
          %v2497 = vld [vmem:[%s3] sm:$0xff]
          %v2498 = vld [vmem:[%s3 + $0x8] sm:$0xff]
          %v2499 = vld [vmem:[%s4] sm:$0x1]
          %v2501 = vlaneseq
          %v2502 = vshrl.u32 %v2501, 7
          %v2503 = vsub.s32 0, %v2502
          %v2504 = vrot.slane %v2499, %v2503
          %v2507 = vsel %vm2216, %v2496, 0
          %2509 = vmatprep.subr.mxu0 0.0
          %2510 = vmatpush1.msra.mxu0 0.0
          %2511 = vmatprep.subr.mxu0 0.0
          %2512 = vmatpush1.msra.mxu0 0.0
          %2513 = vmatprep.subr.mxu0 0.0
          %2514 = vmatpush1.msra.mxu0 0.0
          %2515 = vmatprep.subr.mxu0 0.0
          %2516 = vmatpush1.msra.mxu0 0.0
          %2517 = vmatprep.subr.mxu0 0.0
          %2518 = vmatpush1.msra.mxu0 0.0
          %2519 = vmatprep.subr.mxu0 0.0
          %2520 = vmatpush1.msra.mxu0 0.0
          %2521 = vmatprep.subr.mxu0 0.0
          %2522 = vmatpush1.msra.mxu0 0.0
          %2523 = vmatprep.subr.mxu0 0.0
          %2524 = vmatpush1.msra.mxu0 0.0
          %2525 = vmatprep.subr.mxu0 0.0
          %2526 = vmatpush1.msra.mxu0 0.0
          %2527 = vmatprep.subr.mxu0 0.0
          %2528 = vmatpush1.msra.mxu0 0.0
          %2529 = vmatprep.subr.mxu0 0.0
          %2530 = vmatpush1.msra.mxu0 0.0
          %2531 = vmatprep.subr.mxu0 0.0
          %2532 = vmatpush1.msra.mxu0 0.0
          %2533 = vmatprep.subr.mxu0 0.0
          %2534 = vmatpush1.msra.mxu0 0.0
          %2535 = vmatprep.subr.mxu0 0.0
          %2536 = vmatpush1.msra.mxu0 0.0
          %2537 = vmatprep.subr.mxu0 0.0
          %2538 = vmatpush1.msra.mxu0 %v2498
          %2539 = vmatprep.subr.mxu0 0.0
          %2540 = vmatpush1.msra.mxu0 %v2497
          %2541 = vmatprep.subr.mxu0 0.0
          %2542 = vmatpush2.msra.mxu0 0.0
          %2543 = vmatprep.subr.mxu0 0.0
          %2544 = vmatpush2.msra.mxu0 0.0
          %2545 = vmatprep.subr.mxu0 0.0
          %2546 = vmatpush2.msra.mxu0 0.0
          %2547 = vmatprep.subr.mxu0 0.0
          %2548 = vmatpush2.msra.mxu0 0.0
          %2549 = vmatprep.subr.mxu0 0.0
          %2550 = vmatpush2.msra.mxu0 0.0
          %2551 = vmatprep.subr.mxu0 0.0
          %2552 = vmatpush2.msra.mxu0 0.0
          %2553 = vmatprep.subr.mxu0 0.0
          %2554 = vmatpush2.msra.mxu0 0.0
          %2555 = vmatprep.subr.mxu0 0.0
          %2556 = vmatpush2.msra.mxu0 0.0
          %2557 = vmatprep.subr.mxu0 0.0
          %2558 = vmatpush2.msra.mxu0 0.0
          %2559 = vmatprep.subr.mxu0 0.0
          %2560 = vmatpush2.msra.mxu0 0.0
          %2561 = vmatprep.subr.mxu0 0.0
          %2562 = vmatpush2.msra.mxu0 0.0
          %2563 = vmatprep.subr.mxu0 0.0
          %2564 = vmatpush2.msra.mxu0 0.0
          %2565 = vmatprep.subr.mxu0 0.0
          %2566 = vmatpush2.msra.mxu0 0.0
          %2567 = vmatprep.subr.mxu0 0.0
          %2568 = vmatpush2.msra.mxu0 0.0
          %2569 = vmatprep.subr.mxu0 0.0
          %2570 = vmatpush2.msra.mxu0 0.0
          %2571 = vmatprep.subr.mxu0 0.0
          %2572 = vmatpush2.msra.mxu0 0.0
          %2573 = vmatprep.mubr.f32.mxu0 0.0
          %2574 = vmatmul.mubr.f32.gmra.mxu0 %v2507
          %v2575 = vpop.f32.mrf.mxu0
          %v2576 = vadd.f32 %v2504, %v2575
          %v2577 = vpop.f32.mrf.mxu0
          %2578 = vdwg.mxu0
          %2579 = vst.msk [vmem:[#allocation6] sm:$0x3] %vm2489, %v2496
          %vm2580 = vcmask 74752
          %2581 = vst.msk [vmem:[#allocation4] sm:$0x3] %vm2580, %v2576
          %v2582 = vsel %vm2580, %v2576, -inf
          %2583 = vmax.xlane.f32.xlu0 %v2582
          %v2584 = vpop.xlane.xlu0 %2583
          %v2585 = vsub.f32 %v2576, %v2584
          %v2586 = vmul.f32 %v2585, 1.442695
          %v2587 = vpow.pop %v2586
          %v2588 = vsel %vm2580, %v2587, 0.0
          %2589 = vadd.xlane.f32.xlu0 %v2588
          %v2590 = vpop.xlane.xlu0 %2589
          %v2591 = vrcp.pop %v2590
          %v2592 = vmul.f32 %v2587, %v2591
          %v2593 = vlaneseq
          %v2594 = vand.u32 %v2593, 127
          %v2595 = vld [vmem:[%s5] sm:$0x3]
          %2596 = vset.pattern.permute.xlu0 0
          %2597 = vperm.xlu0 %2596, %v2595
          %v2598 = vpop.permute.xlu0 %2597
          %vm2599 = vcmp.eq.s32.totalorder %v2594, %v2598
          %v2600 = vsel %vm2599, 1, 0
          %v2601 = vcvt.s32.f32 %v2600
          %v2602 = vsub.f32 %v2592, %v2601
          %2603 = vxpose.xlu0.b32.start [1/16] %v2496, 128
          %2604 = vxpose.xlu0.b32.cont [2/16] 0.0, 128
          %2605 = vxpose.xlu0.b32.cont [3/16] 0.0, 128
          %2606 = vxpose.xlu0.b32.cont [4/16] 0.0, 128
          %2607 = vxpose.xlu0.b32.cont [5/16] 0.0, 128
          %2608 = vxpose.xlu0.b32.cont [6/16] 0.0, 128
          %2609 = vxpose.xlu0.b32.cont [7/16] 0.0, 128
          %2610 = vxpose.xlu0.b32.cont [8/16] 0.0, 128
          %2611 = vxpose.xlu0.b32.cont [9/16] 0.0, 128
          %2612 = vxpose.xlu0.b32.cont [10/16] 0.0, 128
          %2613 = vxpose.xlu0.b32.cont [11/16] 0.0, 128
          %2614 = vxpose.xlu0.b32.cont [12/16] 0.0, 128
          %2615 = vxpose.xlu0.b32.cont [13/16] 0.0, 128
          %2616 = vxpose.xlu0.b32.cont [14/16] 0.0, 128
          %2617 = vxpose.xlu0.b32.cont [15/16] 0.0, 128
          %2618 = vxpose.xlu0.b32.end [16/16] 0.0, 128
          %v2619 = vpop.trf.xlu0
          %v2620 = vpop.trf.xlu0
          %v2621 = vpop.trf.xlu0
          %v2622 = vpop.trf.xlu0
          %v2623 = vpop.trf.xlu0
          %v2624 = vpop.trf.xlu0
          %v2625 = vpop.trf.xlu0
          %v2626 = vpop.trf.xlu0
          %v2627 = vpop.trf.xlu0
          %v2628 = vpop.trf.xlu0
          %v2629 = vpop.trf.xlu0
          %v2630 = vpop.trf.xlu0
          %v2631 = vpop.trf.xlu0
          %v2632 = vpop.trf.xlu0
          %v2633 = vpop.trf.xlu0
          %v2634 = vpop.trf.xlu0
          %vm2635 = vcmask 15360
          %v2637 = vsel %vm2635, %v2619, 0
          %v2640 = vsel %vm2635, %v2620, 0
          %vm2642 = vcmask 1041408
          %v2643 = vsel %vm2642, %v2496, 0
          %2645 = vmatprep.subr.mxu0 0.0
          %2646 = vmatpush1.msra.mxu0 0.0
          %2647 = vmatprep.subr.mxu0 0.0
          %2648 = vmatpush1.msra.mxu0 0.0
          %2649 = vmatprep.subr.mxu0 0.0
          %2650 = vmatpush1.msra.mxu0 0.0
          %2651 = vmatprep.subr.mxu0 0.0
          %2652 = vmatpush1.msra.mxu0 0.0
          %2653 = vmatprep.subr.mxu0 0.0
          %2654 = vmatpush1.msra.mxu0 0.0
          %2655 = vmatprep.subr.mxu0 0.0
          %2656 = vmatpush1.msra.mxu0 0.0
          %2657 = vmatprep.subr.mxu0 0.0
          %2658 = vmatpush1.msra.mxu0 0.0
          %2659 = vmatprep.subr.mxu0 0.0
          %2660 = vmatpush1.msra.mxu0 0.0
          %2661 = vmatprep.subr.mxu0 0.0
          %2662 = vmatpush1.msra.mxu0 0.0
          %2663 = vmatprep.subr.mxu0 0.0
          %2664 = vmatpush1.msra.mxu0 0.0
          %2665 = vmatprep.subr.mxu0 0.0
          %2666 = vmatpush1.msra.mxu0 0.0
          %2667 = vmatprep.subr.mxu0 0.0
          %2668 = vmatpush1.msra.mxu0 0.0
          %2669 = vmatprep.subr.mxu0 0.0
          %2670 = vmatpush1.msra.mxu0 0.0
          %2671 = vmatprep.subr.mxu0 0.0
          %2672 = vmatpush1.msra.mxu0 0.0
          %2673 = vmatprep.subr.mxu0 0.0
          %2674 = vmatpush1.msra.mxu0 0.0
          %2675 = vmatprep.subr.mxu0 0.0
          %2676 = vmatpush1.msra.mxu0 %v2643
          %2677 = vmatprep.subr.mxu0 0.0
          %2678 = vmatpush2.msra.mxu0 0.0
          %2679 = vmatprep.subr.mxu0 0.0
          %2680 = vmatpush2.msra.mxu0 0.0
          %2681 = vmatprep.subr.mxu0 0.0
          %2682 = vmatpush2.msra.mxu0 0.0
          %2683 = vmatprep.subr.mxu0 0.0
          %2684 = vmatpush2.msra.mxu0 0.0
          %2685 = vmatprep.subr.mxu0 0.0
          %2686 = vmatpush2.msra.mxu0 0.0
          %2687 = vmatprep.subr.mxu0 0.0
          %2688 = vmatpush2.msra.mxu0 0.0
          %2689 = vmatprep.subr.mxu0 0.0
          %2690 = vmatpush2.msra.mxu0 0.0
          %2691 = vmatprep.subr.mxu0 0.0
          %2692 = vmatpush2.msra.mxu0 0.0
          %2693 = vmatprep.subr.mxu0 0.0
          %2694 = vmatpush2.msra.mxu0 0.0
          %2695 = vmatprep.subr.mxu0 0.0
          %2696 = vmatpush2.msra.mxu0 0.0
          %2697 = vmatprep.subr.mxu0 0.0
          %2698 = vmatpush2.msra.mxu0 0.0
          %2699 = vmatprep.subr.mxu0 0.0
          %2700 = vmatpush2.msra.mxu0 0.0
          %2701 = vmatprep.subr.mxu0 0.0
          %2702 = vmatpush2.msra.mxu0 0.0
          %2703 = vmatprep.subr.mxu0 0.0
          %2704 = vmatpush2.msra.mxu0 0.0
          %2705 = vmatprep.subr.mxu0 0.0
          %2706 = vmatpush2.msra.mxu0 0.0
          %2707 = vmatprep.subr.mxu0 0.0
          %2708 = vmatpush2.msra.mxu0 0.0
          %2709 = vmatprep.mubr.f32.mxu0 0.0
          %2710 = vmatmul.mubr.f32.gmra.mxu0 %v2637
          %v2711 = vpop.f32.mrf.mxu0
          %v2712 = vadd.f32 0.0, %v2711
          %v2713 = vpop.f32.mrf.mxu0
          %2714 = vmatprep.mubr.f32.mxu0 0.0
          %2715 = vmatmul.mubr.f32.gmra.mxu0 %v2640
          %v2716 = vpop.f32.mrf.mxu0
          %v2717 = vadd.f32 0.0, %v2716
          %v2718 = vpop.f32.mrf.mxu0
          %2719 = vdwg.mxu0
          %v2720 = vmul.f32 %v2712, 0.5
          %v2721 = vmul.f32 %v2717, 0.5
          %2722 = vst.msk [vmem:[%s8] sm:$0xff] %vm2216, %v2720
          %2723 = vst.msk [vmem:[%s8 + $0x8] sm:$0xff] %vm2216, %v2721
          %2724 = vxpose.xlu0.b32.start [1/16] %v2602, 128
          %2725 = vxpose.xlu0.b32.cont [2/16] 0.0, 128
          %2726 = vxpose.xlu0.b32.cont [3/16] 0.0, 128
          %2727 = vxpose.xlu0.b32.cont [4/16] 0.0, 128
          %2728 = vxpose.xlu0.b32.cont [5/16] 0.0, 128
          %2729 = vxpose.xlu0.b32.cont [6/16] 0.0, 128
          %2730 = vxpose.xlu0.b32.cont [7/16] 0.0, 128
          %2731 = vxpose.xlu0.b32.cont [8/16] 0.0, 128
          %2732 = vxpose.xlu0.b32.cont [9/16] 0.0, 128
          %2733 = vxpose.xlu0.b32.cont [10/16] 0.0, 128
          %2734 = vxpose.xlu0.b32.cont [11/16] 0.0, 128
          %2735 = vxpose.xlu0.b32.cont [12/16] 0.0, 128
          %2736 = vxpose.xlu0.b32.cont [13/16] 0.0, 128
          %2737 = vxpose.xlu0.b32.cont [14/16] 0.0, 128
          %2738 = vxpose.xlu0.b32.cont [15/16] 0.0, 128
          %2739 = vxpose.xlu0.b32.end [16/16] 0.0, 128
          %v2740 = vpop.trf.xlu0
          %v2741 = vpop.trf.xlu0
          %v2742 = vpop.trf.xlu0
          %v2743 = vpop.trf.xlu0
          %v2744 = vpop.trf.xlu0
          %v2745 = vpop.trf.xlu0
          %v2746 = vpop.trf.xlu0
          %v2747 = vpop.trf.xlu0
          %v2748 = vpop.trf.xlu0
          %v2749 = vpop.trf.xlu0
          %v2750 = vpop.trf.xlu0
          %v2751 = vpop.trf.xlu0
          %v2752 = vpop.trf.xlu0
          %v2753 = vpop.trf.xlu0
          %v2754 = vpop.trf.xlu0
          %v2755 = vpop.trf.xlu0
          %v2757 = vsel %vm2635, %v2740, 0
          %v2760 = vsel %vm2635, %v2741, 0
          %v2763 = vsel %vm2642, %v2602, 0
          %2765 = vmatprep.subr.mxu0 0.0
          %2766 = vmatpush1.msra.mxu0 0.0
          %2767 = vmatprep.subr.mxu0 0.0
          %2768 = vmatpush1.msra.mxu0 0.0
          %2769 = vmatprep.subr.mxu0 0.0
          %2770 = vmatpush1.msra.mxu0 0.0
          %2771 = vmatprep.subr.mxu0 0.0
          %2772 = vmatpush1.msra.mxu0 0.0
          %2773 = vmatprep.subr.mxu0 0.0
          %2774 = vmatpush1.msra.mxu0 0.0
          %2775 = vmatprep.subr.mxu0 0.0
          %2776 = vmatpush1.msra.mxu0 0.0
          %2777 = vmatprep.subr.mxu0 0.0
          %2778 = vmatpush1.msra.mxu0 0.0
          %2779 = vmatprep.subr.mxu0 0.0
          %2780 = vmatpush1.msra.mxu0 0.0
          %2781 = vmatprep.subr.mxu0 0.0
          %2782 = vmatpush1.msra.mxu0 0.0
          %2783 = vmatprep.subr.mxu0 0.0
          %2784 = vmatpush1.msra.mxu0 0.0
          %2785 = vmatprep.subr.mxu0 0.0
          %2786 = vmatpush1.msra.mxu0 0.0
          %2787 = vmatprep.subr.mxu0 0.0
          %2788 = vmatpush1.msra.mxu0 0.0
          %2789 = vmatprep.subr.mxu0 0.0
          %2790 = vmatpush1.msra.mxu0 0.0
          %2791 = vmatprep.subr.mxu0 0.0
          %2792 = vmatpush1.msra.mxu0 0.0
          %2793 = vmatprep.subr.mxu0 0.0
          %2794 = vmatpush1.msra.mxu0 0.0
          %2795 = vmatprep.subr.mxu0 0.0
          %2796 = vmatpush1.msra.mxu0 %v2763
          %2797 = vmatprep.subr.mxu0 0.0
          %2798 = vmatpush2.msra.mxu0 0.0
          %2799 = vmatprep.subr.mxu0 0.0
          %2800 = vmatpush2.msra.mxu0 0.0
          %2801 = vmatprep.subr.mxu0 0.0
          %2802 = vmatpush2.msra.mxu0 0.0
          %2803 = vmatprep.subr.mxu0 0.0
          %2804 = vmatpush2.msra.mxu0 0.0
          %2805 = vmatprep.subr.mxu0 0.0
          %2806 = vmatpush2.msra.mxu0 0.0
          %2807 = vmatprep.subr.mxu0 0.0
          %2808 = vmatpush2.msra.mxu0 0.0
          %2809 = vmatprep.subr.mxu0 0.0
          %2810 = vmatpush2.msra.mxu0 0.0
          %2811 = vmatprep.subr.mxu0 0.0
          %2812 = vmatpush2.msra.mxu0 0.0
          %2813 = vmatprep.subr.mxu0 0.0
          %2814 = vmatpush2.msra.mxu0 0.0
          %2815 = vmatprep.subr.mxu0 0.0
          %2816 = vmatpush2.msra.mxu0 0.0
          %2817 = vmatprep.subr.mxu0 0.0
          %2818 = vmatpush2.msra.mxu0 0.0
          %2819 = vmatprep.subr.mxu0 0.0
          %2820 = vmatpush2.msra.mxu0 0.0
          %2821 = vmatprep.subr.mxu0 0.0
          %2822 = vmatpush2.msra.mxu0 0.0
          %2823 = vmatprep.subr.mxu0 0.0
          %2824 = vmatpush2.msra.mxu0 0.0
          %2825 = vmatprep.subr.mxu0 0.0
          %2826 = vmatpush2.msra.mxu0 0.0
          %2827 = vmatprep.subr.mxu0 0.0
          %2828 = vmatpush2.msra.mxu0 0.0
          %2829 = vmatprep.mubr.f32.mxu0 0.0
          %2830 = vmatmul.mubr.f32.gmra.mxu0 %v2757
          %v2831 = vpop.f32.mrf.mxu0
          %v2832 = vadd.f32 0.0, %v2831
          %v2833 = vpop.f32.mrf.mxu0
          %2834 = vmatprep.mubr.f32.mxu0 0.0
          %2835 = vmatmul.mubr.f32.gmra.mxu0 %v2760
          %v2836 = vpop.f32.mrf.mxu0
          %v2837 = vadd.f32 0.0, %v2836
          %v2838 = vpop.f32.mrf.mxu0
          %2839 = vdwg.mxu0
          %v2840 = vmul.f32 %v2832, 0.5
          %v2841 = vmul.f32 %v2837, 0.5
          %vm2842 = vcmask 80896
          %2843 = vst.msk [vmem:[%s9] sm:$0xff] %vm2842, %v2840
          %2844 = vst.msk [vmem:[%s9 + $0x8] sm:$0x3] %vm2580, %v2841
        $region93: #{fwd.1} parent=80 // pred_fallthru
          _
        // Predicated region
        $region94: #{fwd.1} parent=80 // pred_check
          %p2845 = pneg %p167
        $region95: #{fwd.1} parent=80 // pred_check_branch
          %2847 = sbr.rel (%p2845) target = $region97
        $region96: #{fwd.1} parent=80 // pred_region
          %s2849 = ssub.s32 32, 32
          %2850 = vsyncadd [#allocation5], %s2849
          %s2852 = sshll.u32 [#allocation4], 4
          %s2853 = int_to_ptr.vmem [resolvable:$true] %s2852
          %2855 = dma.vmem_to_hbm [thread:$0]  %s2853, 32, %s6, [#allocation5]
        $region97: #{fwd.1} parent=80 // pred_fallthru
          _
        // Predicated region
        $region98: #{fwd.1} parent=80 // pred_check
          %p2856 = pneg %p188
        $region99: #{fwd.1} parent=80 // pred_check_branch
          %2858 = sbr.rel (%p2856) target = $region101
        $region100: #{fwd.1} parent=80 // pred_region
          %s2860 = ssub.s32 32, 32
          %2861 = vsyncadd [#allocation7], %s2860
          %s2863 = sshll.u32 [#allocation6], 4
          %s2864 = int_to_ptr.vmem [resolvable:$true] %s2863
          %2866 = dma.vmem_to_hbm [thread:$0]  %s2864, 32, %s7, [#allocation7]
        $region101: #{fwd.1} parent=80 // pred_fallthru
          _
        // Predicated region
        $region102: #{fwd.1} parent=80 // pred_check
          %p2867 = pneg %p209
        $region103: #{fwd.1} parent=80 // pred_check_branch
          %2869 = sbr.rel (%p2867) target = $region105
        $region104: #{fwd.1} parent=80 // pred_region
          _
        $region105: #{fwd.1} parent=80 // pred_fallthru
          _
        // Predicated region
        $region106: #{fwd.1} parent=80 // pred_check
          %p2870 = pneg %p230
        $region107: #{fwd.1} parent=80 // pred_check_branch
          %2872 = sbr.rel (%p2870) target = $region109
        $region108: #{fwd.1} parent=80 // pred_region
          _
        $region109: #{fwd.1} parent=80 // pred_fallthru
          _
        // Predicated region
        $region110: #{fwd.1} parent=80 // pred_check
          %p2873 = pneg %p167
        $region111: #{fwd.1} parent=80 // pred_check_branch
          %2875 = sbr.rel (%p2873) target = $region113
        $region112: #{fwd.1} parent=80 // pred_region
          %2876 = dma.done [#allocation5], 32
        $region113: #{fwd.1} parent=80 // pred_fallthru
          _
        // Predicated region
        $region114: #{fwd.1} parent=80 // pred_check
          %p2877 = pneg %p188
        $region115: #{fwd.1} parent=80 // pred_check_branch
          %2879 = sbr.rel (%p2877) target = $region117
        $region116: #{fwd.1} parent=80 // pred_region
          %2880 = dma.done [#allocation7], 32
        $region117: #{fwd.1} parent=80 // pred_fallthru
          _
        // Predicated region
        $region118: #{fwd.1} parent=80 // pred_check
          %p2881 = pneg %p209
        $region119: #{fwd.1} parent=80 // pred_check_branch
          %2883 = sbr.rel (%p2881) target = $region121
        $region120: #{fwd.1} parent=80 // pred_region
          _
        $region121: #{fwd.1} parent=80 // pred_fallthru
          _
        // Predicated region
        $region122: #{fwd.1} parent=80 // pred_check
          %p2884 = pneg %p230
        $region123: #{fwd.1} parent=80 // pred_check_branch
          %2886 = sbr.rel (%p2884) target = $region125
        $region124: #{fwd.1} parent=80 // pred_region
          _
        $region125: #{fwd.1} parent=80 // pred_fallthru
          _
      $region81: #{fwd.1} parent=5 // pred_fallthru
        _
      %p2887 = scmp.le.s32.totalorder 2, %s18
      // Predicated region
      $region126: #{fwd.1} parent=5 // pred_check
        %p2888 = pneg %p2887
      $region127: #{fwd.1} parent=5 // pred_check_branch
        %2890 = sbr.rel (%p2888) target = $region129
      $region128: #{fwd.1} parent=5 // pred_region
        %s2891 = ssub.s32 %s18, 2
      $region129: #{fwd.1} parent=5 // pred_fallthru
        _
    $region6: #{fwd.1} parent=1 // loop_footer
      %s22 = sadd.s32 1, %s18
    $region7: #{fwd.1} parent=1 // loop_footer_branch
      %17 = sbr.rel target = $region3
    $region8: #{fwd.1} parent=1 // loop_exit
      _
    %2892 = vsyncpa [#allocation5], 1
    %s2893 = scalar_lea.sflag [#allocation5], 1
    %2894 = vsyncpa %s2893, 1
    %2895 = vsyncpa [#allocation7], 1

</llo_original>
